<compile_context>
chip_gen: v7x
topology: tpu7x:2x2x1
jax: 0.10.0
libtpu: 0.0.40
codegen_flags: <defaults>
</compile_context>

<pallas_src>
import numpy as np
import jax
import jax.numpy as jnp
from jax import lax
from jax.experimental import pallas as pl
from jax.experimental.pallas import tpu as pltpu

# ---- static network geometry (compile-time Python constants) --------------
IN_C, IN_H, IN_W = 4, 16, 16          # NCHW observation: (B, 4, 16, 16)
K1, S1, C1 = 4, 2, 16                 # conv1: 4x4 stride 2,  4 -> 16
K2, S2, C2 = 3, 2, 64                 # conv2: 3x3 stride 2, 16 -> 64
K3, S3, C3 = 3, 1, 256                # conv3: 3x3 stride 1, 64 -> 256 (1x1 out)
OH1 = (IN_H - K1) // S1 + 1           # 7
OH2 = (OH1 - K2) // S2 + 1            # 3
H_LOGICAL = 100                       # hidden width of v / fc heads
H_PAD = 128                           # lane-dense padded width
OUT_LANES = 128                       # fused head output lanes: [v | alpha(3) | beta(3) | pad]


def _pick_tile(B):
    """Batch tile: full array for tiny B, else a multiple of 8 giving >=2 grid
    steps (v7x has 2 TensorCores) and capped at 512 rows for VMEM headroom."""
    if B <= 8:
        return B
    half = -(-B // 2)
    tb = ((half + 7) // 8) * 8
    return min(tb, 512)


# ---------------------------------------------------------------------------
# The single fused kernel: conv1 + conv2 + conv3 + v + fc + alpha/beta heads
# ---------------------------------------------------------------------------
def _net_kernel(x_ref, w1_ref, b1_ref, w2_ref, b2_ref, w3_ref, b3_ref,
                wvfc_ref, bvfc_ref, whead_ref, bhead_ref, out_ref):
    f32 = jnp.float32
    bf16 = jnp.bfloat16

    # Input rows: x_ref is (IN_H, tb, IN_W*IN_C) bf16; x_ref[r] -> (tb, 64).
    rows = [x_ref[r] for r in range(IN_H)]

    # conv1 (4x4, stride 2): 7 output rows, each a (tb, OH1*C1=112) lane slab
    # laid out as (w_out, cout).  w1_ref[ki] is the row-packed (64, 112) slab.
    r1 = []
    for i1 in range(OH1):
        acc = None
        for ki in range(K1):
            d = jnp.dot(rows[S1 * i1 + ki], w1_ref[ki], preferred_element_type=f32)
            acc = d if acc is None else acc + d
        r1.append(jnp.maximum(acc + b1_ref[...], 0.0).astype(bf16))

    # conv2 (3x3, stride 2): 3 output rows, each (tb, OH2*C2=192) = (w_out, cout).
    r2 = []
    for i2 in range(OH2):
        acc = None
        for ki in range(K2):
            d = jnp.dot(r1[S2 * i2 + ki], w2_ref[ki], preferred_element_type=f32)
            acc = d if acc is None else acc + d
        r2.append(jnp.maximum(acc + b2_ref[...], 0.0).astype(bf16))

    # conv3 (3x3, stride 1 -> 1x1 output) == the 256-wide feature vector.
    acc = None
    for ki in range(K3):
        d = jnp.dot(r2[ki], w3_ref[ki], preferred_element_type=f32)
        acc = d if acc is None else acc + d
    feat = jnp.maximum(acc + b3_ref[...], 0.0).astype(bf16)          # (tb, 256)

    # v-hidden and fc merged into one 256-wide matmul:
    #   lanes [0:100]   = relu(feat @ v1_w + v1_b)   (v branch hidden)
    #   lanes [128:228] = relu(feat @ fc_w + fc_b)   (actor branch "s")
    h = jnp.dot(feat, wvfc_ref[...], preferred_element_type=f32) + bvfc_ref[...]
    h = jnp.maximum(h, 0.0).astype(bf16)                             # (tb, 256)

    # v2 + alpha_head + beta_head merged into one block-structured matmul:
    #   lane 0 = v, lanes 1:4 = alpha pre-act, lanes 4:7 = beta pre-act, rest pad.
    out = jnp.dot(h, whead_ref[...], preferred_element_type=f32) + bhead_ref[...]
    lane = lax.broadcasted_iota(jnp.int32, out.shape, 1)
    sp = jnp.maximum(out, 0.0) + jnp.log(1.0 + jnp.exp(-jnp.abs(out))) + 1.0
    out_ref[...] = jnp.where((lane >= 1) & (lane < 7), sp, out).astype(out_ref.dtype)


def net_forward(params, state):
    """state: (B, C, H, W) NCHW (PyTorch convention) -> ((alpha, beta), v)."""
    B, C, H, W = state.shape
    # Kernel is specialized to the reconstructed CarRacing-style geometry.
    assert (C, H, W) == (IN_C, IN_H, IN_W)
    # One transpose + reshape + bf16 cast: (B,C,H,W) -> (H, B, W*C) row slabs,
    # so the kernel reads whole (tb, W*C) input rows with plain static loads.
    x = jnp.transpose(state, (2, 0, 3, 1)).reshape(H, B, W * C).astype(jnp.bfloat16)

    tb = _pick_tile(B)
    nb = -(-B // tb)
    p = params

    def full2(a):
        return pl.BlockSpec(a.shape, lambda i: (0, 0))

    def full3(a):
        return pl.BlockSpec(a.shape, lambda i: (0, 0, 0))

    out = pl.pallas_call(
        _net_kernel,
        out_shape=jax.ShapeDtypeStruct((B, OUT_LANES), jnp.float32),
        grid=(nb,),
        in_specs=[
            pl.BlockSpec((H, tb, W * C), lambda i: (0, i, 0)),
            full3(p["w1"]), full2(p["b1"]),
            full3(p["w2"]), full2(p["b2"]),
            full3(p["w3"]), full2(p["b3"]),
            full2(p["wvfc"]), full2(p["bvfc"]),
            full2(p["whead"]), full2(p["bhead"]),
        ],
        out_specs=pl.BlockSpec((tb, OUT_LANES), lambda i: (i, 0)),
        compiler_params=pltpu.CompilerParams(dimension_semantics=("parallel",)),
    )(x, p["w1"], p["b1"], p["w2"], p["b2"], p["w3"], p["b3"],
      p["wvfc"], p["bvfc"], p["whead"], p["bhead"])

    v = out[:, 0:1]
    alpha = out[:, 1:4]
    beta = out[:, 4:7]
    return (alpha, beta), v


# ---------------------------------------------------------------------------
# Deterministic synthetic parameters (not a checkpoint load)
# ---------------------------------------------------------------------------
def _uniform(key, shape, bound):
    return jax.random.uniform(key, shape, jnp.float32, -bound, bound)


def init_params(key, in_channels=IN_C):
    # TODO(synk): cnn_base / v / fc / alpha_head / beta_head are not defined in
    # the given __init__ (it only builds an unused `simplenet`); they are
    # reconstructed here (3-conv base -> 256 feat, v:256->100->1, fc:256->100,
    # alpha/beta heads:100->3) so that forward() is realizable.
    conv_defs = [(in_channels, C1, K1), (C1, C2, K2), (C2, C3, K3)]   # (cin, cout, k)
    gain = 2.0 ** 0.5                                        # calculate_gain('relu')
    p = {"conv": []}
    for cin, cout, k in conv_defs:
        key, kw_ = jax.random.split(key)
        fan_in, fan_out = cin * k * k, cout * k * k
        limit = gain * (6.0 / (fan_in + fan_out)) ** 0.5     # xavier_uniform_
        w = _uniform(kw_, (k, k, cin, cout), limit)          # HWIO layout
        b = jnp.full((cout,), 0.1, jnp.float32)              # constant_(bias, 0.1)
        p["conv"].append((w, b))

    def linear(key, fan_in, fan_out):
        k1, k2 = jax.random.split(key)
        bound = 1.0 / (fan_in ** 0.5)                        # torch Linear default init
        return (_uniform(k1, (fan_in, fan_out), bound),
                _uniform(k2, (fan_out,), bound))

    key, k1, k2, k3, k4, k5 = jax.random.split(key, 6)
    p["v1_w"], p["v1_b"] = linear(k1, C3, H_LOGICAL)
    p["v2_w"], p["v2_b"] = linear(k2, H_LOGICAL, 1)
    p["fc_w"], p["fc_b"] = linear(k3, C3, H_LOGICAL)
    p["alpha_w"], p["alpha_b"] = linear(k4, H_LOGICAL, 3)
    p["beta_w"], p["beta_b"] = linear(k5, H_LOGICAL, 3)
    return p


def prepare_params(p):
    """Host-side (once, outside jit) packing of the logical weights into the
    fused kernel's layout:
      * conv weights are scattered into per-kernel-row banded slabs so that a
        whole conv output ROW is one dense dot (no in-kernel im2col/concat):
          w1b[ki][(s1*j+kj)*C0 + c, j*C1 + cout] = w1[ki, kj, c, cout]
      * conv biases are tiled across the row's output positions
      * v1 & fc are concatenated into one (256,256) slab; v2 & alpha/beta into
        one block-structured (256,128) slab
      * all matmul weights cast to bf16, biases kept f32."""
    def np32(a):
        return np.asarray(a, np.float32)

    w1, b1 = np32(p["conv"][0][0]), np32(p["conv"][0][1])    # (4,4,4,16), (16,)
    w2, b2 = np32(p["conv"][1][0]), np32(p["conv"][1][1])    # (3,3,16,64), (64,)
    w3, b3 = np32(p["conv"][2][0]), np32(p["conv"][2][1])    # (3,3,64,256), (256,)

    # conv1: input row lanes are (w, c_in) -> output row lanes are (w_out, c1)
    w1b = np.zeros((K1, IN_W * IN_C, OH1 * C1), np.float32)
    for ki in range(K1):
        for j in range(OH1):
            for kj in range(K1):
                r0 = (S1 * j + kj) * IN_C
                w1b[ki, r0:r0 + IN_C, j * C1:(j + 1) * C1] = w1[ki, kj]
    b1t = np.tile(b1, OH1)[None, :]                          # (1, 112)

    # conv2: input lanes (w_out1, c1) -> output lanes (w_out2, c2)
    w2b = np.zeros((K2, OH1 * C1, OH2 * C2), np.float32)
    for ki in range(K2):
        for j in range(OH2):
            for kj in range(K2):
                r0 = (S2 * j + kj) * C1
                w2b[ki, r0:r0 + C1, j * C2:(j + 1) * C2] = w2[ki, kj]
    b2t = np.tile(b2, OH2)[None, :]                          # (1, 192)

    # conv3: its 3x3 receptive field IS the whole conv2 output -> dense reshape
    w3b = w3.reshape(K3, OH2 * C2, C3)                       # (3, 192, 256)
    b3t = b3[None, :]                                        # (1, 256)

    v1_w, v1_b = np32(p["v1_w"]), np32(p["v1_b"])
    v2_w, v2_b = np32(p["v2_w"]), np32(p["v2_b"])
    fc_w, fc_b = np32(p["fc_w"]), np32(p["fc_b"])
    a_w, a_b = np32(p["alpha_w"]), np32(p["alpha_b"])
    bt_w, bt_b = np32(p["beta_w"]), np32(p["beta_b"])

    # merged v-hidden | fc matmul: (256, 256)
    wvfc = np.zeros((C3, 2 * H_PAD), np.float32)
    wvfc[:, :H_LOGICAL] = v1_w
    wvfc[:, H_PAD:H_PAD + H_LOGICAL] = fc_w
    bvfc = np.zeros((1, 2 * H_PAD), np.float32)
    bvfc[0, :H_LOGICAL] = v1_b
    bvfc[0, H_PAD:H_PAD + H_LOGICAL] = fc_b

    # merged v2 | alpha_head | beta_head matmul: (256, 128)
    whead = np.zeros((2 * H_PAD, OUT_LANES), np.float32)
    whead[:H_LOGICAL, 0] = v2_w[:, 0]
    whead[H_PAD:H_PAD + H_LOGICAL, 1:4] = a_w
    whead[H_PAD:H_PAD + H_LOGICAL, 4:7] = bt_w
    bhead = np.zeros((1, OUT_LANES), np.float32)
    bhead[0, 0] = v2_b[0]
    bhead[0, 1:4] = a_b
    bhead[0, 4:7] = bt_b

    bf = jnp.bfloat16
    return {
        "w1": jnp.asarray(w1b, bf), "b1": jnp.asarray(b1t),
        "w2": jnp.asarray(w2b, bf), "b2": jnp.asarray(b2t),
        "w3": jnp.asarray(w3b, bf), "b3": jnp.asarray(b3t),
        "wvfc": jnp.asarray(wvfc, bf), "bvfc": jnp.asarray(bvfc),
        "whead": jnp.asarray(whead, bf), "bhead": jnp.asarray(bhead),
    }


# ---------------------------------------------------------------------------
# Pure-JAX reference (correctness check only)
# ---------------------------------------------------------------------------
def net_forward_ref(p, state):
    hi = lax.Precision.HIGHEST
    x = jnp.transpose(state, (0, 2, 3, 1))
    for (w, b), s in zip(p["conv"], (S1, S2, S3)):
        x = lax.conv_general_dilated(x, w, (s, s), "VALID",
                                     dimension_numbers=("NHWC", "HWIO", "NHWC"),
                                     precision=hi)
        x = jax.nn.relu(x + b)
    feat = x.reshape(-1, C3)
    vh = jax.nn.relu(jnp.dot(feat, p["v1_w"], precision=hi) + p["v1_b"])
    v = jnp.dot(vh, p["v2_w"], precision=hi) + p["v2_b"]
    s_ = jax.nn.relu(jnp.dot(feat, p["fc_w"], precision=hi) + p["fc_b"])
    alpha = jax.nn.softplus(jnp.dot(s_, p["alpha_w"], precision=hi) + p["alpha_b"]) + 1.0
    beta = jax.nn.softplus(jnp.dot(s_, p["beta_w"], precision=hi) + p["beta_b"]) + 1.0
    return (alpha, beta), v


if __name__ == "__main__":
    key = jax.random.PRNGKey(0)
    k_params, k_input = jax.random.split(key)

    B = 2
    state = jax.random.normal(k_input, (B, IN_C, IN_H, IN_W), jnp.float32)
    logical = init_params(k_params, in_channels=IN_C)
    params = prepare_params(logical)

    fwd = jax.jit(net_forward)
    (alpha, beta), v = fwd(params, state)
    jax.block_until_ready((alpha, beta, v))

    (alpha_r, beta_r), v_r = net_forward_ref(logical, state)
    assert alpha.shape == (B, 3) and beta.shape == (B, 3) and v.shape == (B, 1)
    # tolerance covers 6 stacked bf16 MXU matmuls vs the f32 HIGHEST reference
    assert jnp.allclose(alpha, alpha_r, atol=2e-2, rtol=2e-2), float(jnp.max(jnp.abs(alpha - alpha_r)))
    assert jnp.allclose(beta, beta_r, atol=2e-2, rtol=2e-2), float(jnp.max(jnp.abs(beta - beta_r)))
    assert jnp.allclose(v, v_r, atol=2e-2, rtol=2e-2), float(jnp.max(jnp.abs(v - v_r)))
    assert bool(jnp.all(alpha >= 1.0)) and bool(jnp.all(beta >= 1.0))

    print("KERNEL_OK")
</pallas_src>

<mosaic_0001>
module attributes {stable_mosaic.version = 11 : i64} {
  func.func @_net_kernel(%arg0: i32, %arg1: memref<16x2x64xbf16, #tpu.memory_space<vmem>>, %arg2: memref<4x64x112xbf16, #tpu.memory_space<vmem>>, %arg3: memref<1x112xf32, #tpu.memory_space<vmem>>, %arg4: memref<3x112x192xbf16, #tpu.memory_space<vmem>>, %arg5: memref<1x192xf32, #tpu.memory_space<vmem>>, %arg6: memref<3x192x256xbf16, #tpu.memory_space<vmem>>, %arg7: memref<1x256xf32, #tpu.memory_space<vmem>>, %arg8: memref<256x256xbf16, #tpu.memory_space<vmem>>, %arg9: memref<1x256xf32, #tpu.memory_space<vmem>>, %arg10: memref<256x128xbf16, #tpu.memory_space<vmem>>, %arg11: memref<1x128xf32, #tpu.memory_space<vmem>>, %arg12: memref<2x128xf32, #tpu.memory_space<vmem>>) attributes {dimension_semantics = [#tpu.dimension_semantics<parallel>], iteration_bounds = array<i64: 1>, scalar_prefetch = 0 : i64, scratch_operands = 0 : i64, tpu.core_type = #tpu.core_type<tc>, window_params = [{transform_indices = @transform_0, window_bounds = array<i64: 16, 2, 64>}, {pipeline_mode = #tpu.pipeline_mode<synchronous>, transform_indices = @transform_1, window_bounds = array<i64: 4, 64, 112>}, {pipeline_mode = #tpu.pipeline_mode<synchronous>, transform_indices = @transform_2, window_bounds = array<i64: 1, 112>}, {pipeline_mode = #tpu.pipeline_mode<synchronous>, transform_indices = @transform_3, window_bounds = array<i64: 3, 112, 192>}, {pipeline_mode = #tpu.pipeline_mode<synchronous>, transform_indices = @transform_4, window_bounds = array<i64: 1, 192>}, {pipeline_mode = #tpu.pipeline_mode<synchronous>, transform_indices = @transform_5, window_bounds = array<i64: 3, 192, 256>}, {pipeline_mode = #tpu.pipeline_mode<synchronous>, transform_indices = @transform_6, window_bounds = array<i64: 1, 256>}, {pipeline_mode = #tpu.pipeline_mode<synchronous>, transform_indices = @transform_7, window_bounds = array<i64: 256, 256>}, {pipeline_mode = #tpu.pipeline_mode<synchronous>, transform_indices = @transform_8, window_bounds = array<i64: 1, 256>}, {pipeline_mode = #tpu.pipeline_mode<synchronous>, transform_indices = @transform_9, window_bounds = array<i64: 256, 128>}, {pipeline_mode = #tpu.pipeline_mode<synchronous>, transform_indices = @transform_10, window_bounds = array<i64: 1, 128>}, {transform_indices = @transform_11, window_bounds = array<i64: 2, 128>}]} {
    %c0 = arith.constant 0 : index
    %c0_0 = arith.constant 0 : index
    %c0_1 = arith.constant 0 : index
    %0 = vector.load %arg1[%c0, %c0_0, %c0_1] : memref<16x2x64xbf16, #tpu.memory_space<vmem>>, vector<1x2x64xbf16>
    %1 = vector.shape_cast %0 : vector<1x2x64xbf16> to vector<2x64xbf16>
    %c1 = arith.constant 1 : index
    %c0_2 = arith.constant 0 : index
    %c0_3 = arith.constant 0 : index
    %2 = vector.load %arg1[%c1, %c0_2, %c0_3] : memref<16x2x64xbf16, #tpu.memory_space<vmem>>, vector<1x2x64xbf16>
    %3 = vector.shape_cast %2 : vector<1x2x64xbf16> to vector<2x64xbf16>
    %c2 = arith.constant 2 : index
    %c0_4 = arith.constant 0 : index
    %c0_5 = arith.constant 0 : index
    %4 = vector.load %arg1[%c2, %c0_4, %c0_5] : memref<16x2x64xbf16, #tpu.memory_space<vmem>>, vector<1x2x64xbf16>
    %5 = vector.shape_cast %4 : vector<1x2x64xbf16> to vector<2x64xbf16>
    %c3 = arith.constant 3 : index
    %c0_6 = arith.constant 0 : index
    %c0_7 = arith.constant 0 : index
    %6 = vector.load %arg1[%c3, %c0_6, %c0_7] : memref<16x2x64xbf16, #tpu.memory_space<vmem>>, vector<1x2x64xbf16>
    %7 = vector.shape_cast %6 : vector<1x2x64xbf16> to vector<2x64xbf16>
    %c4 = arith.constant 4 : index
    %c0_8 = arith.constant 0 : index
    %c0_9 = arith.constant 0 : index
    %8 = vector.load %arg1[%c4, %c0_8, %c0_9] : memref<16x2x64xbf16, #tpu.memory_space<vmem>>, vector<1x2x64xbf16>
    %9 = vector.shape_cast %8 : vector<1x2x64xbf16> to vector<2x64xbf16>
    %c5 = arith.constant 5 : index
    %c0_10 = arith.constant 0 : index
    %c0_11 = arith.constant 0 : index
    %10 = vector.load %arg1[%c5, %c0_10, %c0_11] : memref<16x2x64xbf16, #tpu.memory_space<vmem>>, vector<1x2x64xbf16>
    %11 = vector.shape_cast %10 : vector<1x2x64xbf16> to vector<2x64xbf16>
    %c6 = arith.constant 6 : index
    %c0_12 = arith.constant 0 : index
    %c0_13 = arith.constant 0 : index
    %12 = vector.load %arg1[%c6, %c0_12, %c0_13] : memref<16x2x64xbf16, #tpu.memory_space<vmem>>, vector<1x2x64xbf16>
    %13 = vector.shape_cast %12 : vector<1x2x64xbf16> to vector<2x64xbf16>
    %c7 = arith.constant 7 : index
    %c0_14 = arith.constant 0 : index
    %c0_15 = arith.constant 0 : index
    %14 = vector.load %arg1[%c7, %c0_14, %c0_15] : memref<16x2x64xbf16, #tpu.memory_space<vmem>>, vector<1x2x64xbf16>
    %15 = vector.shape_cast %14 : vector<1x2x64xbf16> to vector<2x64xbf16>
    %c8 = arith.constant 8 : index
    %c0_16 = arith.constant 0 : index
    %c0_17 = arith.constant 0 : index
    %16 = vector.load %arg1[%c8, %c0_16, %c0_17] : memref<16x2x64xbf16, #tpu.memory_space<vmem>>, vector<1x2x64xbf16>
    %17 = vector.shape_cast %16 : vector<1x2x64xbf16> to vector<2x64xbf16>
    %c9 = arith.constant 9 : index
    %c0_18 = arith.constant 0 : index
    %c0_19 = arith.constant 0 : index
    %18 = vector.load %arg1[%c9, %c0_18, %c0_19] : memref<16x2x64xbf16, #tpu.memory_space<vmem>>, vector<1x2x64xbf16>
    %19 = vector.shape_cast %18 : vector<1x2x64xbf16> to vector<2x64xbf16>
    %c10 = arith.constant 10 : index
    %c0_20 = arith.constant 0 : index
    %c0_21 = arith.constant 0 : index
    %20 = vector.load %arg1[%c10, %c0_20, %c0_21] : memref<16x2x64xbf16, #tpu.memory_space<vmem>>, vector<1x2x64xbf16>
    %21 = vector.shape_cast %20 : vector<1x2x64xbf16> to vector<2x64xbf16>
    %c11 = arith.constant 11 : index
    %c0_22 = arith.constant 0 : index
    %c0_23 = arith.constant 0 : index
    %22 = vector.load %arg1[%c11, %c0_22, %c0_23] : memref<16x2x64xbf16, #tpu.memory_space<vmem>>, vector<1x2x64xbf16>
    %23 = vector.shape_cast %22 : vector<1x2x64xbf16> to vector<2x64xbf16>
    %c12 = arith.constant 12 : index
    %c0_24 = arith.constant 0 : index
    %c0_25 = arith.constant 0 : index
    %24 = vector.load %arg1[%c12, %c0_24, %c0_25] : memref<16x2x64xbf16, #tpu.memory_space<vmem>>, vector<1x2x64xbf16>
    %25 = vector.shape_cast %24 : vector<1x2x64xbf16> to vector<2x64xbf16>
    %c13 = arith.constant 13 : index
    %c0_26 = arith.constant 0 : index
    %c0_27 = arith.constant 0 : index
    %26 = vector.load %arg1[%c13, %c0_26, %c0_27] : memref<16x2x64xbf16, #tpu.memory_space<vmem>>, vector<1x2x64xbf16>
    %27 = vector.shape_cast %26 : vector<1x2x64xbf16> to vector<2x64xbf16>
    %c14 = arith.constant 14 : index
    %c0_28 = arith.constant 0 : index
    %c0_29 = arith.constant 0 : index
    %28 = vector.load %arg1[%c14, %c0_28, %c0_29] : memref<16x2x64xbf16, #tpu.memory_space<vmem>>, vector<1x2x64xbf16>
    %29 = vector.shape_cast %28 : vector<1x2x64xbf16> to vector<2x64xbf16>
    %c15 = arith.constant 15 : index
    %c0_30 = arith.constant 0 : index
    %c0_31 = arith.constant 0 : index
    %30 = vector.load %arg1[%c15, %c0_30, %c0_31] : memref<16x2x64xbf16, #tpu.memory_space<vmem>>, vector<1x2x64xbf16>
    %31 = vector.shape_cast %30 : vector<1x2x64xbf16> to vector<2x64xbf16>
    %c0_32 = arith.constant 0 : index
    %c0_33 = arith.constant 0 : index
    %c0_34 = arith.constant 0 : index
    %32 = vector.load %arg2[%c0_32, %c0_33, %c0_34] : memref<4x64x112xbf16, #tpu.memory_space<vmem>>, vector<1x64x112xbf16>
    %33 = vector.shape_cast %32 : vector<1x64x112xbf16> to vector<64x112xbf16>
    %cst = arith.constant dense<0.000000e+00> : vector<2x112xf32>
    %34 = tpu.matmul %1, %33, %cst {dimension_numbers = #tpu.dot_dimension_numbers<[1], [0], [0], [1], [0, 0, 1, 1], [], []>} : vector<2x64xbf16>, vector<64x112xbf16>, vector<2x112xf32> -> vector<2x112xf32>
    %c1_35 = arith.constant 1 : index
    %c0_36 = arith.constant 0 : index
    %c0_37 = arith.constant 0 : index
    %35 = vector.load %arg2[%c1_35, %c0_36, %c0_37] : memref<4x64x112xbf16, #tpu.memory_space<vmem>>, vector<1x64x112xbf16>
    %36 = vector.shape_cast %35 : vector<1x64x112xbf16> to vector<64x112xbf16>
    %cst_38 = arith.constant dense<0.000000e+00> : vector<2x112xf32>
    %37 = tpu.matmul %3, %36, %cst_38 {dimension_numbers = #tpu.dot_dimension_numbers<[1], [0], [0], [1], [0, 0, 1, 1], [], []>} : vector<2x64xbf16>, vector<64x112xbf16>, vector<2x112xf32> -> vector<2x112xf32>
    %38 = arith.addf %34, %37 : vector<2x112xf32>
    %c2_39 = arith.constant 2 : index
    %c0_40 = arith.constant 0 : index
    %c0_41 = arith.constant 0 : index
    %39 = vector.load %arg2[%c2_39, %c0_40, %c0_41] : memref<4x64x112xbf16, #tpu.memory_space<vmem>>, vector<1x64x112xbf16>
    %40 = vector.shape_cast %39 : vector<1x64x112xbf16> to vector<64x112xbf16>
    %cst_42 = arith.constant dense<0.000000e+00> : vector<2x112xf32>
    %41 = tpu.matmul %5, %40, %cst_42 {dimension_numbers = #tpu.dot_dimension_numbers<[1], [0], [0], [1], [0, 0, 1, 1], [], []>} : vector<2x64xbf16>, vector<64x112xbf16>, vector<2x112xf32> -> vector<2x112xf32>
    %42 = arith.addf %38, %41 : vector<2x112xf32>
    %c3_43 = arith.constant 3 : index
    %c0_44 = arith.constant 0 : index
    %c0_45 = arith.constant 0 : index
    %43 = vector.load %arg2[%c3_43, %c0_44, %c0_45] : memref<4x64x112xbf16, #tpu.memory_space<vmem>>, vector<1x64x112xbf16>
    %44 = vector.shape_cast %43 : vector<1x64x112xbf16> to vector<64x112xbf16>
    %cst_46 = arith.constant dense<0.000000e+00> : vector<2x112xf32>
    %45 = tpu.matmul %7, %44, %cst_46 {dimension_numbers = #tpu.dot_dimension_numbers<[1], [0], [0], [1], [0, 0, 1, 1], [], []>} : vector<2x64xbf16>, vector<64x112xbf16>, vector<2x112xf32> -> vector<2x112xf32>
    %46 = arith.addf %42, %45 : vector<2x112xf32>
    %c0_47 = arith.constant 0 : index
    %c0_48 = arith.constant 0 : index
    %47 = vector.load %arg3[%c0_47, %c0_48] : memref<1x112xf32, #tpu.memory_space<vmem>>, vector<1x112xf32>
    %48 = vector.broadcast %47 : vector<1x112xf32> to vector<2x112xf32>
    %49 = arith.addf %46, %48 : vector<2x112xf32>
    %cst_49 = arith.constant 0.000000e+00 : f32
    %50 = vector.broadcast %cst_49 : f32 to vector<2x112xf32>
    %51 = arith.maximumf %49, %50 : vector<2x112xf32>
    %52 = arith.truncf %51 : vector<2x112xf32> to vector<2x112xbf16>
    %c0_50 = arith.constant 0 : index
    %c0_51 = arith.constant 0 : index
    %c0_52 = arith.constant 0 : index
    %53 = vector.load %arg2[%c0_50, %c0_51, %c0_52] : memref<4x64x112xbf16, #tpu.memory_space<vmem>>, vector<1x64x112xbf16>
    %54 = vector.shape_cast %53 : vector<1x64x112xbf16> to vector<64x112xbf16>
    %cst_53 = arith.constant dense<0.000000e+00> : vector<2x112xf32>
    %55 = tpu.matmul %5, %54, %cst_53 {dimension_numbers = #tpu.dot_dimension_numbers<[1], [0], [0], [1], [0, 0, 1, 1], [], []>} : vector<2x64xbf16>, vector<64x112xbf16>, vector<2x112xf32> -> vector<2x112xf32>
    %c1_54 = arith.constant 1 : index
    %c0_55 = arith.constant 0 : index
    %c0_56 = arith.constant 0 : index
    %56 = vector.load %arg2[%c1_54, %c0_55, %c0_56] : memref<4x64x112xbf16, #tpu.memory_space<vmem>>, vector<1x64x112xbf16>
    %57 = vector.shape_cast %56 : vector<1x64x112xbf16> to vector<64x112xbf16>
    %cst_57 = arith.constant dense<0.000000e+00> : vector<2x112xf32>
    %58 = tpu.matmul %7, %57, %cst_57 {dimension_numbers = #tpu.dot_dimension_numbers<[1], [0], [0], [1], [0, 0, 1, 1], [], []>} : vector<2x64xbf16>, vector<64x112xbf16>, vector<2x112xf32> -> vector<2x112xf32>
    %59 = arith.addf %55, %58 : vector<2x112xf32>
    %c2_58 = arith.constant 2 : index
    %c0_59 = arith.constant 0 : index
    %c0_60 = arith.constant 0 : index
    %60 = vector.load %arg2[%c2_58, %c0_59, %c0_60] : memref<4x64x112xbf16, #tpu.memory_space<vmem>>, vector<1x64x112xbf16>
    %61 = vector.shape_cast %60 : vector<1x64x112xbf16> to vector<64x112xbf16>
    %cst_61 = arith.constant dense<0.000000e+00> : vector<2x112xf32>
    %62 = tpu.matmul %9, %61, %cst_61 {dimension_numbers = #tpu.dot_dimension_numbers<[1], [0], [0], [1], [0, 0, 1, 1], [], []>} : vector<2x64xbf16>, vector<64x112xbf16>, vector<2x112xf32> -> vector<2x112xf32>
    %63 = arith.addf %59, %62 : vector<2x112xf32>
    %c3_62 = arith.constant 3 : index
    %c0_63 = arith.constant 0 : index
    %c0_64 = arith.constant 0 : index
    %64 = vector.load %arg2[%c3_62, %c0_63, %c0_64] : memref<4x64x112xbf16, #tpu.memory_space<vmem>>, vector<1x64x112xbf16>
    %65 = vector.shape_cast %64 : vector<1x64x112xbf16> to vector<64x112xbf16>
    %cst_65 = arith.constant dense<0.000000e+00> : vector<2x112xf32>
    %66 = tpu.matmul %11, %65, %cst_65 {dimension_numbers = #tpu.dot_dimension_numbers<[1], [0], [0], [1], [0, 0, 1, 1], [], []>} : vector<2x64xbf16>, vector<64x112xbf16>, vector<2x112xf32> -> vector<2x112xf32>
    %67 = arith.addf %63, %66 : vector<2x112xf32>
    %c0_66 = arith.constant 0 : index
    %c0_67 = arith.constant 0 : index
    %68 = vector.load %arg3[%c0_66, %c0_67] : memref<1x112xf32, #tpu.memory_space<vmem>>, vector<1x112xf32>
    %69 = vector.broadcast %68 : vector<1x112xf32> to vector<2x112xf32>
    %70 = arith.addf %67, %69 : vector<2x112xf32>
    %cst_68 = arith.constant 0.000000e+00 : f32
    %71 = vector.broadcast %cst_68 : f32 to vector<2x112xf32>
    %72 = arith.maximumf %70, %71 : vector<2x112xf32>
    %73 = arith.truncf %72 : vector<2x112xf32> to vector<2x112xbf16>
    %c0_69 = arith.constant 0 : index
    %c0_70 = arith.constant 0 : index
    %c0_71 = arith.constant 0 : index
    %74 = vector.load %arg2[%c0_69, %c0_70, %c0_71] : memref<4x64x112xbf16, #tpu.memory_space<vmem>>, vector<1x64x112xbf16>
    %75 = vector.shape_cast %74 : vector<1x64x112xbf16> to vector<64x112xbf16>
    %cst_72 = arith.constant dense<0.000000e+00> : vector<2x112xf32>
    %76 = tpu.matmul %9, %75, %cst_72 {dimension_numbers = #tpu.dot_dimension_numbers<[1], [0], [0], [1], [0, 0, 1, 1], [], []>} : vector<2x64xbf16>, vector<64x112xbf16>, vector<2x112xf32> -> vector<2x112xf32>
    %c1_73 = arith.constant 1 : index
    %c0_74 = arith.constant 0 : index
    %c0_75 = arith.constant 0 : index
    %77 = vector.load %arg2[%c1_73, %c0_74, %c0_75] : memref<4x64x112xbf16, #tpu.memory_space<vmem>>, vector<1x64x112xbf16>
    %78 = vector.shape_cast %77 : vector<1x64x112xbf16> to vector<64x112xbf16>
    %cst_76 = arith.constant dense<0.000000e+00> : vector<2x112xf32>
    %79 = tpu.matmul %11, %78, %cst_76 {dimension_numbers = #tpu.dot_dimension_numbers<[1], [0], [0], [1], [0, 0, 1, 1], [], []>} : vector<2x64xbf16>, vector<64x112xbf16>, vector<2x112xf32> -> vector<2x112xf32>
    %80 = arith.addf %76, %79 : vector<2x112xf32>
    %c2_77 = arith.constant 2 : index
    %c0_78 = arith.constant 0 : index
    %c0_79 = arith.constant 0 : index
    %81 = vector.load %arg2[%c2_77, %c0_78, %c0_79] : memref<4x64x112xbf16, #tpu.memory_space<vmem>>, vector<1x64x112xbf16>
    %82 = vector.shape_cast %81 : vector<1x64x112xbf16> to vector<64x112xbf16>
    %cst_80 = arith.constant dense<0.000000e+00> : vector<2x112xf32>
    %83 = tpu.matmul %13, %82, %cst_80 {dimension_numbers = #tpu.dot_dimension_numbers<[1], [0], [0], [1], [0, 0, 1, 1], [], []>} : vector<2x64xbf16>, vector<64x112xbf16>, vector<2x112xf32> -> vector<2x112xf32>
    %84 = arith.addf %80, %83 : vector<2x112xf32>
    %c3_81 = arith.constant 3 : index
    %c0_82 = arith.constant 0 : index
    %c0_83 = arith.constant 0 : index
    %85 = vector.load %arg2[%c3_81, %c0_82, %c0_83] : memref<4x64x112xbf16, #tpu.memory_space<vmem>>, vector<1x64x112xbf16>
    %86 = vector.shape_cast %85 : vector<1x64x112xbf16> to vector<64x112xbf16>
    %cst_84 = arith.constant dense<0.000000e+00> : vector<2x112xf32>
    %87 = tpu.matmul %15, %86, %cst_84 {dimension_numbers = #tpu.dot_dimension_numbers<[1], [0], [0], [1], [0, 0, 1, 1], [], []>} : vector<2x64xbf16>, vector<64x112xbf16>, vector<2x112xf32> -> vector<2x112xf32>
    %88 = arith.addf %84, %87 : vector<2x112xf32>
    %c0_85 = arith.constant 0 : index
    %c0_86 = arith.constant 0 : index
    %89 = vector.load %arg3[%c0_85, %c0_86] : memref<1x112xf32, #tpu.memory_space<vmem>>, vector<1x112xf32>
    %90 = vector.broadcast %89 : vector<1x112xf32> to vector<2x112xf32>
    %91 = arith.addf %88, %90 : vector<2x112xf32>
    %cst_87 = arith.constant 0.000000e+00 : f32
    %92 = vector.broadcast %cst_87 : f32 to vector<2x112xf32>
    %93 = arith.maximumf %91, %92 : vector<2x112xf32>
    %94 = arith.truncf %93 : vector<2x112xf32> to vector<2x112xbf16>
    %c0_88 = arith.constant 0 : index
    %c0_89 = arith.constant 0 : index
    %c0_90 = arith.constant 0 : index
    %95 = vector.load %arg2[%c0_88, %c0_89, %c0_90] : memref<4x64x112xbf16, #tpu.memory_space<vmem>>, vector<1x64x112xbf16>
    %96 = vector.shape_cast %95 : vector<1x64x112xbf16> to vector<64x112xbf16>
    %cst_91 = arith.constant dense<0.000000e+00> : vector<2x112xf32>
    %97 = tpu.matmul %13, %96, %cst_91 {dimension_numbers = #tpu.dot_dimension_numbers<[1], [0], [0], [1], [0, 0, 1, 1], [], []>} : vector<2x64xbf16>, vector<64x112xbf16>, vector<2x112xf32> -> vector<2x112xf32>
    %c1_92 = arith.constant 1 : index
    %c0_93 = arith.constant 0 : index
    %c0_94 = arith.constant 0 : index
    %98 = vector.load %arg2[%c1_92, %c0_93, %c0_94] : memref<4x64x112xbf16, #tpu.memory_space<vmem>>, vector<1x64x112xbf16>
    %99 = vector.shape_cast %98 : vector<1x64x112xbf16> to vector<64x112xbf16>
    %cst_95 = arith.constant dense<0.000000e+00> : vector<2x112xf32>
    %100 = tpu.matmul %15, %99, %cst_95 {dimension_numbers = #tpu.dot_dimension_numbers<[1], [0], [0], [1], [0, 0, 1, 1], [], []>} : vector<2x64xbf16>, vector<64x112xbf16>, vector<2x112xf32> -> vector<2x112xf32>
    %101 = arith.addf %97, %100 : vector<2x112xf32>
    %c2_96 = arith.constant 2 : index
    %c0_97 = arith.constant 0 : index
    %c0_98 = arith.constant 0 : index
    %102 = vector.load %arg2[%c2_96, %c0_97, %c0_98] : memref<4x64x112xbf16, #tpu.memory_space<vmem>>, vector<1x64x112xbf16>
    %103 = vector.shape_cast %102 : vector<1x64x112xbf16> to vector<64x112xbf16>
    %cst_99 = arith.constant dense<0.000000e+00> : vector<2x112xf32>
    %104 = tpu.matmul %17, %103, %cst_99 {dimension_numbers = #tpu.dot_dimension_numbers<[1], [0], [0], [1], [0, 0, 1, 1], [], []>} : vector<2x64xbf16>, vector<64x112xbf16>, vector<2x112xf32> -> vector<2x112xf32>
    %105 = arith.addf %101, %104 : vector<2x112xf32>
    %c3_100 = arith.constant 3 : index
    %c0_101 = arith.constant 0 : index
    %c0_102 = arith.constant 0 : index
    %106 = vector.load %arg2[%c3_100, %c0_101, %c0_102] : memref<4x64x112xbf16, #tpu.memory_space<vmem>>, vector<1x64x112xbf16>
    %107 = vector.shape_cast %106 : vector<1x64x112xbf16> to vector<64x112xbf16>
    %cst_103 = arith.constant dense<0.000000e+00> : vector<2x112xf32>
    %108 = tpu.matmul %19, %107, %cst_103 {dimension_numbers = #tpu.dot_dimension_numbers<[1], [0], [0], [1], [0, 0, 1, 1], [], []>} : vector<2x64xbf16>, vector<64x112xbf16>, vector<2x112xf32> -> vector<2x112xf32>
    %109 = arith.addf %105, %108 : vector<2x112xf32>
    %c0_104 = arith.constant 0 : index
    %c0_105 = arith.constant 0 : index
    %110 = vector.load %arg3[%c0_104, %c0_105] : memref<1x112xf32, #tpu.memory_space<vmem>>, vector<1x112xf32>
    %111 = vector.broadcast %110 : vector<1x112xf32> to vector<2x112xf32>
    %112 = arith.addf %109, %111 : vector<2x112xf32>
    %cst_106 = arith.constant 0.000000e+00 : f32
    %113 = vector.broadcast %cst_106 : f32 to vector<2x112xf32>
    %114 = arith.maximumf %112, %113 : vector<2x112xf32>
    %115 = arith.truncf %114 : vector<2x112xf32> to vector<2x112xbf16>
    %c0_107 = arith.constant 0 : index
    %c0_108 = arith.constant 0 : index
    %c0_109 = arith.constant 0 : index
    %116 = vector.load %arg2[%c0_107, %c0_108, %c0_109] : memref<4x64x112xbf16, #tpu.memory_space<vmem>>, vector<1x64x112xbf16>
    %117 = vector.shape_cast %116 : vector<1x64x112xbf16> to vector<64x112xbf16>
    %cst_110 = arith.constant dense<0.000000e+00> : vector<2x112xf32>
    %118 = tpu.matmul %17, %117, %cst_110 {dimension_numbers = #tpu.dot_dimension_numbers<[1], [0], [0], [1], [0, 0, 1, 1], [], []>} : vector<2x64xbf16>, vector<64x112xbf16>, vector<2x112xf32> -> vector<2x112xf32>
    %c1_111 = arith.constant 1 : index
    %c0_112 = arith.constant 0 : index
    %c0_113 = arith.constant 0 : index
    %119 = vector.load %arg2[%c1_111, %c0_112, %c0_113] : memref<4x64x112xbf16, #tpu.memory_space<vmem>>, vector<1x64x112xbf16>
    %120 = vector.shape_cast %119 : vector<1x64x112xbf16> to vector<64x112xbf16>
    %cst_114 = arith.constant dense<0.000000e+00> : vector<2x112xf32>
    %121 = tpu.matmul %19, %120, %cst_114 {dimension_numbers = #tpu.dot_dimension_numbers<[1], [0], [0], [1], [0, 0, 1, 1], [], []>} : vector<2x64xbf16>, vector<64x112xbf16>, vector<2x112xf32> -> vector<2x112xf32>
    %122 = arith.addf %118, %121 : vector<2x112xf32>
    %c2_115 = arith.constant 2 : index
    %c0_116 = arith.constant 0 : index
    %c0_117 = arith.constant 0 : index
    %123 = vector.load %arg2[%c2_115, %c0_116, %c0_117] : memref<4x64x112xbf16, #tpu.memory_space<vmem>>, vector<1x64x112xbf16>
    %124 = vector.shape_cast %123 : vector<1x64x112xbf16> to vector<64x112xbf16>
    %cst_118 = arith.constant dense<0.000000e+00> : vector<2x112xf32>
    %125 = tpu.matmul %21, %124, %cst_118 {dimension_numbers = #tpu.dot_dimension_numbers<[1], [0], [0], [1], [0, 0, 1, 1], [], []>} : vector<2x64xbf16>, vector<64x112xbf16>, vector<2x112xf32> -> vector<2x112xf32>
    %126 = arith.addf %122, %125 : vector<2x112xf32>
    %c3_119 = arith.constant 3 : index
    %c0_120 = arith.constant 0 : index
    %c0_121 = arith.constant 0 : index
    %127 = vector.load %arg2[%c3_119, %c0_120, %c0_121] : memref<4x64x112xbf16, #tpu.memory_space<vmem>>, vector<1x64x112xbf16>
    %128 = vector.shape_cast %127 : vector<1x64x112xbf16> to vector<64x112xbf16>
    %cst_122 = arith.constant dense<0.000000e+00> : vector<2x112xf32>
    %129 = tpu.matmul %23, %128, %cst_122 {dimension_numbers = #tpu.dot_dimension_numbers<[1], [0], [0], [1], [0, 0, 1, 1], [], []>} : vector<2x64xbf16>, vector<64x112xbf16>, vector<2x112xf32> -> vector<2x112xf32>
    %130 = arith.addf %126, %129 : vector<2x112xf32>
    %c0_123 = arith.constant 0 : index
    %c0_124 = arith.constant 0 : index
    %131 = vector.load %arg3[%c0_123, %c0_124] : memref<1x112xf32, #tpu.memory_space<vmem>>, vector<1x112xf32>
    %132 = vector.broadcast %131 : vector<1x112xf32> to vector<2x112xf32>
    %133 = arith.addf %130, %132 : vector<2x112xf32>
    %cst_125 = arith.constant 0.000000e+00 : f32
    %134 = vector.broadcast %cst_125 : f32 to vector<2x112xf32>
    %135 = arith.maximumf %133, %134 : vector<2x112xf32>
    %136 = arith.truncf %135 : vector<2x112xf32> to vector<2x112xbf16>
    %c0_126 = arith.constant 0 : index
    %c0_127 = arith.constant 0 : index
    %c0_128 = arith.constant 0 : index
    %137 = vector.load %arg2[%c0_126, %c0_127, %c0_128] : memref<4x64x112xbf16, #tpu.memory_space<vmem>>, vector<1x64x112xbf16>
    %138 = vector.shape_cast %137 : vector<1x64x112xbf16> to vector<64x112xbf16>
    %cst_129 = arith.constant dense<0.000000e+00> : vector<2x112xf32>
    %139 = tpu.matmul %21, %138, %cst_129 {dimension_numbers = #tpu.dot_dimension_numbers<[1], [0], [0], [1], [0, 0, 1, 1], [], []>} : vector<2x64xbf16>, vector<64x112xbf16>, vector<2x112xf32> -> vector<2x112xf32>
    %c1_130 = arith.constant 1 : index
    %c0_131 = arith.constant 0 : index
    %c0_132 = arith.constant 0 : index
    %140 = vector.load %arg2[%c1_130, %c0_131, %c0_132] : memref<4x64x112xbf16, #tpu.memory_space<vmem>>, vector<1x64x112xbf16>
    %141 = vector.shape_cast %140 : vector<1x64x112xbf16> to vector<64x112xbf16>
    %cst_133 = arith.constant dense<0.000000e+00> : vector<2x112xf32>
    %142 = tpu.matmul %23, %141, %cst_133 {dimension_numbers = #tpu.dot_dimension_numbers<[1], [0], [0], [1], [0, 0, 1, 1], [], []>} : vector<2x64xbf16>, vector<64x112xbf16>, vector<2x112xf32> -> vector<2x112xf32>
    %143 = arith.addf %139, %142 : vector<2x112xf32>
    %c2_134 = arith.constant 2 : index
    %c0_135 = arith.constant 0 : index
    %c0_136 = arith.constant 0 : index
    %144 = vector.load %arg2[%c2_134, %c0_135, %c0_136] : memref<4x64x112xbf16, #tpu.memory_space<vmem>>, vector<1x64x112xbf16>
    %145 = vector.shape_cast %144 : vector<1x64x112xbf16> to vector<64x112xbf16>
    %cst_137 = arith.constant dense<0.000000e+00> : vector<2x112xf32>
    %146 = tpu.matmul %25, %145, %cst_137 {dimension_numbers = #tpu.dot_dimension_numbers<[1], [0], [0], [1], [0, 0, 1, 1], [], []>} : vector<2x64xbf16>, vector<64x112xbf16>, vector<2x112xf32> -> vector<2x112xf32>
    %147 = arith.addf %143, %146 : vector<2x112xf32>
    %c3_138 = arith.constant 3 : index
    %c0_139 = arith.constant 0 : index
    %c0_140 = arith.constant 0 : index
    %148 = vector.load %arg2[%c3_138, %c0_139, %c0_140] : memref<4x64x112xbf16, #tpu.memory_space<vmem>>, vector<1x64x112xbf16>
    %149 = vector.shape_cast %148 : vector<1x64x112xbf16> to vector<64x112xbf16>
    %cst_141 = arith.constant dense<0.000000e+00> : vector<2x112xf32>
    %150 = tpu.matmul %27, %149, %cst_141 {dimension_numbers = #tpu.dot_dimension_numbers<[1], [0], [0], [1], [0, 0, 1, 1], [], []>} : vector<2x64xbf16>, vector<64x112xbf16>, vector<2x112xf32> -> vector<2x112xf32>
    %151 = arith.addf %147, %150 : vector<2x112xf32>
    %c0_142 = arith.constant 0 : index
    %c0_143 = arith.constant 0 : index
    %152 = vector.load %arg3[%c0_142, %c0_143] : memref<1x112xf32, #tpu.memory_space<vmem>>, vector<1x112xf32>
    %153 = vector.broadcast %152 : vector<1x112xf32> to vector<2x112xf32>
    %154 = arith.addf %151, %153 : vector<2x112xf32>
    %cst_144 = arith.constant 0.000000e+00 : f32
    %155 = vector.broadcast %cst_144 : f32 to vector<2x112xf32>
    %156 = arith.maximumf %154, %155 : vector<2x112xf32>
    %157 = arith.truncf %156 : vector<2x112xf32> to vector<2x112xbf16>
    %c0_145 = arith.constant 0 : index
    %c0_146 = arith.constant 0 : index
    %c0_147 = arith.constant 0 : index
    %158 = vector.load %arg2[%c0_145, %c0_146, %c0_147] : memref<4x64x112xbf16, #tpu.memory_space<vmem>>, vector<1x64x112xbf16>
    %159 = vector.shape_cast %158 : vector<1x64x112xbf16> to vector<64x112xbf16>
    %cst_148 = arith.constant dense<0.000000e+00> : vector<2x112xf32>
    %160 = tpu.matmul %25, %159, %cst_148 {dimension_numbers = #tpu.dot_dimension_numbers<[1], [0], [0], [1], [0, 0, 1, 1], [], []>} : vector<2x64xbf16>, vector<64x112xbf16>, vector<2x112xf32> -> vector<2x112xf32>
    %c1_149 = arith.constant 1 : index
    %c0_150 = arith.constant 0 : index
    %c0_151 = arith.constant 0 : index
    %161 = vector.load %arg2[%c1_149, %c0_150, %c0_151] : memref<4x64x112xbf16, #tpu.memory_space<vmem>>, vector<1x64x112xbf16>
    %162 = vector.shape_cast %161 : vector<1x64x112xbf16> to vector<64x112xbf16>
    %cst_152 = arith.constant dense<0.000000e+00> : vector<2x112xf32>
    %163 = tpu.matmul %27, %162, %cst_152 {dimension_numbers = #tpu.dot_dimension_numbers<[1], [0], [0], [1], [0, 0, 1, 1], [], []>} : vector<2x64xbf16>, vector<64x112xbf16>, vector<2x112xf32> -> vector<2x112xf32>
    %164 = arith.addf %160, %163 : vector<2x112xf32>
    %c2_153 = arith.constant 2 : index
    %c0_154 = arith.constant 0 : index
    %c0_155 = arith.constant 0 : index
    %165 = vector.load %arg2[%c2_153, %c0_154, %c0_155] : memref<4x64x112xbf16, #tpu.memory_space<vmem>>, vector<1x64x112xbf16>
    %166 = vector.shape_cast %165 : vector<1x64x112xbf16> to vector<64x112xbf16>
    %cst_156 = arith.constant dense<0.000000e+00> : vector<2x112xf32>
    %167 = tpu.matmul %29, %166, %cst_156 {dimension_numbers = #tpu.dot_dimension_numbers<[1], [0], [0], [1], [0, 0, 1, 1], [], []>} : vector<2x64xbf16>, vector<64x112xbf16>, vector<2x112xf32> -> vector<2x112xf32>
    %168 = arith.addf %164, %167 : vector<2x112xf32>
    %c3_157 = arith.constant 3 : index
    %c0_158 = arith.constant 0 : index
    %c0_159 = arith.constant 0 : index
    %169 = vector.load %arg2[%c3_157, %c0_158, %c0_159] : memref<4x64x112xbf16, #tpu.memory_space<vmem>>, vector<1x64x112xbf16>
    %170 = vector.shape_cast %169 : vector<1x64x112xbf16> to vector<64x112xbf16>
    %cst_160 = arith.constant dense<0.000000e+00> : vector<2x112xf32>
    %171 = tpu.matmul %31, %170, %cst_160 {dimension_numbers = #tpu.dot_dimension_numbers<[1], [0], [0], [1], [0, 0, 1, 1], [], []>} : vector<2x64xbf16>, vector<64x112xbf16>, vector<2x112xf32> -> vector<2x112xf32>
    %172 = arith.addf %168, %171 : vector<2x112xf32>
    %c0_161 = arith.constant 0 : index
    %c0_162 = arith.constant 0 : index
    %173 = vector.load %arg3[%c0_161, %c0_162] : memref<1x112xf32, #tpu.memory_space<vmem>>, vector<1x112xf32>
    %174 = vector.broadcast %173 : vector<1x112xf32> to vector<2x112xf32>
    %175 = arith.addf %172, %174 : vector<2x112xf32>
    %cst_163 = arith.constant 0.000000e+00 : f32
    %176 = vector.broadcast %cst_163 : f32 to vector<2x112xf32>
    %177 = arith.maximumf %175, %176 : vector<2x112xf32>
    %178 = arith.truncf %177 : vector<2x112xf32> to vector<2x112xbf16>
    %c0_164 = arith.constant 0 : index
    %c0_165 = arith.constant 0 : index
    %c0_166 = arith.constant 0 : index
    %179 = vector.load %arg4[%c0_164, %c0_165, %c0_166] : memref<3x112x192xbf16, #tpu.memory_space<vmem>>, vector<1x112x192xbf16>
    %180 = vector.shape_cast %179 : vector<1x112x192xbf16> to vector<112x192xbf16>
    %cst_167 = arith.constant dense<0.000000e+00> : vector<2x192xf32>
    %181 = tpu.matmul %52, %180, %cst_167 {dimension_numbers = #tpu.dot_dimension_numbers<[1], [0], [0], [1], [0, 0, 1, 1], [], []>} : vector<2x112xbf16>, vector<112x192xbf16>, vector<2x192xf32> -> vector<2x192xf32>
    %c1_168 = arith.constant 1 : index
    %c0_169 = arith.constant 0 : index
    %c0_170 = arith.constant 0 : index
    %182 = vector.load %arg4[%c1_168, %c0_169, %c0_170] : memref<3x112x192xbf16, #tpu.memory_space<vmem>>, vector<1x112x192xbf16>
    %183 = vector.shape_cast %182 : vector<1x112x192xbf16> to vector<112x192xbf16>
    %cst_171 = arith.constant dense<0.000000e+00> : vector<2x192xf32>
    %184 = tpu.matmul %73, %183, %cst_171 {dimension_numbers = #tpu.dot_dimension_numbers<[1], [0], [0], [1], [0, 0, 1, 1], [], []>} : vector<2x112xbf16>, vector<112x192xbf16>, vector<2x192xf32> -> vector<2x192xf32>
    %185 = arith.addf %181, %184 : vector<2x192xf32>
    %c2_172 = arith.constant 2 : index
    %c0_173 = arith.constant 0 : index
    %c0_174 = arith.constant 0 : index
    %186 = vector.load %arg4[%c2_172, %c0_173, %c0_174] : memref<3x112x192xbf16, #tpu.memory_space<vmem>>, vector<1x112x192xbf16>
    %187 = vector.shape_cast %186 : vector<1x112x192xbf16> to vector<112x192xbf16>
    %cst_175 = arith.constant dense<0.000000e+00> : vector<2x192xf32>
    %188 = tpu.matmul %94, %187, %cst_175 {dimension_numbers = #tpu.dot_dimension_numbers<[1], [0], [0], [1], [0, 0, 1, 1], [], []>} : vector<2x112xbf16>, vector<112x192xbf16>, vector<2x192xf32> -> vector<2x192xf32>
    %189 = arith.addf %185, %188 : vector<2x192xf32>
    %c0_176 = arith.constant 0 : index
    %c0_177 = arith.constant 0 : index
    %190 = vector.load %arg5[%c0_176, %c0_177] : memref<1x192xf32, #tpu.memory_space<vmem>>, vector<1x192xf32>
    %191 = vector.broadcast %190 : vector<1x192xf32> to vector<2x192xf32>
    %192 = arith.addf %189, %191 : vector<2x192xf32>
    %cst_178 = arith.constant 0.000000e+00 : f32
    %193 = vector.broadcast %cst_178 : f32 to vector<2x192xf32>
    %194 = arith.maximumf %192, %193 : vector<2x192xf32>
    %195 = arith.truncf %194 : vector<2x192xf32> to vector<2x192xbf16>
    %c0_179 = arith.constant 0 : index
    %c0_180 = arith.constant 0 : index
    %c0_181 = arith.constant 0 : index
    %196 = vector.load %arg4[%c0_179, %c0_180, %c0_181] : memref<3x112x192xbf16, #tpu.memory_space<vmem>>, vector<1x112x192xbf16>
    %197 = vector.shape_cast %196 : vector<1x112x192xbf16> to vector<112x192xbf16>
    %cst_182 = arith.constant dense<0.000000e+00> : vector<2x192xf32>
    %198 = tpu.matmul %94, %197, %cst_182 {dimension_numbers = #tpu.dot_dimension_numbers<[1], [0], [0], [1], [0, 0, 1, 1], [], []>} : vector<2x112xbf16>, vector<112x192xbf16>, vector<2x192xf32> -> vector<2x192xf32>
    %c1_183 = arith.constant 1 : index
    %c0_184 = arith.constant 0 : index
    %c0_185 = arith.constant 0 : index
    %199 = vector.load %arg4[%c1_183, %c0_184, %c0_185] : memref<3x112x192xbf16, #tpu.memory_space<vmem>>, vector<1x112x192xbf16>
    %200 = vector.shape_cast %199 : vector<1x112x192xbf16> to vector<112x192xbf16>
    %cst_186 = arith.constant dense<0.000000e+00> : vector<2x192xf32>
    %201 = tpu.matmul %115, %200, %cst_186 {dimension_numbers = #tpu.dot_dimension_numbers<[1], [0], [0], [1], [0, 0, 1, 1], [], []>} : vector<2x112xbf16>, vector<112x192xbf16>, vector<2x192xf32> -> vector<2x192xf32>
    %202 = arith.addf %198, %201 : vector<2x192xf32>
    %c2_187 = arith.constant 2 : index
    %c0_188 = arith.constant 0 : index
    %c0_189 = arith.constant 0 : index
    %203 = vector.load %arg4[%c2_187, %c0_188, %c0_189] : memref<3x112x192xbf16, #tpu.memory_space<vmem>>, vector<1x112x192xbf16>
    %204 = vector.shape_cast %203 : vector<1x112x192xbf16> to vector<112x192xbf16>
    %cst_190 = arith.constant dense<0.000000e+00> : vector<2x192xf32>
    %205 = tpu.matmul %136, %204, %cst_190 {dimension_numbers = #tpu.dot_dimension_numbers<[1], [0], [0], [1], [0, 0, 1, 1], [], []>} : vector<2x112xbf16>, vector<112x192xbf16>, vector<2x192xf32> -> vector<2x192xf32>
    %206 = arith.addf %202, %205 : vector<2x192xf32>
    %c0_191 = arith.constant 0 : index
    %c0_192 = arith.constant 0 : index
    %207 = vector.load %arg5[%c0_191, %c0_192] : memref<1x192xf32, #tpu.memory_space<vmem>>, vector<1x192xf32>
    %208 = vector.broadcast %207 : vector<1x192xf32> to vector<2x192xf32>
    %209 = arith.addf %206, %208 : vector<2x192xf32>
    %cst_193 = arith.constant 0.000000e+00 : f32
    %210 = vector.broadcast %cst_193 : f32 to vector<2x192xf32>
    %211 = arith.maximumf %209, %210 : vector<2x192xf32>
    %212 = arith.truncf %211 : vector<2x192xf32> to vector<2x192xbf16>
    %c0_194 = arith.constant 0 : index
    %c0_195 = arith.constant 0 : index
    %c0_196 = arith.constant 0 : index
    %213 = vector.load %arg4[%c0_194, %c0_195, %c0_196] : memref<3x112x192xbf16, #tpu.memory_space<vmem>>, vector<1x112x192xbf16>
    %214 = vector.shape_cast %213 : vector<1x112x192xbf16> to vector<112x192xbf16>
    %cst_197 = arith.constant dense<0.000000e+00> : vector<2x192xf32>
    %215 = tpu.matmul %136, %214, %cst_197 {dimension_numbers = #tpu.dot_dimension_numbers<[1], [0], [0], [1], [0, 0, 1, 1], [], []>} : vector<2x112xbf16>, vector<112x192xbf16>, vector<2x192xf32> -> vector<2x192xf32>
    %c1_198 = arith.constant 1 : index
    %c0_199 = arith.constant 0 : index
    %c0_200 = arith.constant 0 : index
    %216 = vector.load %arg4[%c1_198, %c0_199, %c0_200] : memref<3x112x192xbf16, #tpu.memory_space<vmem>>, vector<1x112x192xbf16>
    %217 = vector.shape_cast %216 : vector<1x112x192xbf16> to vector<112x192xbf16>
    %cst_201 = arith.constant dense<0.000000e+00> : vector<2x192xf32>
    %218 = tpu.matmul %157, %217, %cst_201 {dimension_numbers = #tpu.dot_dimension_numbers<[1], [0], [0], [1], [0, 0, 1, 1], [], []>} : vector<2x112xbf16>, vector<112x192xbf16>, vector<2x192xf32> -> vector<2x192xf32>
    %219 = arith.addf %215, %218 : vector<2x192xf32>
    %c2_202 = arith.constant 2 : index
    %c0_203 = arith.constant 0 : index
    %c0_204 = arith.constant 0 : index
    %220 = vector.load %arg4[%c2_202, %c0_203, %c0_204] : memref<3x112x192xbf16, #tpu.memory_space<vmem>>, vector<1x112x192xbf16>
    %221 = vector.shape_cast %220 : vector<1x112x192xbf16> to vector<112x192xbf16>
    %cst_205 = arith.constant dense<0.000000e+00> : vector<2x192xf32>
    %222 = tpu.matmul %178, %221, %cst_205 {dimension_numbers = #tpu.dot_dimension_numbers<[1], [0], [0], [1], [0, 0, 1, 1], [], []>} : vector<2x112xbf16>, vector<112x192xbf16>, vector<2x192xf32> -> vector<2x192xf32>
    %223 = arith.addf %219, %222 : vector<2x192xf32>
    %c0_206 = arith.constant 0 : index
    %c0_207 = arith.constant 0 : index
    %224 = vector.load %arg5[%c0_206, %c0_207] : memref<1x192xf32, #tpu.memory_space<vmem>>, vector<1x192xf32>
    %225 = vector.broadcast %224 : vector<1x192xf32> to vector<2x192xf32>
    %226 = arith.addf %223, %225 : vector<2x192xf32>
    %cst_208 = arith.constant 0.000000e+00 : f32
    %227 = vector.broadcast %cst_208 : f32 to vector<2x192xf32>
    %228 = arith.maximumf %226, %227 : vector<2x192xf32>
    %229 = arith.truncf %228 : vector<2x192xf32> to vector<2x192xbf16>
    %c0_209 = arith.constant 0 : index
    %c0_210 = arith.constant 0 : index
    %c0_211 = arith.constant 0 : index
    %230 = vector.load %arg6[%c0_209, %c0_210, %c0_211] : memref<3x192x256xbf16, #tpu.memory_space<vmem>>, vector<1x192x256xbf16>
    %231 = vector.shape_cast %230 : vector<1x192x256xbf16> to vector<192x256xbf16>
    %cst_212 = arith.constant dense<0.000000e+00> : vector<2x256xf32>
    %232 = tpu.matmul %195, %231, %cst_212 {dimension_numbers = #tpu.dot_dimension_numbers<[1], [0], [0], [1], [0, 0, 1, 1], [], []>} : vector<2x192xbf16>, vector<192x256xbf16>, vector<2x256xf32> -> vector<2x256xf32>
    %c1_213 = arith.constant 1 : index
    %c0_214 = arith.constant 0 : index
    %c0_215 = arith.constant 0 : index
    %233 = vector.load %arg6[%c1_213, %c0_214, %c0_215] : memref<3x192x256xbf16, #tpu.memory_space<vmem>>, vector<1x192x256xbf16>
    %234 = vector.shape_cast %233 : vector<1x192x256xbf16> to vector<192x256xbf16>
    %cst_216 = arith.constant dense<0.000000e+00> : vector<2x256xf32>
    %235 = tpu.matmul %212, %234, %cst_216 {dimension_numbers = #tpu.dot_dimension_numbers<[1], [0], [0], [1], [0, 0, 1, 1], [], []>} : vector<2x192xbf16>, vector<192x256xbf16>, vector<2x256xf32> -> vector<2x256xf32>
    %236 = arith.addf %232, %235 : vector<2x256xf32>
    %c2_217 = arith.constant 2 : index
    %c0_218 = arith.constant 0 : index
    %c0_219 = arith.constant 0 : index
    %237 = vector.load %arg6[%c2_217, %c0_218, %c0_219] : memref<3x192x256xbf16, #tpu.memory_space<vmem>>, vector<1x192x256xbf16>
    %238 = vector.shape_cast %237 : vector<1x192x256xbf16> to vector<192x256xbf16>
    %cst_220 = arith.constant dense<0.000000e+00> : vector<2x256xf32>
    %239 = tpu.matmul %229, %238, %cst_220 {dimension_numbers = #tpu.dot_dimension_numbers<[1], [0], [0], [1], [0, 0, 1, 1], [], []>} : vector<2x192xbf16>, vector<192x256xbf16>, vector<2x256xf32> -> vector<2x256xf32>
    %240 = arith.addf %236, %239 : vector<2x256xf32>
    %c0_221 = arith.constant 0 : index
    %c0_222 = arith.constant 0 : index
    %241 = vector.load %arg7[%c0_221, %c0_222] : memref<1x256xf32, #tpu.memory_space<vmem>>, vector<1x256xf32>
    %242 = vector.broadcast %241 : vector<1x256xf32> to vector<2x256xf32>
    %243 = arith.addf %240, %242 : vector<2x256xf32>
    %cst_223 = arith.constant 0.000000e+00 : f32
    %244 = vector.broadcast %cst_223 : f32 to vector<2x256xf32>
    %245 = arith.maximumf %243, %244 : vector<2x256xf32>
    %246 = arith.truncf %245 : vector<2x256xf32> to vector<2x256xbf16>
    %c0_224 = arith.constant 0 : index
    %c0_225 = arith.constant 0 : index
    %247 = vector.load %arg8[%c0_224, %c0_225] : memref<256x256xbf16, #tpu.memory_space<vmem>>, vector<256x256xbf16>
    %cst_226 = arith.constant dense<0.000000e+00> : vector<2x256xf32>
    %248 = tpu.matmul %246, %247, %cst_226 {dimension_numbers = #tpu.dot_dimension_numbers<[1], [0], [0], [1], [0, 0, 1, 1], [], []>} : vector<2x256xbf16>, vector<256x256xbf16>, vector<2x256xf32> -> vector<2x256xf32>
    %c0_227 = arith.constant 0 : index
    %c0_228 = arith.constant 0 : index
    %249 = vector.load %arg9[%c0_227, %c0_228] : memref<1x256xf32, #tpu.memory_space<vmem>>, vector<1x256xf32>
    %250 = vector.broadcast %249 : vector<1x256xf32> to vector<2x256xf32>
    %251 = arith.addf %248, %250 : vector<2x256xf32>
    %cst_229 = arith.constant 0.000000e+00 : f32
    %252 = vector.broadcast %cst_229 : f32 to vector<2x256xf32>
    %253 = arith.maximumf %251, %252 : vector<2x256xf32>
    %254 = arith.truncf %253 : vector<2x256xf32> to vector<2x256xbf16>
    %c0_230 = arith.constant 0 : index
    %c0_231 = arith.constant 0 : index
    %255 = vector.load %arg10[%c0_230, %c0_231] : memref<256x128xbf16, #tpu.memory_space<vmem>>, vector<256x128xbf16>
    %cst_232 = arith.constant dense<0.000000e+00> : vector<2x128xf32>
    %256 = tpu.matmul %254, %255, %cst_232 {dimension_numbers = #tpu.dot_dimension_numbers<[1], [0], [0], [1], [0, 0, 1, 1], [], []>} : vector<2x256xbf16>, vector<256x128xbf16>, vector<2x128xf32> -> vector<2x128xf32>
    %c0_233 = arith.constant 0 : index
    %c0_234 = arith.constant 0 : index
    %257 = vector.load %arg11[%c0_233, %c0_234] : memref<1x128xf32, #tpu.memory_space<vmem>>, vector<1x128xf32>
    %258 = vector.broadcast %257 : vector<1x128xf32> to vector<2x128xf32>
    %259 = arith.addf %256, %258 : vector<2x128xf32>
    %260 = tpu.iota {dimensions = array<i32: 1>} : vector<2x128xi32>
    %cst_235 = arith.constant 0.000000e+00 : f32
    %261 = vector.broadcast %cst_235 : f32 to vector<2x128xf32>
    %262 = arith.maximumf %259, %261 : vector<2x128xf32>
    %263 = math.absf %259 : vector<2x128xf32>
    %cst_236 = arith.constant 0.000000e+00 : f32
    %264 = vector.broadcast %cst_236 : f32 to vector<2x128xf32>
    %265 = arith.subf %264, %263 : vector<2x128xf32>
    %266 = math.exp %265 : vector<2x128xf32>
    %cst_237 = arith.constant 1.000000e+00 : f32
    %267 = vector.broadcast %cst_237 : f32 to vector<2x128xf32>
    %268 = arith.addf %267, %266 : vector<2x128xf32>
    %269 = math.log %268 : vector<2x128xf32>
    %270 = arith.addf %262, %269 : vector<2x128xf32>
    %cst_238 = arith.constant 1.000000e+00 : f32
    %271 = vector.broadcast %cst_238 : f32 to vector<2x128xf32>
    %272 = arith.addf %270, %271 : vector<2x128xf32>
    %c1_i32 = arith.constant 1 : i32
    %273 = vector.broadcast %c1_i32 : i32 to vector<2x128xi32>
    %274 = arith.cmpi sge, %260, %273 : vector<2x128xi32>
    %c7_i32 = arith.constant 7 : i32
    %275 = vector.broadcast %c7_i32 : i32 to vector<2x128xi32>
    %276 = arith.cmpi slt, %260, %275 : vector<2x128xi32>
    %277 = arith.andi %274, %276 : vector<2x128xi1>
    %278 = arith.select %277, %272, %259 : vector<2x128xi1>, vector<2x128xf32>
    %c0_239 = arith.constant 0 : index
    %c0_240 = arith.constant 0 : index
    %279 = vector.load %arg12[%c0_239, %c0_240] : memref<2x128xf32, #tpu.memory_space<vmem>>, vector<2x128xf32>
    tpu.vector_store %arg12[%c0_239, %c0_240], %278 {strides = array<i32>} : memref<2x128xf32, #tpu.memory_space<vmem>>, vector<2x128xf32>,
    return
  }
  func.func @transform_0(%arg0: i32) -> (i32, i32, i32) {
    %c0_i32 = arith.constant 0 : i32
    %c0_i32_0 = arith.constant 0 : i32
    %c0_i32_1 = arith.constant 0 : i32
    return %c0_i32, %arg0, %c0_i32_0 : i32, i32, i32
  }
  func.func @transform_1(%arg0: i32) -> (i32, i32, i32) {
    %c0_i32 = arith.constant 0 : i32
    %c0_i32_0 = arith.constant 0 : i32
    %c0_i32_1 = arith.constant 0 : i32
    %c0_i32_2 = arith.constant 0 : i32
    return %c0_i32, %c0_i32_0, %c0_i32_1 : i32, i32, i32
  }
  func.func @transform_2(%arg0: i32) -> (i32, i32) {
    %c0_i32 = arith.constant 0 : i32
    %c0_i32_0 = arith.constant 0 : i32
    %c0_i32_1 = arith.constant 0 : i32
    return %c0_i32, %c0_i32_0 : i32, i32
  }
  func.func @transform_3(%arg0: i32) -> (i32, i32, i32) {
    %c0_i32 = arith.constant 0 : i32
    %c0_i32_0 = arith.constant 0 : i32
    %c0_i32_1 = arith.constant 0 : i32
    %c0_i32_2 = arith.constant 0 : i32
    return %c0_i32, %c0_i32_0, %c0_i32_1 : i32, i32, i32
  }
  func.func @transform_4(%arg0: i32) -> (i32, i32) {
    %c0_i32 = arith.constant 0 : i32
    %c0_i32_0 = arith.constant 0 : i32
    %c0_i32_1 = arith.constant 0 : i32
    return %c0_i32, %c0_i32_0 : i32, i32
  }
  func.func @transform_5(%arg0: i32) -> (i32, i32, i32) {
    %c0_i32 = arith.constant 0 : i32
    %c0_i32_0 = arith.constant 0 : i32
    %c0_i32_1 = arith.constant 0 : i32
    %c0_i32_2 = arith.constant 0 : i32
    return %c0_i32, %c0_i32_0, %c0_i32_1 : i32, i32, i32
  }
  func.func @transform_6(%arg0: i32) -> (i32, i32) {
    %c0_i32 = arith.constant 0 : i32
    %c0_i32_0 = arith.constant 0 : i32
    %c0_i32_1 = arith.constant 0 : i32
    return %c0_i32, %c0_i32_0 : i32, i32
  }
  func.func @transform_7(%arg0: i32) -> (i32, i32) {
    %c0_i32 = arith.constant 0 : i32
    %c0_i32_0 = arith.constant 0 : i32
    %c0_i32_1 = arith.constant 0 : i32
    return %c0_i32, %c0_i32_0 : i32, i32
  }
  func.func @transform_8(%arg0: i32) -> (i32, i32) {
    %c0_i32 = arith.constant 0 : i32
    %c0_i32_0 = arith.constant 0 : i32
    %c0_i32_1 = arith.constant 0 : i32
    return %c0_i32, %c0_i32_0 : i32, i32
  }
  func.func @transform_9(%arg0: i32) -> (i32, i32) {
    %c0_i32 = arith.constant 0 : i32
    %c0_i32_0 = arith.constant 0 : i32
    %c0_i32_1 = arith.constant 0 : i32
    return %c0_i32, %c0_i32_0 : i32, i32
  }
  func.func @transform_10(%arg0: i32) -> (i32, i32) {
    %c0_i32 = arith.constant 0 : i32
    %c0_i32_0 = arith.constant 0 : i32
    %c0_i32_1 = arith.constant 0 : i32
    return %c0_i32, %c0_i32_0 : i32, i32
  }
  func.func @transform_11(%arg0: i32) -> (i32, i32) {
    %c0_i32 = arith.constant 0 : i32
    %c0_i32_0 = arith.constant 0 : i32
    return %arg0, %c0_i32 : i32, i32
  }
}

</mosaic_0001>

<llo_original>
// kernel: net_forward.1
$region0: #{net_forward.1}
  #allocation0 [shape = 'u32[]', space=smem, size = 0x4, offset = 0x4, fixed_abs, tag = 'smem constant byte address 0x4 - core index']
  #allocation1 [shape = 'u32[144,128]{1,0:T(1,128)}', space=vmem, size = 0x12000, scoped, tag = 'internal scratch']
  %s0 = inlined_call_operand.vmem [shape: bf16[16,2,64], index: 0, kind: input, shape index: {}]
  %s1 = inlined_call_operand.vmem [shape: bf16[4,64,112], index: 1, kind: input, shape index: {}]
  %s2 = inlined_call_operand.vmem [shape: f32[1,112], index: 2, kind: input, shape index: {}]
  %s3 = inlined_call_operand.vmem [shape: bf16[3,112,192], index: 3, kind: input, shape index: {}]
  %s4 = inlined_call_operand.vmem [shape: f32[1,192], index: 4, kind: input, shape index: {}]
  %s5 = inlined_call_operand.vmem [shape: bf16[3,192,256], index: 5, kind: input, shape index: {}]
  %s6 = inlined_call_operand.vmem [shape: f32[1,256], index: 6, kind: input, shape index: {}]
  %s7 = inlined_call_operand.vmem [shape: bf16[256,256], index: 7, kind: input, shape index: {}]
  %s8 = inlined_call_operand.vmem [shape: f32[1,256], index: 8, kind: input, shape index: {}]
  %s9 = inlined_call_operand.hbm [shape: bf16[256,128], index: 9, kind: input, shape index: {}]
  %s10 = inlined_call_operand.vmem [shape: f32[1,128], index: 10, kind: input, shape index: {}]
  %s11 = inlined_call_operand.vmem [shape: f32[2,128], index: 11, kind: output, shape index: {}]
  %s12 = sld [smem:[#allocation0]]
  $region58: #{net_forward.1} parent=0
    _
  %s14 = ssub.s32 1, %s12
  %s15 = scalar_select 0, %s14, %s12
  $region1: #{net_forward.1} parent=0
    #allocation2 [shape = 'u8[65536]{0}', space=vmem, size = 0x10000, scoped, tag = 'input window, operand 9, single buffered']
    #allocation3 [shape = 's32[1]{0}', space=sflag, size = 0x4, scoped, tag = 'scoped memory for net_forward.1']
    %16 = vsyncpa [#allocation3], 0
    // Predicated region
    $region2: #{net_forward.1} parent=1 // pred_check
      _
    $region3: #{net_forward.1} parent=1 // pred_check_branch
      %18 = sbr.rel (0) target = $region5
    $region4: #{net_forward.1} parent=1 // pred_region
      _
    $region5: #{net_forward.1} parent=1 // pred_fallthru
      _
    // Predicated region
    $region6: #{net_forward.1} parent=1 // pred_check
      _
    $region7: #{net_forward.1} parent=1 // pred_check_branch
      %20 = sbr.rel (0) target = $region9
    $region8: #{net_forward.1} parent=1 // pred_region
      _
    $region9: #{net_forward.1} parent=1 // pred_fallthru
      _
    // Predicated region
    $region10: #{net_forward.1} parent=1 // pred_check
      _
    $region11: #{net_forward.1} parent=1 // pred_check_branch
      %22 = sbr.rel (0) target = $region13
    $region12: #{net_forward.1} parent=1 // pred_region
      _
    $region13: #{net_forward.1} parent=1 // pred_fallthru
      _
    // Predicated region
    $region14: #{net_forward.1} parent=1 // pred_check
      _
    $region15: #{net_forward.1} parent=1 // pred_check_branch
      %24 = sbr.rel (0) target = $region17
    $region16: #{net_forward.1} parent=1 // pred_region
      _
    $region17: #{net_forward.1} parent=1 // pred_fallthru
      _
    // Predicated region
    $region18: #{net_forward.1} parent=1 // pred_check
      _
    $region19: #{net_forward.1} parent=1 // pred_check_branch
      %26 = sbr.rel (0) target = $region21
    $region20: #{net_forward.1} parent=1 // pred_region
      _
    $region21: #{net_forward.1} parent=1 // pred_fallthru
      _
    // Predicated region
    $region22: #{net_forward.1} parent=1 // pred_check
      _
    $region23: #{net_forward.1} parent=1 // pred_check_branch
      %28 = sbr.rel (0) target = $region25
    $region24: #{net_forward.1} parent=1 // pred_region
      _
    $region25: #{net_forward.1} parent=1 // pred_fallthru
      _
    // Predicated region
    $region26: #{net_forward.1} parent=1 // pred_check
      _
    $region27: #{net_forward.1} parent=1 // pred_check_branch
      %30 = sbr.rel (0) target = $region29
    $region28: #{net_forward.1} parent=1 // pred_region
      _
    $region29: #{net_forward.1} parent=1 // pred_fallthru
      _
    // Predicated region
    $region30: #{net_forward.1} parent=1 // pred_check
      _
    $region31: #{net_forward.1} parent=1 // pred_check_branch
      %32 = sbr.rel (0) target = $region33
    $region32: #{net_forward.1} parent=1 // pred_region
      _
    $region33: #{net_forward.1} parent=1 // pred_fallthru
      _
    // Predicated region
    $region34: #{net_forward.1} parent=1 // pred_check
      _
    $region35: #{net_forward.1} parent=1 // pred_check_branch
      %34 = sbr.rel (0) target = $region37
    $region36: #{net_forward.1} parent=1 // pred_region
      _
    $region37: #{net_forward.1} parent=1 // pred_fallthru
      _
    // Predicated region
    $region38: #{net_forward.1} parent=1 // pred_check
      _
    $region39: #{net_forward.1} parent=1 // pred_check_branch
      %36 = sbr.rel (0) target = $region41
    $region40: #{net_forward.1} parent=1 // pred_region
      %s38 = ssub.s32 2048, 2048
      %39 = vsyncadd [#allocation3], %s38
      %s40 = sshll.u32 [#allocation2], 4
      %s41 = int_to_ptr.vmem [resolvable:$true] %s40
      %46 = dma.hbm_to_vmem [thread:$0]  %s9, 2048, %s41, [#allocation3], 64, 64, 4
    $region41: #{net_forward.1} parent=1 // pred_fallthru
      _
    // Predicated region
    $region42: #{net_forward.1} parent=1 // pred_check
      _
    $region43: #{net_forward.1} parent=1 // pred_check_branch
      %48 = sbr.rel (0) target = $region45
    $region44: #{net_forward.1} parent=1 // pred_region
      _
    $region45: #{net_forward.1} parent=1 // pred_fallthru
      _
    // Predicated region
    $region46: #{net_forward.1} parent=1 // pred_check
      _
    $region47: #{net_forward.1} parent=1 // pred_check_branch
      %50 = sbr.rel (0) target = $region49
    $region48: #{net_forward.1} parent=1 // pred_region
      %51 = dma.done [#allocation3], 2048
    $region49: #{net_forward.1} parent=1 // pred_fallthru
      _
    %v53 = vld [vmem:[%s0] sm:$0x1]
    %s54 = scalar_lea.vmem %s0, 1
    %v55 = vld [vmem:[%s54] sm:$0x1]
    %s56 = scalar_lea.vmem %s0, 2
    %v57 = vld [vmem:[%s56] sm:$0x1]
    %s58 = scalar_lea.vmem %s0, 3
    %v59 = vld [vmem:[%s58] sm:$0x1]
    %s60 = scalar_lea.vmem %s0, 4
    %v61 = vld [vmem:[%s60] sm:$0x1]
    %s62 = scalar_lea.vmem %s0, 5
    %v63 = vld [vmem:[%s62] sm:$0x1]
    %s64 = scalar_lea.vmem %s0, 6
    %v65 = vld [vmem:[%s64] sm:$0x1]
    %s66 = scalar_lea.vmem %s0, 7
    %v67 = vld [vmem:[%s66] sm:$0x1]
    %s68 = scalar_lea.vmem %s0, 8
    %v69 = vld [vmem:[%s68] sm:$0x1]
    %s70 = scalar_lea.vmem %s0, 9
    %v71 = vld [vmem:[%s70] sm:$0x1]
    %s72 = scalar_lea.vmem %s0, 10
    %v73 = vld [vmem:[%s72] sm:$0x1]
    %s74 = scalar_lea.vmem %s0, 11
    %v75 = vld [vmem:[%s74] sm:$0x1]
    %s76 = scalar_lea.vmem %s0, 12
    %v77 = vld [vmem:[%s76] sm:$0x1]
    %s78 = scalar_lea.vmem %s0, 13
    %v79 = vld [vmem:[%s78] sm:$0x1]
    %s80 = scalar_lea.vmem %s0, 14
    %v81 = vld [vmem:[%s80] sm:$0x1]
    %s82 = scalar_lea.vmem %s0, 15
    %v83 = vld [vmem:[%s82] sm:$0x1]
    %v84 = vld [vmem:[%s1] sm:$0xf]
    %v85 = vld [vmem:[%s1 + $0x4] sm:$0xf]
    %v86 = vld [vmem:[%s1 + $0x8] sm:$0xf]
    %v87 = vld [vmem:[%s1 + $0xc] sm:$0xf]
    %v88 = vld [vmem:[%s1 + $0x10] sm:$0xf]
    %v89 = vld [vmem:[%s1 + $0x14] sm:$0xf]
    %v90 = vld [vmem:[%s1 + $0x18] sm:$0xf]
    %v91 = vld [vmem:[%s1 + $0x1c] sm:$0xf]
    %s92 = scalar_lea.vmem %s1, 32
    %v93 = vld [vmem:[%s92] sm:$0xf]
    %v94 = vld [vmem:[%s92 + $0x4] sm:$0xf]
    %v95 = vld [vmem:[%s92 + $0x8] sm:$0xf]
    %v96 = vld [vmem:[%s92 + $0xc] sm:$0xf]
    %v97 = vld [vmem:[%s92 + $0x10] sm:$0xf]
    %v98 = vld [vmem:[%s92 + $0x14] sm:$0xf]
    %v99 = vld [vmem:[%s92 + $0x18] sm:$0xf]
    %v100 = vld [vmem:[%s92 + $0x1c] sm:$0xf]
    %v109 = vunpack.c.l.b16 %v93
    %v110 = vunpack.c.l.b16 %v94
    %v111 = vunpack.c.l.b16 %v95
    %v112 = vunpack.c.l.b16 %v96
    %v113 = vunpack.c.l.b16 %v97
    %v114 = vunpack.c.l.b16 %v98
    %v115 = vunpack.c.l.b16 %v99
    %v116 = vunpack.c.l.b16 %v100
    %v117 = vpack.c.b16 %v110, %v109
    %v118 = vpack.c.b16 %v112, %v111
    %v119 = vpack.c.b16 %v114, %v113
    %v120 = vpack.c.b16 %v116, %v115
    %vm125 = vcmask 523264
    %v127 = vsel %vm125, %v55, 0
    %129 = vmatprep.subr.bf16.mxu0 0
    %130 = vmatpush1.bf16.msra.mxu0 %v117
    %131 = vmatprep.subr.bf16.mxu0 0
    %132 = vmatpush1.bf16.msra.mxu0 %v118
    %133 = vmatprep.subr.bf16.mxu0 0
    %134 = vmatpush1.bf16.msra.mxu0 %v119
    %135 = vmatprep.subr.bf16.mxu0 0
    %136 = vmatpush1.bf16.msra.mxu0 %v120
    %137 = vmatprep.subr.bf16.mxu0 0
    %138 = vmatpush1.bf16.msra.mxu0 0
    %139 = vmatprep.subr.bf16.mxu0 0
    %140 = vmatpush1.bf16.msra.mxu0 0
    %141 = vmatprep.subr.bf16.mxu0 0
    %142 = vmatpush1.bf16.msra.mxu0 0
    %143 = vmatprep.subr.bf16.mxu0 0
    %144 = vmatpush1.bf16.msra.mxu0 0
    %145 = vmatprep.subr.bf16.mxu0 0
    %146 = vmatpush1.bf16.msra.mxu0 0
    %147 = vmatprep.subr.bf16.mxu0 0
    %148 = vmatpush1.bf16.msra.mxu0 0
    %149 = vmatprep.subr.bf16.mxu0 0
    %150 = vmatpush1.bf16.msra.mxu0 0
    %151 = vmatprep.subr.bf16.mxu0 0
    %152 = vmatpush1.bf16.msra.mxu0 0
    %153 = vmatprep.subr.bf16.mxu0 0
    %154 = vmatpush1.bf16.msra.mxu0 0
    %155 = vmatprep.subr.bf16.mxu0 0
    %156 = vmatpush1.bf16.msra.mxu0 0
    %157 = vmatprep.subr.bf16.mxu0 0
    %158 = vmatpush1.bf16.msra.mxu0 0
    %159 = vmatprep.subr.bf16.mxu0 0
    %160 = vmatpush1.bf16.msra.mxu0 0
    %161 = vmatprep.mubr.bf16.mxu0 0
    %162 = vmatmul.mubr.bf16.gmra.mrb[0].mxu0 %v127
    %v163 = vpop.f32.mrb[0].mxu0
    %v164 = vadd.f32 0.0, %v163
    %v165 = vpop.f32.mrb[0].mxu0
    %v166 = vpop.f32.mrb[0].mxu0
    %v167 = vpop.f32.mrb[0].mxu0
    %168 = vdwg.mxu0
    %v177 = vunpack.c.l.b16 %v84
    %v178 = vunpack.c.l.b16 %v85
    %v179 = vunpack.c.l.b16 %v86
    %v180 = vunpack.c.l.b16 %v87
    %v181 = vunpack.c.l.b16 %v88
    %v182 = vunpack.c.l.b16 %v89
    %v183 = vunpack.c.l.b16 %v90
    %v184 = vunpack.c.l.b16 %v91
    %v185 = vpack.c.b16 %v178, %v177
    %v186 = vpack.c.b16 %v180, %v179
    %v187 = vpack.c.b16 %v182, %v181
    %v188 = vpack.c.b16 %v184, %v183
    %v194 = vsel %vm125, %v53, 0
    %196 = vmatprep.subr.bf16.mxu0 0
    %197 = vmatpush1.bf16.msra.mxu0 %v185
    %198 = vmatprep.subr.bf16.mxu0 0
    %199 = vmatpush1.bf16.msra.mxu0 %v186
    %200 = vmatprep.subr.bf16.mxu0 0
    %201 = vmatpush1.bf16.msra.mxu0 %v187
    %202 = vmatprep.subr.bf16.mxu0 0
    %203 = vmatpush1.bf16.msra.mxu0 %v188
    %204 = vmatprep.subr.bf16.mxu0 0
    %205 = vmatpush1.bf16.msra.mxu0 0
    %206 = vmatprep.subr.bf16.mxu0 0
    %207 = vmatpush1.bf16.msra.mxu0 0
    %208 = vmatprep.subr.bf16.mxu0 0
    %209 = vmatpush1.bf16.msra.mxu0 0
    %210 = vmatprep.subr.bf16.mxu0 0
    %211 = vmatpush1.bf16.msra.mxu0 0
    %212 = vmatprep.subr.bf16.mxu0 0
    %213 = vmatpush1.bf16.msra.mxu0 0
    %214 = vmatprep.subr.bf16.mxu0 0
    %215 = vmatpush1.bf16.msra.mxu0 0
    %216 = vmatprep.subr.bf16.mxu0 0
    %217 = vmatpush1.bf16.msra.mxu0 0
    %218 = vmatprep.subr.bf16.mxu0 0
    %219 = vmatpush1.bf16.msra.mxu0 0
    %220 = vmatprep.subr.bf16.mxu0 0
    %221 = vmatpush1.bf16.msra.mxu0 0
    %222 = vmatprep.subr.bf16.mxu0 0
    %223 = vmatpush1.bf16.msra.mxu0 0
    %224 = vmatprep.subr.bf16.mxu0 0
    %225 = vmatpush1.bf16.msra.mxu0 0
    %226 = vmatprep.subr.bf16.mxu0 0
    %227 = vmatpush1.bf16.msra.mxu0 0
    %228 = vmatprep.mubr.bf16.mxu0 0
    %229 = vmatmul.mubr.bf16.gmra.mrb[0].mxu0 %v194
    %v230 = vpop.f32.mrb[0].mxu0
    %v231 = vadd.f32 %v164, %v230
    %v232 = vpop.f32.mrb[0].mxu0
    %v233 = vpop.f32.mrb[0].mxu0
    %v234 = vpop.f32.mrb[0].mxu0
    %235 = vdwg.mxu0
    %s236 = scalar_lea.vmem %s1, 64
    %v237 = vld [vmem:[%s236] sm:$0xf]
    %v238 = vld [vmem:[%s236 + $0x4] sm:$0xf]
    %v239 = vld [vmem:[%s236 + $0x8] sm:$0xf]
    %v240 = vld [vmem:[%s236 + $0xc] sm:$0xf]
    %v241 = vld [vmem:[%s236 + $0x10] sm:$0xf]
    %v242 = vld [vmem:[%s236 + $0x14] sm:$0xf]
    %v243 = vld [vmem:[%s236 + $0x18] sm:$0xf]
    %v244 = vld [vmem:[%s236 + $0x1c] sm:$0xf]
    %v253 = vunpack.c.l.b16 %v237
    %v254 = vunpack.c.l.b16 %v238
    %v255 = vunpack.c.l.b16 %v239
    %v256 = vunpack.c.l.b16 %v240
    %v257 = vunpack.c.l.b16 %v241
    %v258 = vunpack.c.l.b16 %v242
    %v259 = vunpack.c.l.b16 %v243
    %v260 = vunpack.c.l.b16 %v244
    %v261 = vpack.c.b16 %v254, %v253
    %v262 = vpack.c.b16 %v256, %v255
    %v263 = vpack.c.b16 %v258, %v257
    %v264 = vpack.c.b16 %v260, %v259
    %v270 = vsel %vm125, %v57, 0
    %272 = vmatprep.subr.bf16.mxu0 0
    %273 = vmatpush1.bf16.msra.mxu0 %v261
    %274 = vmatprep.subr.bf16.mxu0 0
    %275 = vmatpush1.bf16.msra.mxu0 %v262
    %276 = vmatprep.subr.bf16.mxu0 0
    %277 = vmatpush1.bf16.msra.mxu0 %v263
    %278 = vmatprep.subr.bf16.mxu0 0
    %279 = vmatpush1.bf16.msra.mxu0 %v264
    %280 = vmatprep.subr.bf16.mxu0 0
    %281 = vmatpush1.bf16.msra.mxu0 0
    %282 = vmatprep.subr.bf16.mxu0 0
    %283 = vmatpush1.bf16.msra.mxu0 0
    %284 = vmatprep.subr.bf16.mxu0 0
    %285 = vmatpush1.bf16.msra.mxu0 0
    %286 = vmatprep.subr.bf16.mxu0 0
    %287 = vmatpush1.bf16.msra.mxu0 0
    %288 = vmatprep.subr.bf16.mxu0 0
    %289 = vmatpush1.bf16.msra.mxu0 0
    %290 = vmatprep.subr.bf16.mxu0 0
    %291 = vmatpush1.bf16.msra.mxu0 0
    %292 = vmatprep.subr.bf16.mxu0 0
    %293 = vmatpush1.bf16.msra.mxu0 0
    %294 = vmatprep.subr.bf16.mxu0 0
    %295 = vmatpush1.bf16.msra.mxu0 0
    %296 = vmatprep.subr.bf16.mxu0 0
    %297 = vmatpush1.bf16.msra.mxu0 0
    %298 = vmatprep.subr.bf16.mxu0 0
    %299 = vmatpush1.bf16.msra.mxu0 0
    %300 = vmatprep.subr.bf16.mxu0 0
    %301 = vmatpush1.bf16.msra.mxu0 0
    %302 = vmatprep.subr.bf16.mxu0 0
    %303 = vmatpush1.bf16.msra.mxu0 0
    %304 = vmatprep.mubr.bf16.mxu0 0
    %305 = vmatmul.mubr.bf16.gmra.mrb[0].mxu0 %v270
    %v306 = vpop.f32.mrb[0].mxu0
    %v307 = vadd.f32 0.0, %v306
    %v308 = vpop.f32.mrb[0].mxu0
    %v309 = vpop.f32.mrb[0].mxu0
    %v310 = vpop.f32.mrb[0].mxu0
    %311 = vdwg.mxu0
    %v312 = vadd.f32 %v231, %v307
    %s313 = scalar_lea.vmem %s1, 96
    %v314 = vld [vmem:[%s313] sm:$0xf]
    %v315 = vld [vmem:[%s313 + $0x4] sm:$0xf]
    %v316 = vld [vmem:[%s313 + $0x8] sm:$0xf]
    %v317 = vld [vmem:[%s313 + $0xc] sm:$0xf]
    %v318 = vld [vmem:[%s313 + $0x10] sm:$0xf]
    %v319 = vld [vmem:[%s313 + $0x14] sm:$0xf]
    %v320 = vld [vmem:[%s313 + $0x18] sm:$0xf]
    %v321 = vld [vmem:[%s313 + $0x1c] sm:$0xf]
    %v330 = vunpack.c.l.b16 %v314
    %v331 = vunpack.c.l.b16 %v315
    %v332 = vunpack.c.l.b16 %v316
    %v333 = vunpack.c.l.b16 %v317
    %v334 = vunpack.c.l.b16 %v318
    %v335 = vunpack.c.l.b16 %v319
    %v336 = vunpack.c.l.b16 %v320
    %v337 = vunpack.c.l.b16 %v321
    %v338 = vpack.c.b16 %v331, %v330
    %v339 = vpack.c.b16 %v333, %v332
    %v340 = vpack.c.b16 %v335, %v334
    %v341 = vpack.c.b16 %v337, %v336
    %v347 = vsel %vm125, %v59, 0
    %349 = vmatprep.subr.bf16.mxu0 0
    %350 = vmatpush1.bf16.msra.mxu0 %v338
    %351 = vmatprep.subr.bf16.mxu0 0
    %352 = vmatpush1.bf16.msra.mxu0 %v339
    %353 = vmatprep.subr.bf16.mxu0 0
    %354 = vmatpush1.bf16.msra.mxu0 %v340
    %355 = vmatprep.subr.bf16.mxu0 0
    %356 = vmatpush1.bf16.msra.mxu0 %v341
    %357 = vmatprep.subr.bf16.mxu0 0
    %358 = vmatpush1.bf16.msra.mxu0 0
    %359 = vmatprep.subr.bf16.mxu0 0
    %360 = vmatpush1.bf16.msra.mxu0 0
    %361 = vmatprep.subr.bf16.mxu0 0
    %362 = vmatpush1.bf16.msra.mxu0 0
    %363 = vmatprep.subr.bf16.mxu0 0
    %364 = vmatpush1.bf16.msra.mxu0 0
    %365 = vmatprep.subr.bf16.mxu0 0
    %366 = vmatpush1.bf16.msra.mxu0 0
    %367 = vmatprep.subr.bf16.mxu0 0
    %368 = vmatpush1.bf16.msra.mxu0 0
    %369 = vmatprep.subr.bf16.mxu0 0
    %370 = vmatpush1.bf16.msra.mxu0 0
    %371 = vmatprep.subr.bf16.mxu0 0
    %372 = vmatpush1.bf16.msra.mxu0 0
    %373 = vmatprep.subr.bf16.mxu0 0
    %374 = vmatpush1.bf16.msra.mxu0 0
    %375 = vmatprep.subr.bf16.mxu0 0
    %376 = vmatpush1.bf16.msra.mxu0 0
    %377 = vmatprep.subr.bf16.mxu0 0
    %378 = vmatpush1.bf16.msra.mxu0 0
    %379 = vmatprep.subr.bf16.mxu0 0
    %380 = vmatpush1.bf16.msra.mxu0 0
    %381 = vmatprep.mubr.bf16.mxu0 0
    %382 = vmatmul.mubr.bf16.gmra.mrb[0].mxu0 %v347
    %v383 = vpop.f32.mrb[0].mxu0
    %v384 = vadd.f32 0.0, %v383
    %v385 = vpop.f32.mrb[0].mxu0
    %v386 = vpop.f32.mrb[0].mxu0
    %v387 = vpop.f32.mrb[0].mxu0
    %388 = vdwg.mxu0
    %v389 = vadd.f32 %v312, %v384
    %v390 = vld [vmem:[%s2] sm:$0x1]
    %v392 = vlaneseq
    %v393 = vshrl.u32 %v392, 7
    %v394 = vsub.s32 0, %v393
    %v395 = vrot.slane %v390, %v394
    %v397 = vadd.f32 %v389, %v395
    %v398 = vmax.f32 %v397, 0.0
    %v399 = vpack.c.bf16 %v398, %v398
    %400 = vmatprep.subr.bf16.mxu0 0
    %401 = vmatpush1.bf16.msra.mxu0 %v117
    %402 = vmatprep.subr.bf16.mxu0 0
    %403 = vmatpush1.bf16.msra.mxu0 %v118
    %404 = vmatprep.subr.bf16.mxu0 0
    %405 = vmatpush1.bf16.msra.mxu0 %v119
    %406 = vmatprep.subr.bf16.mxu0 0
    %407 = vmatpush1.bf16.msra.mxu0 %v120
    %408 = vmatprep.subr.bf16.mxu0 0
    %409 = vmatpush1.bf16.msra.mxu0 0
    %410 = vmatprep.subr.bf16.mxu0 0
    %411 = vmatpush1.bf16.msra.mxu0 0
    %412 = vmatprep.subr.bf16.mxu0 0
    %413 = vmatpush1.bf16.msra.mxu0 0
    %414 = vmatprep.subr.bf16.mxu0 0
    %415 = vmatpush1.bf16.msra.mxu0 0
    %416 = vmatprep.subr.bf16.mxu0 0
    %417 = vmatpush1.bf16.msra.mxu0 0
    %418 = vmatprep.subr.bf16.mxu0 0
    %419 = vmatpush1.bf16.msra.mxu0 0
    %420 = vmatprep.subr.bf16.mxu0 0
    %421 = vmatpush1.bf16.msra.mxu0 0
    %422 = vmatprep.subr.bf16.mxu0 0
    %423 = vmatpush1.bf16.msra.mxu0 0
    %424 = vmatprep.subr.bf16.mxu0 0
    %425 = vmatpush1.bf16.msra.mxu0 0
    %426 = vmatprep.subr.bf16.mxu0 0
    %427 = vmatpush1.bf16.msra.mxu0 0
    %428 = vmatprep.subr.bf16.mxu0 0
    %429 = vmatpush1.bf16.msra.mxu0 0
    %430 = vmatprep.subr.bf16.mxu0 0
    %431 = vmatpush1.bf16.msra.mxu0 0
    %432 = vmatprep.mubr.bf16.mxu0 0
    %433 = vmatmul.mubr.bf16.gmra.mrb[0].mxu0 %v347
    %v434 = vpop.f32.mrb[0].mxu0
    %v435 = vadd.f32 0.0, %v434
    %v436 = vpop.f32.mrb[0].mxu0
    %v437 = vpop.f32.mrb[0].mxu0
    %v438 = vpop.f32.mrb[0].mxu0
    %439 = vdwg.mxu0
    %440 = vmatprep.subr.bf16.mxu0 0
    %441 = vmatpush1.bf16.msra.mxu0 %v185
    %442 = vmatprep.subr.bf16.mxu0 0
    %443 = vmatpush1.bf16.msra.mxu0 %v186
    %444 = vmatprep.subr.bf16.mxu0 0
    %445 = vmatpush1.bf16.msra.mxu0 %v187
    %446 = vmatprep.subr.bf16.mxu0 0
    %447 = vmatpush1.bf16.msra.mxu0 %v188
    %448 = vmatprep.subr.bf16.mxu0 0
    %449 = vmatpush1.bf16.msra.mxu0 0
    %450 = vmatprep.subr.bf16.mxu0 0
    %451 = vmatpush1.bf16.msra.mxu0 0
    %452 = vmatprep.subr.bf16.mxu0 0
    %453 = vmatpush1.bf16.msra.mxu0 0
    %454 = vmatprep.subr.bf16.mxu0 0
    %455 = vmatpush1.bf16.msra.mxu0 0
    %456 = vmatprep.subr.bf16.mxu0 0
    %457 = vmatpush1.bf16.msra.mxu0 0
    %458 = vmatprep.subr.bf16.mxu0 0
    %459 = vmatpush1.bf16.msra.mxu0 0
    %460 = vmatprep.subr.bf16.mxu0 0
    %461 = vmatpush1.bf16.msra.mxu0 0
    %462 = vmatprep.subr.bf16.mxu0 0
    %463 = vmatpush1.bf16.msra.mxu0 0
    %464 = vmatprep.subr.bf16.mxu0 0
    %465 = vmatpush1.bf16.msra.mxu0 0
    %466 = vmatprep.subr.bf16.mxu0 0
    %467 = vmatpush1.bf16.msra.mxu0 0
    %468 = vmatprep.subr.bf16.mxu0 0
    %469 = vmatpush1.bf16.msra.mxu0 0
    %470 = vmatprep.subr.bf16.mxu0 0
    %471 = vmatpush1.bf16.msra.mxu0 0
    %472 = vmatprep.mubr.bf16.mxu0 0
    %473 = vmatmul.mubr.bf16.gmra.mrb[0].mxu0 %v270
    %v474 = vpop.f32.mrb[0].mxu0
    %v475 = vadd.f32 %v435, %v474
    %v476 = vpop.f32.mrb[0].mxu0
    %v477 = vpop.f32.mrb[0].mxu0
    %v478 = vpop.f32.mrb[0].mxu0
    %479 = vdwg.mxu0
    %v481 = vsel %vm125, %v61, 0
    %483 = vmatprep.subr.bf16.mxu0 0
    %484 = vmatpush1.bf16.msra.mxu0 %v261
    %485 = vmatprep.subr.bf16.mxu0 0
    %486 = vmatpush1.bf16.msra.mxu0 %v262
    %487 = vmatprep.subr.bf16.mxu0 0
    %488 = vmatpush1.bf16.msra.mxu0 %v263
    %489 = vmatprep.subr.bf16.mxu0 0
    %490 = vmatpush1.bf16.msra.mxu0 %v264
    %491 = vmatprep.subr.bf16.mxu0 0
    %492 = vmatpush1.bf16.msra.mxu0 0
    %493 = vmatprep.subr.bf16.mxu0 0
    %494 = vmatpush1.bf16.msra.mxu0 0
    %495 = vmatprep.subr.bf16.mxu0 0
    %496 = vmatpush1.bf16.msra.mxu0 0
    %497 = vmatprep.subr.bf16.mxu0 0
    %498 = vmatpush1.bf16.msra.mxu0 0
    %499 = vmatprep.subr.bf16.mxu0 0
    %500 = vmatpush1.bf16.msra.mxu0 0
    %501 = vmatprep.subr.bf16.mxu0 0
    %502 = vmatpush1.bf16.msra.mxu0 0
    %503 = vmatprep.subr.bf16.mxu0 0
    %504 = vmatpush1.bf16.msra.mxu0 0
    %505 = vmatprep.subr.bf16.mxu0 0
    %506 = vmatpush1.bf16.msra.mxu0 0
    %507 = vmatprep.subr.bf16.mxu0 0
    %508 = vmatpush1.bf16.msra.mxu0 0
    %509 = vmatprep.subr.bf16.mxu0 0
    %510 = vmatpush1.bf16.msra.mxu0 0
    %511 = vmatprep.subr.bf16.mxu0 0
    %512 = vmatpush1.bf16.msra.mxu0 0
    %513 = vmatprep.subr.bf16.mxu0 0
    %514 = vmatpush1.bf16.msra.mxu0 0
    %515 = vmatprep.mubr.bf16.mxu0 0
    %516 = vmatmul.mubr.bf16.gmra.mrb[0].mxu0 %v481
    %v517 = vpop.f32.mrb[0].mxu0
    %v518 = vadd.f32 0.0, %v517
    %v519 = vpop.f32.mrb[0].mxu0
    %v520 = vpop.f32.mrb[0].mxu0
    %v521 = vpop.f32.mrb[0].mxu0
    %522 = vdwg.mxu0
    %v523 = vadd.f32 %v475, %v518
    %v525 = vsel %vm125, %v63, 0
    %527 = vmatprep.subr.bf16.mxu0 0
    %528 = vmatpush1.bf16.msra.mxu0 %v338
    %529 = vmatprep.subr.bf16.mxu0 0
    %530 = vmatpush1.bf16.msra.mxu0 %v339
    %531 = vmatprep.subr.bf16.mxu0 0
    %532 = vmatpush1.bf16.msra.mxu0 %v340
    %533 = vmatprep.subr.bf16.mxu0 0
    %534 = vmatpush1.bf16.msra.mxu0 %v341
    %535 = vmatprep.subr.bf16.mxu0 0
    %536 = vmatpush1.bf16.msra.mxu0 0
    %537 = vmatprep.subr.bf16.mxu0 0
    %538 = vmatpush1.bf16.msra.mxu0 0
    %539 = vmatprep.subr.bf16.mxu0 0
    %540 = vmatpush1.bf16.msra.mxu0 0
    %541 = vmatprep.subr.bf16.mxu0 0
    %542 = vmatpush1.bf16.msra.mxu0 0
    %543 = vmatprep.subr.bf16.mxu0 0
    %544 = vmatpush1.bf16.msra.mxu0 0
    %545 = vmatprep.subr.bf16.mxu0 0
    %546 = vmatpush1.bf16.msra.mxu0 0
    %547 = vmatprep.subr.bf16.mxu0 0
    %548 = vmatpush1.bf16.msra.mxu0 0
    %549 = vmatprep.subr.bf16.mxu0 0
    %550 = vmatpush1.bf16.msra.mxu0 0
    %551 = vmatprep.subr.bf16.mxu0 0
    %552 = vmatpush1.bf16.msra.mxu0 0
    %553 = vmatprep.subr.bf16.mxu0 0
    %554 = vmatpush1.bf16.msra.mxu0 0
    %555 = vmatprep.subr.bf16.mxu0 0
    %556 = vmatpush1.bf16.msra.mxu0 0
    %557 = vmatprep.subr.bf16.mxu0 0
    %558 = vmatpush1.bf16.msra.mxu0 0
    %559 = vmatprep.mubr.bf16.mxu0 0
    %560 = vmatmul.mubr.bf16.gmra.mrb[0].mxu0 %v525
    %v561 = vpop.f32.mrb[0].mxu0
    %v562 = vadd.f32 0.0, %v561
    %v563 = vpop.f32.mrb[0].mxu0
    %v564 = vpop.f32.mrb[0].mxu0
    %v565 = vpop.f32.mrb[0].mxu0
    %566 = vdwg.mxu0
    %v567 = vadd.f32 %v523, %v562
    %v568 = vadd.f32 %v567, %v395
    %v569 = vmax.f32 %v568, 0.0
    %v570 = vpack.c.bf16 %v569, %v569
    %571 = vmatprep.subr.bf16.mxu0 0
    %572 = vmatpush1.bf16.msra.mxu0 %v117
    %573 = vmatprep.subr.bf16.mxu0 0
    %574 = vmatpush1.bf16.msra.mxu0 %v118
    %575 = vmatprep.subr.bf16.mxu0 0
    %576 = vmatpush1.bf16.msra.mxu0 %v119
    %577 = vmatprep.subr.bf16.mxu0 0
    %578 = vmatpush1.bf16.msra.mxu0 %v120
    %579 = vmatprep.subr.bf16.mxu0 0
    %580 = vmatpush1.bf16.msra.mxu0 0
    %581 = vmatprep.subr.bf16.mxu0 0
    %582 = vmatpush1.bf16.msra.mxu0 0
    %583 = vmatprep.subr.bf16.mxu0 0
    %584 = vmatpush1.bf16.msra.mxu0 0
    %585 = vmatprep.subr.bf16.mxu0 0
    %586 = vmatpush1.bf16.msra.mxu0 0
    %587 = vmatprep.subr.bf16.mxu0 0
    %588 = vmatpush1.bf16.msra.mxu0 0
    %589 = vmatprep.subr.bf16.mxu0 0
    %590 = vmatpush1.bf16.msra.mxu0 0
    %591 = vmatprep.subr.bf16.mxu0 0
    %592 = vmatpush1.bf16.msra.mxu0 0
    %593 = vmatprep.subr.bf16.mxu0 0
    %594 = vmatpush1.bf16.msra.mxu0 0
    %595 = vmatprep.subr.bf16.mxu0 0
    %596 = vmatpush1.bf16.msra.mxu0 0
    %597 = vmatprep.subr.bf16.mxu0 0
    %598 = vmatpush1.bf16.msra.mxu0 0
    %599 = vmatprep.subr.bf16.mxu0 0
    %600 = vmatpush1.bf16.msra.mxu0 0
    %601 = vmatprep.subr.bf16.mxu0 0
    %602 = vmatpush1.bf16.msra.mxu0 0
    %603 = vmatprep.mubr.bf16.mxu0 0
    %604 = vmatmul.mubr.bf16.gmra.mrb[0].mxu0 %v525
    %v605 = vpop.f32.mrb[0].mxu0
    %v606 = vadd.f32 0.0, %v605
    %v607 = vpop.f32.mrb[0].mxu0
    %v608 = vpop.f32.mrb[0].mxu0
    %v609 = vpop.f32.mrb[0].mxu0
    %610 = vdwg.mxu0
    %611 = vmatprep.subr.bf16.mxu0 0
    %612 = vmatpush1.bf16.msra.mxu0 %v185
    %613 = vmatprep.subr.bf16.mxu0 0
    %614 = vmatpush1.bf16.msra.mxu0 %v186
    %615 = vmatprep.subr.bf16.mxu0 0
    %616 = vmatpush1.bf16.msra.mxu0 %v187
    %617 = vmatprep.subr.bf16.mxu0 0
    %618 = vmatpush1.bf16.msra.mxu0 %v188
    %619 = vmatprep.subr.bf16.mxu0 0
    %620 = vmatpush1.bf16.msra.mxu0 0
    %621 = vmatprep.subr.bf16.mxu0 0
    %622 = vmatpush1.bf16.msra.mxu0 0
    %623 = vmatprep.subr.bf16.mxu0 0
    %624 = vmatpush1.bf16.msra.mxu0 0
    %625 = vmatprep.subr.bf16.mxu0 0
    %626 = vmatpush1.bf16.msra.mxu0 0
    %627 = vmatprep.subr.bf16.mxu0 0
    %628 = vmatpush1.bf16.msra.mxu0 0
    %629 = vmatprep.subr.bf16.mxu0 0
    %630 = vmatpush1.bf16.msra.mxu0 0
    %631 = vmatprep.subr.bf16.mxu0 0
    %632 = vmatpush1.bf16.msra.mxu0 0
    %633 = vmatprep.subr.bf16.mxu0 0
    %634 = vmatpush1.bf16.msra.mxu0 0
    %635 = vmatprep.subr.bf16.mxu0 0
    %636 = vmatpush1.bf16.msra.mxu0 0
    %637 = vmatprep.subr.bf16.mxu0 0
    %638 = vmatpush1.bf16.msra.mxu0 0
    %639 = vmatprep.subr.bf16.mxu0 0
    %640 = vmatpush1.bf16.msra.mxu0 0
    %641 = vmatprep.subr.bf16.mxu0 0
    %642 = vmatpush1.bf16.msra.mxu0 0
    %643 = vmatprep.mubr.bf16.mxu0 0
    %644 = vmatmul.mubr.bf16.gmra.mrb[0].mxu0 %v481
    %v645 = vpop.f32.mrb[0].mxu0
    %v646 = vadd.f32 %v606, %v645
    %v647 = vpop.f32.mrb[0].mxu0
    %v648 = vpop.f32.mrb[0].mxu0
    %v649 = vpop.f32.mrb[0].mxu0
    %650 = vdwg.mxu0
    %v652 = vsel %vm125, %v65, 0
    %654 = vmatprep.subr.bf16.mxu0 0
    %655 = vmatpush1.bf16.msra.mxu0 %v261
    %656 = vmatprep.subr.bf16.mxu0 0
    %657 = vmatpush1.bf16.msra.mxu0 %v262
    %658 = vmatprep.subr.bf16.mxu0 0
    %659 = vmatpush1.bf16.msra.mxu0 %v263
    %660 = vmatprep.subr.bf16.mxu0 0
    %661 = vmatpush1.bf16.msra.mxu0 %v264
    %662 = vmatprep.subr.bf16.mxu0 0
    %663 = vmatpush1.bf16.msra.mxu0 0
    %664 = vmatprep.subr.bf16.mxu0 0
    %665 = vmatpush1.bf16.msra.mxu0 0
    %666 = vmatprep.subr.bf16.mxu0 0
    %667 = vmatpush1.bf16.msra.mxu0 0
    %668 = vmatprep.subr.bf16.mxu0 0
    %669 = vmatpush1.bf16.msra.mxu0 0
    %670 = vmatprep.subr.bf16.mxu0 0
    %671 = vmatpush1.bf16.msra.mxu0 0
    %672 = vmatprep.subr.bf16.mxu0 0
    %673 = vmatpush1.bf16.msra.mxu0 0
    %674 = vmatprep.subr.bf16.mxu0 0
    %675 = vmatpush1.bf16.msra.mxu0 0
    %676 = vmatprep.subr.bf16.mxu0 0
    %677 = vmatpush1.bf16.msra.mxu0 0
    %678 = vmatprep.subr.bf16.mxu0 0
    %679 = vmatpush1.bf16.msra.mxu0 0
    %680 = vmatprep.subr.bf16.mxu0 0
    %681 = vmatpush1.bf16.msra.mxu0 0
    %682 = vmatprep.subr.bf16.mxu0 0
    %683 = vmatpush1.bf16.msra.mxu0 0
    %684 = vmatprep.subr.bf16.mxu0 0
    %685 = vmatpush1.bf16.msra.mxu0 0
    %686 = vmatprep.mubr.bf16.mxu0 0
    %687 = vmatmul.mubr.bf16.gmra.mrb[0].mxu0 %v652
    %v688 = vpop.f32.mrb[0].mxu0
    %v689 = vadd.f32 0.0, %v688
    %v690 = vpop.f32.mrb[0].mxu0
    %v691 = vpop.f32.mrb[0].mxu0
    %v692 = vpop.f32.mrb[0].mxu0
    %693 = vdwg.mxu0
    %v694 = vadd.f32 %v646, %v689
    %v696 = vsel %vm125, %v67, 0
    %698 = vmatprep.subr.bf16.mxu0 0
    %699 = vmatpush1.bf16.msra.mxu0 %v338
    %700 = vmatprep.subr.bf16.mxu0 0
    %701 = vmatpush1.bf16.msra.mxu0 %v339
    %702 = vmatprep.subr.bf16.mxu0 0
    %703 = vmatpush1.bf16.msra.mxu0 %v340
    %704 = vmatprep.subr.bf16.mxu0 0
    %705 = vmatpush1.bf16.msra.mxu0 %v341
    %706 = vmatprep.subr.bf16.mxu0 0
    %707 = vmatpush1.bf16.msra.mxu0 0
    %708 = vmatprep.subr.bf16.mxu0 0
    %709 = vmatpush1.bf16.msra.mxu0 0
    %710 = vmatprep.subr.bf16.mxu0 0
    %711 = vmatpush1.bf16.msra.mxu0 0
    %712 = vmatprep.subr.bf16.mxu0 0
    %713 = vmatpush1.bf16.msra.mxu0 0
    %714 = vmatprep.subr.bf16.mxu0 0
    %715 = vmatpush1.bf16.msra.mxu0 0
    %716 = vmatprep.subr.bf16.mxu0 0
    %717 = vmatpush1.bf16.msra.mxu0 0
    %718 = vmatprep.subr.bf16.mxu0 0
    %719 = vmatpush1.bf16.msra.mxu0 0
    %720 = vmatprep.subr.bf16.mxu0 0
    %721 = vmatpush1.bf16.msra.mxu0 0
    %722 = vmatprep.subr.bf16.mxu0 0
    %723 = vmatpush1.bf16.msra.mxu0 0
    %724 = vmatprep.subr.bf16.mxu0 0
    %725 = vmatpush1.bf16.msra.mxu0 0
    %726 = vmatprep.subr.bf16.mxu0 0
    %727 = vmatpush1.bf16.msra.mxu0 0
    %728 = vmatprep.subr.bf16.mxu0 0
    %729 = vmatpush1.bf16.msra.mxu0 0
    %730 = vmatprep.mubr.bf16.mxu0 0
    %731 = vmatmul.mubr.bf16.gmra.mrb[0].mxu0 %v696
    %v732 = vpop.f32.mrb[0].mxu0
    %v733 = vadd.f32 0.0, %v732
    %v734 = vpop.f32.mrb[0].mxu0
    %v735 = vpop.f32.mrb[0].mxu0
    %v736 = vpop.f32.mrb[0].mxu0
    %737 = vdwg.mxu0
    %v738 = vadd.f32 %v694, %v733
    %v739 = vadd.f32 %v738, %v395
    %v740 = vmax.f32 %v739, 0.0
    %v741 = vpack.c.bf16 %v740, %v740
    %742 = vmatprep.subr.bf16.mxu0 0
    %743 = vmatpush1.bf16.msra.mxu0 %v117
    %744 = vmatprep.subr.bf16.mxu0 0
    %745 = vmatpush1.bf16.msra.mxu0 %v118
    %746 = vmatprep.subr.bf16.mxu0 0
    %747 = vmatpush1.bf16.msra.mxu0 %v119
    %748 = vmatprep.subr.bf16.mxu0 0
    %749 = vmatpush1.bf16.msra.mxu0 %v120
    %750 = vmatprep.subr.bf16.mxu0 0
    %751 = vmatpush1.bf16.msra.mxu0 0
    %752 = vmatprep.subr.bf16.mxu0 0
    %753 = vmatpush1.bf16.msra.mxu0 0
    %754 = vmatprep.subr.bf16.mxu0 0
    %755 = vmatpush1.bf16.msra.mxu0 0
    %756 = vmatprep.subr.bf16.mxu0 0
    %757 = vmatpush1.bf16.msra.mxu0 0
    %758 = vmatprep.subr.bf16.mxu0 0
    %759 = vmatpush1.bf16.msra.mxu0 0
    %760 = vmatprep.subr.bf16.mxu0 0
    %761 = vmatpush1.bf16.msra.mxu0 0
    %762 = vmatprep.subr.bf16.mxu0 0
    %763 = vmatpush1.bf16.msra.mxu0 0
    %764 = vmatprep.subr.bf16.mxu0 0
    %765 = vmatpush1.bf16.msra.mxu0 0
    %766 = vmatprep.subr.bf16.mxu0 0
    %767 = vmatpush1.bf16.msra.mxu0 0
    %768 = vmatprep.subr.bf16.mxu0 0
    %769 = vmatpush1.bf16.msra.mxu0 0
    %770 = vmatprep.subr.bf16.mxu0 0
    %771 = vmatpush1.bf16.msra.mxu0 0
    %772 = vmatprep.subr.bf16.mxu0 0
    %773 = vmatpush1.bf16.msra.mxu0 0
    %774 = vmatprep.mubr.bf16.mxu0 0
    %775 = vmatmul.mubr.bf16.gmra.mrb[0].mxu0 %v696
    %v776 = vpop.f32.mrb[0].mxu0
    %v777 = vadd.f32 0.0, %v776
    %v778 = vpop.f32.mrb[0].mxu0
    %v779 = vpop.f32.mrb[0].mxu0
    %v780 = vpop.f32.mrb[0].mxu0
    %781 = vdwg.mxu0
    %782 = vmatprep.subr.bf16.mxu0 0
    %783 = vmatpush1.bf16.msra.mxu0 %v185
    %784 = vmatprep.subr.bf16.mxu0 0
    %785 = vmatpush1.bf16.msra.mxu0 %v186
    %786 = vmatprep.subr.bf16.mxu0 0
    %787 = vmatpush1.bf16.msra.mxu0 %v187
    %788 = vmatprep.subr.bf16.mxu0 0
    %789 = vmatpush1.bf16.msra.mxu0 %v188
    %790 = vmatprep.subr.bf16.mxu0 0
    %791 = vmatpush1.bf16.msra.mxu0 0
    %792 = vmatprep.subr.bf16.mxu0 0
    %793 = vmatpush1.bf16.msra.mxu0 0
    %794 = vmatprep.subr.bf16.mxu0 0
    %795 = vmatpush1.bf16.msra.mxu0 0
    %796 = vmatprep.subr.bf16.mxu0 0
    %797 = vmatpush1.bf16.msra.mxu0 0
    %798 = vmatprep.subr.bf16.mxu0 0
    %799 = vmatpush1.bf16.msra.mxu0 0
    %800 = vmatprep.subr.bf16.mxu0 0
    %801 = vmatpush1.bf16.msra.mxu0 0
    %802 = vmatprep.subr.bf16.mxu0 0
    %803 = vmatpush1.bf16.msra.mxu0 0
    %804 = vmatprep.subr.bf16.mxu0 0
    %805 = vmatpush1.bf16.msra.mxu0 0
    %806 = vmatprep.subr.bf16.mxu0 0
    %807 = vmatpush1.bf16.msra.mxu0 0
    %808 = vmatprep.subr.bf16.mxu0 0
    %809 = vmatpush1.bf16.msra.mxu0 0
    %810 = vmatprep.subr.bf16.mxu0 0
    %811 = vmatpush1.bf16.msra.mxu0 0
    %812 = vmatprep.subr.bf16.mxu0 0
    %813 = vmatpush1.bf16.msra.mxu0 0
    %814 = vmatprep.mubr.bf16.mxu0 0
    %815 = vmatmul.mubr.bf16.gmra.mrb[0].mxu0 %v652
    %v816 = vpop.f32.mrb[0].mxu0
    %v817 = vadd.f32 %v777, %v816
    %v818 = vpop.f32.mrb[0].mxu0
    %v819 = vpop.f32.mrb[0].mxu0
    %v820 = vpop.f32.mrb[0].mxu0
    %821 = vdwg.mxu0
    %v823 = vsel %vm125, %v69, 0
    %825 = vmatprep.subr.bf16.mxu0 0
    %826 = vmatpush1.bf16.msra.mxu0 %v261
    %827 = vmatprep.subr.bf16.mxu0 0
    %828 = vmatpush1.bf16.msra.mxu0 %v262
    %829 = vmatprep.subr.bf16.mxu0 0
    %830 = vmatpush1.bf16.msra.mxu0 %v263
    %831 = vmatprep.subr.bf16.mxu0 0
    %832 = vmatpush1.bf16.msra.mxu0 %v264
    %833 = vmatprep.subr.bf16.mxu0 0
    %834 = vmatpush1.bf16.msra.mxu0 0
    %835 = vmatprep.subr.bf16.mxu0 0
    %836 = vmatpush1.bf16.msra.mxu0 0
    %837 = vmatprep.subr.bf16.mxu0 0
    %838 = vmatpush1.bf16.msra.mxu0 0
    %839 = vmatprep.subr.bf16.mxu0 0
    %840 = vmatpush1.bf16.msra.mxu0 0
    %841 = vmatprep.subr.bf16.mxu0 0
    %842 = vmatpush1.bf16.msra.mxu0 0
    %843 = vmatprep.subr.bf16.mxu0 0
    %844 = vmatpush1.bf16.msra.mxu0 0
    %845 = vmatprep.subr.bf16.mxu0 0
    %846 = vmatpush1.bf16.msra.mxu0 0
    %847 = vmatprep.subr.bf16.mxu0 0
    %848 = vmatpush1.bf16.msra.mxu0 0
    %849 = vmatprep.subr.bf16.mxu0 0
    %850 = vmatpush1.bf16.msra.mxu0 0
    %851 = vmatprep.subr.bf16.mxu0 0
    %852 = vmatpush1.bf16.msra.mxu0 0
    %853 = vmatprep.subr.bf16.mxu0 0
    %854 = vmatpush1.bf16.msra.mxu0 0
    %855 = vmatprep.subr.bf16.mxu0 0
    %856 = vmatpush1.bf16.msra.mxu0 0
    %857 = vmatprep.mubr.bf16.mxu0 0
    %858 = vmatmul.mubr.bf16.gmra.mrb[0].mxu0 %v823
    %v859 = vpop.f32.mrb[0].mxu0
    %v860 = vadd.f32 0.0, %v859
    %v861 = vpop.f32.mrb[0].mxu0
    %v862 = vpop.f32.mrb[0].mxu0
    %v863 = vpop.f32.mrb[0].mxu0
    %864 = vdwg.mxu0
    %v865 = vadd.f32 %v817, %v860
    %v867 = vsel %vm125, %v71, 0
    %869 = vmatprep.subr.bf16.mxu0 0
    %870 = vmatpush1.bf16.msra.mxu0 %v338
    %871 = vmatprep.subr.bf16.mxu0 0
    %872 = vmatpush1.bf16.msra.mxu0 %v339
    %873 = vmatprep.subr.bf16.mxu0 0
    %874 = vmatpush1.bf16.msra.mxu0 %v340
    %875 = vmatprep.subr.bf16.mxu0 0
    %876 = vmatpush1.bf16.msra.mxu0 %v341
    %877 = vmatprep.subr.bf16.mxu0 0
    %878 = vmatpush1.bf16.msra.mxu0 0
    %879 = vmatprep.subr.bf16.mxu0 0
    %880 = vmatpush1.bf16.msra.mxu0 0
    %881 = vmatprep.subr.bf16.mxu0 0
    %882 = vmatpush1.bf16.msra.mxu0 0
    %883 = vmatprep.subr.bf16.mxu0 0
    %884 = vmatpush1.bf16.msra.mxu0 0
    %885 = vmatprep.subr.bf16.mxu0 0
    %886 = vmatpush1.bf16.msra.mxu0 0
    %887 = vmatprep.subr.bf16.mxu0 0
    %888 = vmatpush1.bf16.msra.mxu0 0
    %889 = vmatprep.subr.bf16.mxu0 0
    %890 = vmatpush1.bf16.msra.mxu0 0
    %891 = vmatprep.subr.bf16.mxu0 0
    %892 = vmatpush1.bf16.msra.mxu0 0
    %893 = vmatprep.subr.bf16.mxu0 0
    %894 = vmatpush1.bf16.msra.mxu0 0
    %895 = vmatprep.subr.bf16.mxu0 0
    %896 = vmatpush1.bf16.msra.mxu0 0
    %897 = vmatprep.subr.bf16.mxu0 0
    %898 = vmatpush1.bf16.msra.mxu0 0
    %899 = vmatprep.subr.bf16.mxu0 0
    %900 = vmatpush1.bf16.msra.mxu0 0
    %901 = vmatprep.mubr.bf16.mxu0 0
    %902 = vmatmul.mubr.bf16.gmra.mrb[0].mxu0 %v867
    %v903 = vpop.f32.mrb[0].mxu0
    %v904 = vadd.f32 0.0, %v903
    %v905 = vpop.f32.mrb[0].mxu0
    %v906 = vpop.f32.mrb[0].mxu0
    %v907 = vpop.f32.mrb[0].mxu0
    %908 = vdwg.mxu0
    %v909 = vadd.f32 %v865, %v904
    %v910 = vadd.f32 %v909, %v395
    %v911 = vmax.f32 %v910, 0.0
    %v912 = vpack.c.bf16 %v911, %v911
    %913 = vmatprep.subr.bf16.mxu0 0
    %914 = vmatpush1.bf16.msra.mxu0 %v117
    %915 = vmatprep.subr.bf16.mxu0 0
    %916 = vmatpush1.bf16.msra.mxu0 %v118
    %917 = vmatprep.subr.bf16.mxu0 0
    %918 = vmatpush1.bf16.msra.mxu0 %v119
    %919 = vmatprep.subr.bf16.mxu0 0
    %920 = vmatpush1.bf16.msra.mxu0 %v120
    %921 = vmatprep.subr.bf16.mxu0 0
    %922 = vmatpush1.bf16.msra.mxu0 0
    %923 = vmatprep.subr.bf16.mxu0 0
    %924 = vmatpush1.bf16.msra.mxu0 0
    %925 = vmatprep.subr.bf16.mxu0 0
    %926 = vmatpush1.bf16.msra.mxu0 0
    %927 = vmatprep.subr.bf16.mxu0 0
    %928 = vmatpush1.bf16.msra.mxu0 0
    %929 = vmatprep.subr.bf16.mxu0 0
    %930 = vmatpush1.bf16.msra.mxu0 0
    %931 = vmatprep.subr.bf16.mxu0 0
    %932 = vmatpush1.bf16.msra.mxu0 0
    %933 = vmatprep.subr.bf16.mxu0 0
    %934 = vmatpush1.bf16.msra.mxu0 0
    %935 = vmatprep.subr.bf16.mxu0 0
    %936 = vmatpush1.bf16.msra.mxu0 0
    %937 = vmatprep.subr.bf16.mxu0 0
    %938 = vmatpush1.bf16.msra.mxu0 0
    %939 = vmatprep.subr.bf16.mxu0 0
    %940 = vmatpush1.bf16.msra.mxu0 0
    %941 = vmatprep.subr.bf16.mxu0 0
    %942 = vmatpush1.bf16.msra.mxu0 0
    %943 = vmatprep.subr.bf16.mxu0 0
    %944 = vmatpush1.bf16.msra.mxu0 0
    %945 = vmatprep.mubr.bf16.mxu0 0
    %946 = vmatmul.mubr.bf16.gmra.mrb[0].mxu0 %v867
    %v947 = vpop.f32.mrb[0].mxu0
    %v948 = vadd.f32 0.0, %v947
    %v949 = vpop.f32.mrb[0].mxu0
    %v950 = vpop.f32.mrb[0].mxu0
    %v951 = vpop.f32.mrb[0].mxu0
    %952 = vdwg.mxu0
    %953 = vmatprep.subr.bf16.mxu0 0
    %954 = vmatpush1.bf16.msra.mxu0 %v185
    %955 = vmatprep.subr.bf16.mxu0 0
    %956 = vmatpush1.bf16.msra.mxu0 %v186
    %957 = vmatprep.subr.bf16.mxu0 0
    %958 = vmatpush1.bf16.msra.mxu0 %v187
    %959 = vmatprep.subr.bf16.mxu0 0
    %960 = vmatpush1.bf16.msra.mxu0 %v188
    %961 = vmatprep.subr.bf16.mxu0 0
    %962 = vmatpush1.bf16.msra.mxu0 0
    %963 = vmatprep.subr.bf16.mxu0 0
    %964 = vmatpush1.bf16.msra.mxu0 0
    %965 = vmatprep.subr.bf16.mxu0 0
    %966 = vmatpush1.bf16.msra.mxu0 0
    %967 = vmatprep.subr.bf16.mxu0 0
    %968 = vmatpush1.bf16.msra.mxu0 0
    %969 = vmatprep.subr.bf16.mxu0 0
    %970 = vmatpush1.bf16.msra.mxu0 0
    %971 = vmatprep.subr.bf16.mxu0 0
    %972 = vmatpush1.bf16.msra.mxu0 0
    %973 = vmatprep.subr.bf16.mxu0 0
    %974 = vmatpush1.bf16.msra.mxu0 0
    %975 = vmatprep.subr.bf16.mxu0 0
    %976 = vmatpush1.bf16.msra.mxu0 0
    %977 = vmatprep.subr.bf16.mxu0 0
    %978 = vmatpush1.bf16.msra.mxu0 0
    %979 = vmatprep.subr.bf16.mxu0 0
    %980 = vmatpush1.bf16.msra.mxu0 0
    %981 = vmatprep.subr.bf16.mxu0 0
    %982 = vmatpush1.bf16.msra.mxu0 0
    %983 = vmatprep.subr.bf16.mxu0 0
    %984 = vmatpush1.bf16.msra.mxu0 0
    %985 = vmatprep.mubr.bf16.mxu0 0
    %986 = vmatmul.mubr.bf16.gmra.mrb[0].mxu0 %v823
    %v987 = vpop.f32.mrb[0].mxu0
    %v988 = vadd.f32 %v948, %v987
    %v989 = vpop.f32.mrb[0].mxu0
    %v990 = vpop.f32.mrb[0].mxu0
    %v991 = vpop.f32.mrb[0].mxu0
    %992 = vdwg.mxu0
    %v994 = vsel %vm125, %v73, 0
    %996 = vmatprep.subr.bf16.mxu0 0
    %997 = vmatpush1.bf16.msra.mxu0 %v261
    %998 = vmatprep.subr.bf16.mxu0 0
    %999 = vmatpush1.bf16.msra.mxu0 %v262
    %1000 = vmatprep.subr.bf16.mxu0 0
    %1001 = vmatpush1.bf16.msra.mxu0 %v263
    %1002 = vmatprep.subr.bf16.mxu0 0
    %1003 = vmatpush1.bf16.msra.mxu0 %v264
    %1004 = vmatprep.subr.bf16.mxu0 0
    %1005 = vmatpush1.bf16.msra.mxu0 0
    %1006 = vmatprep.subr.bf16.mxu0 0
    %1007 = vmatpush1.bf16.msra.mxu0 0
    %1008 = vmatprep.subr.bf16.mxu0 0
    %1009 = vmatpush1.bf16.msra.mxu0 0
    %1010 = vmatprep.subr.bf16.mxu0 0
    %1011 = vmatpush1.bf16.msra.mxu0 0
    %1012 = vmatprep.subr.bf16.mxu0 0
    %1013 = vmatpush1.bf16.msra.mxu0 0
    %1014 = vmatprep.subr.bf16.mxu0 0
    %1015 = vmatpush1.bf16.msra.mxu0 0
    %1016 = vmatprep.subr.bf16.mxu0 0
    %1017 = vmatpush1.bf16.msra.mxu0 0
    %1018 = vmatprep.subr.bf16.mxu0 0
    %1019 = vmatpush1.bf16.msra.mxu0 0
    %1020 = vmatprep.subr.bf16.mxu0 0
    %1021 = vmatpush1.bf16.msra.mxu0 0
    %1022 = vmatprep.subr.bf16.mxu0 0
    %1023 = vmatpush1.bf16.msra.mxu0 0
    %1024 = vmatprep.subr.bf16.mxu0 0
    %1025 = vmatpush1.bf16.msra.mxu0 0
    %1026 = vmatprep.subr.bf16.mxu0 0
    %1027 = vmatpush1.bf16.msra.mxu0 0
    %1028 = vmatprep.mubr.bf16.mxu0 0
    %1029 = vmatmul.mubr.bf16.gmra.mrb[0].mxu0 %v994
    %v1030 = vpop.f32.mrb[0].mxu0
    %v1031 = vadd.f32 0.0, %v1030
    %v1032 = vpop.f32.mrb[0].mxu0
    %v1033 = vpop.f32.mrb[0].mxu0
    %v1034 = vpop.f32.mrb[0].mxu0
    %1035 = vdwg.mxu0
    %v1036 = vadd.f32 %v988, %v1031
    %v1038 = vsel %vm125, %v75, 0
    %1040 = vmatprep.subr.bf16.mxu0 0
    %1041 = vmatpush1.bf16.msra.mxu0 %v338
    %1042 = vmatprep.subr.bf16.mxu0 0
    %1043 = vmatpush1.bf16.msra.mxu0 %v339
    %1044 = vmatprep.subr.bf16.mxu0 0
    %1045 = vmatpush1.bf16.msra.mxu0 %v340
    %1046 = vmatprep.subr.bf16.mxu0 0
    %1047 = vmatpush1.bf16.msra.mxu0 %v341
    %1048 = vmatprep.subr.bf16.mxu0 0
    %1049 = vmatpush1.bf16.msra.mxu0 0
    %1050 = vmatprep.subr.bf16.mxu0 0
    %1051 = vmatpush1.bf16.msra.mxu0 0
    %1052 = vmatprep.subr.bf16.mxu0 0
    %1053 = vmatpush1.bf16.msra.mxu0 0
    %1054 = vmatprep.subr.bf16.mxu0 0
    %1055 = vmatpush1.bf16.msra.mxu0 0
    %1056 = vmatprep.subr.bf16.mxu0 0
    %1057 = vmatpush1.bf16.msra.mxu0 0
    %1058 = vmatprep.subr.bf16.mxu0 0
    %1059 = vmatpush1.bf16.msra.mxu0 0
    %1060 = vmatprep.subr.bf16.mxu0 0
    %1061 = vmatpush1.bf16.msra.mxu0 0
    %1062 = vmatprep.subr.bf16.mxu0 0
    %1063 = vmatpush1.bf16.msra.mxu0 0
    %1064 = vmatprep.subr.bf16.mxu0 0
    %1065 = vmatpush1.bf16.msra.mxu0 0
    %1066 = vmatprep.subr.bf16.mxu0 0
    %1067 = vmatpush1.bf16.msra.mxu0 0
    %1068 = vmatprep.subr.bf16.mxu0 0
    %1069 = vmatpush1.bf16.msra.mxu0 0
    %1070 = vmatprep.subr.bf16.mxu0 0
    %1071 = vmatpush1.bf16.msra.mxu0 0
    %1072 = vmatprep.mubr.bf16.mxu0 0
    %1073 = vmatmul.mubr.bf16.gmra.mrb[0].mxu0 %v1038
    %v1074 = vpop.f32.mrb[0].mxu0
    %v1075 = vadd.f32 0.0, %v1074
    %v1076 = vpop.f32.mrb[0].mxu0
    %v1077 = vpop.f32.mrb[0].mxu0
    %v1078 = vpop.f32.mrb[0].mxu0
    %1079 = vdwg.mxu0
    %v1080 = vadd.f32 %v1036, %v1075
    %v1081 = vadd.f32 %v1080, %v395
    %v1082 = vmax.f32 %v1081, 0.0
    %v1083 = vpack.c.bf16 %v1082, %v1082
    %1084 = vmatprep.subr.bf16.mxu0 0
    %1085 = vmatpush1.bf16.msra.mxu0 %v117
    %1086 = vmatprep.subr.bf16.mxu0 0
    %1087 = vmatpush1.bf16.msra.mxu0 %v118
    %1088 = vmatprep.subr.bf16.mxu0 0
    %1089 = vmatpush1.bf16.msra.mxu0 %v119
    %1090 = vmatprep.subr.bf16.mxu0 0
    %1091 = vmatpush1.bf16.msra.mxu0 %v120
    %1092 = vmatprep.subr.bf16.mxu0 0
    %1093 = vmatpush1.bf16.msra.mxu0 0
    %1094 = vmatprep.subr.bf16.mxu0 0
    %1095 = vmatpush1.bf16.msra.mxu0 0
    %1096 = vmatprep.subr.bf16.mxu0 0
    %1097 = vmatpush1.bf16.msra.mxu0 0
    %1098 = vmatprep.subr.bf16.mxu0 0
    %1099 = vmatpush1.bf16.msra.mxu0 0
    %1100 = vmatprep.subr.bf16.mxu0 0
    %1101 = vmatpush1.bf16.msra.mxu0 0
    %1102 = vmatprep.subr.bf16.mxu0 0
    %1103 = vmatpush1.bf16.msra.mxu0 0
    %1104 = vmatprep.subr.bf16.mxu0 0
    %1105 = vmatpush1.bf16.msra.mxu0 0
    %1106 = vmatprep.subr.bf16.mxu0 0
    %1107 = vmatpush1.bf16.msra.mxu0 0
    %1108 = vmatprep.subr.bf16.mxu0 0
    %1109 = vmatpush1.bf16.msra.mxu0 0
    %1110 = vmatprep.subr.bf16.mxu0 0
    %1111 = vmatpush1.bf16.msra.mxu0 0
    %1112 = vmatprep.subr.bf16.mxu0 0
    %1113 = vmatpush1.bf16.msra.mxu0 0
    %1114 = vmatprep.subr.bf16.mxu0 0
    %1115 = vmatpush1.bf16.msra.mxu0 0
    %1116 = vmatprep.mubr.bf16.mxu0 0
    %1117 = vmatmul.mubr.bf16.gmra.mrb[0].mxu0 %v1038
    %v1118 = vpop.f32.mrb[0].mxu0
    %v1119 = vadd.f32 0.0, %v1118
    %v1120 = vpop.f32.mrb[0].mxu0
    %v1121 = vpop.f32.mrb[0].mxu0
    %v1122 = vpop.f32.mrb[0].mxu0
    %1123 = vdwg.mxu0
    %1124 = vmatprep.subr.bf16.mxu0 0
    %1125 = vmatpush1.bf16.msra.mxu0 %v185
    %1126 = vmatprep.subr.bf16.mxu0 0
    %1127 = vmatpush1.bf16.msra.mxu0 %v186
    %1128 = vmatprep.subr.bf16.mxu0 0
    %1129 = vmatpush1.bf16.msra.mxu0 %v187
    %1130 = vmatprep.subr.bf16.mxu0 0
    %1131 = vmatpush1.bf16.msra.mxu0 %v188
    %1132 = vmatprep.subr.bf16.mxu0 0
    %1133 = vmatpush1.bf16.msra.mxu0 0
    %1134 = vmatprep.subr.bf16.mxu0 0
    %1135 = vmatpush1.bf16.msra.mxu0 0
    %1136 = vmatprep.subr.bf16.mxu0 0
    %1137 = vmatpush1.bf16.msra.mxu0 0
    %1138 = vmatprep.subr.bf16.mxu0 0
    %1139 = vmatpush1.bf16.msra.mxu0 0
    %1140 = vmatprep.subr.bf16.mxu0 0
    %1141 = vmatpush1.bf16.msra.mxu0 0
    %1142 = vmatprep.subr.bf16.mxu0 0
    %1143 = vmatpush1.bf16.msra.mxu0 0
    %1144 = vmatprep.subr.bf16.mxu0 0
    %1145 = vmatpush1.bf16.msra.mxu0 0
    %1146 = vmatprep.subr.bf16.mxu0 0
    %1147 = vmatpush1.bf16.msra.mxu0 0
    %1148 = vmatprep.subr.bf16.mxu0 0
    %1149 = vmatpush1.bf16.msra.mxu0 0
    %1150 = vmatprep.subr.bf16.mxu0 0
    %1151 = vmatpush1.bf16.msra.mxu0 0
    %1152 = vmatprep.subr.bf16.mxu0 0
    %1153 = vmatpush1.bf16.msra.mxu0 0
    %1154 = vmatprep.subr.bf16.mxu0 0
    %1155 = vmatpush1.bf16.msra.mxu0 0
    %1156 = vmatprep.mubr.bf16.mxu0 0
    %1157 = vmatmul.mubr.bf16.gmra.mrb[0].mxu0 %v994
    %v1158 = vpop.f32.mrb[0].mxu0
    %v1159 = vadd.f32 %v1119, %v1158
    %v1160 = vpop.f32.mrb[0].mxu0
    %v1161 = vpop.f32.mrb[0].mxu0
    %v1162 = vpop.f32.mrb[0].mxu0
    %1163 = vdwg.mxu0
    %v1165 = vsel %vm125, %v77, 0
    %1167 = vmatprep.subr.bf16.mxu0 0
    %1168 = vmatpush1.bf16.msra.mxu0 %v261
    %1169 = vmatprep.subr.bf16.mxu0 0
    %1170 = vmatpush1.bf16.msra.mxu0 %v262
    %1171 = vmatprep.subr.bf16.mxu0 0
    %1172 = vmatpush1.bf16.msra.mxu0 %v263
    %1173 = vmatprep.subr.bf16.mxu0 0
    %1174 = vmatpush1.bf16.msra.mxu0 %v264
    %1175 = vmatprep.subr.bf16.mxu0 0
    %1176 = vmatpush1.bf16.msra.mxu0 0
    %1177 = vmatprep.subr.bf16.mxu0 0
    %1178 = vmatpush1.bf16.msra.mxu0 0
    %1179 = vmatprep.subr.bf16.mxu0 0
    %1180 = vmatpush1.bf16.msra.mxu0 0
    %1181 = vmatprep.subr.bf16.mxu0 0
    %1182 = vmatpush1.bf16.msra.mxu0 0
    %1183 = vmatprep.subr.bf16.mxu0 0
    %1184 = vmatpush1.bf16.msra.mxu0 0
    %1185 = vmatprep.subr.bf16.mxu0 0
    %1186 = vmatpush1.bf16.msra.mxu0 0
    %1187 = vmatprep.subr.bf16.mxu0 0
    %1188 = vmatpush1.bf16.msra.mxu0 0
    %1189 = vmatprep.subr.bf16.mxu0 0
    %1190 = vmatpush1.bf16.msra.mxu0 0
    %1191 = vmatprep.subr.bf16.mxu0 0
    %1192 = vmatpush1.bf16.msra.mxu0 0
    %1193 = vmatprep.subr.bf16.mxu0 0
    %1194 = vmatpush1.bf16.msra.mxu0 0
    %1195 = vmatprep.subr.bf16.mxu0 0
    %1196 = vmatpush1.bf16.msra.mxu0 0
    %1197 = vmatprep.subr.bf16.mxu0 0
    %1198 = vmatpush1.bf16.msra.mxu0 0
    %1199 = vmatprep.mubr.bf16.mxu0 0
    %1200 = vmatmul.mubr.bf16.gmra.mrb[0].mxu0 %v1165
    %v1201 = vpop.f32.mrb[0].mxu0
    %v1202 = vadd.f32 0.0, %v1201
    %v1203 = vpop.f32.mrb[0].mxu0
    %v1204 = vpop.f32.mrb[0].mxu0
    %v1205 = vpop.f32.mrb[0].mxu0
    %1206 = vdwg.mxu0
    %v1207 = vadd.f32 %v1159, %v1202
    %v1209 = vsel %vm125, %v79, 0
    %1211 = vmatprep.subr.bf16.mxu0 0
    %1212 = vmatpush1.bf16.msra.mxu0 %v338
    %1213 = vmatprep.subr.bf16.mxu0 0
    %1214 = vmatpush1.bf16.msra.mxu0 %v339
    %1215 = vmatprep.subr.bf16.mxu0 0
    %1216 = vmatpush1.bf16.msra.mxu0 %v340
    %1217 = vmatprep.subr.bf16.mxu0 0
    %1218 = vmatpush1.bf16.msra.mxu0 %v341
    %1219 = vmatprep.subr.bf16.mxu0 0
    %1220 = vmatpush1.bf16.msra.mxu0 0
    %1221 = vmatprep.subr.bf16.mxu0 0
    %1222 = vmatpush1.bf16.msra.mxu0 0
    %1223 = vmatprep.subr.bf16.mxu0 0
    %1224 = vmatpush1.bf16.msra.mxu0 0
    %1225 = vmatprep.subr.bf16.mxu0 0
    %1226 = vmatpush1.bf16.msra.mxu0 0
    %1227 = vmatprep.subr.bf16.mxu0 0
    %1228 = vmatpush1.bf16.msra.mxu0 0
    %1229 = vmatprep.subr.bf16.mxu0 0
    %1230 = vmatpush1.bf16.msra.mxu0 0
    %1231 = vmatprep.subr.bf16.mxu0 0
    %1232 = vmatpush1.bf16.msra.mxu0 0
    %1233 = vmatprep.subr.bf16.mxu0 0
    %1234 = vmatpush1.bf16.msra.mxu0 0
    %1235 = vmatprep.subr.bf16.mxu0 0
    %1236 = vmatpush1.bf16.msra.mxu0 0
    %1237 = vmatprep.subr.bf16.mxu0 0
    %1238 = vmatpush1.bf16.msra.mxu0 0
    %1239 = vmatprep.subr.bf16.mxu0 0
    %1240 = vmatpush1.bf16.msra.mxu0 0
    %1241 = vmatprep.subr.bf16.mxu0 0
    %1242 = vmatpush1.bf16.msra.mxu0 0
    %1243 = vmatprep.mubr.bf16.mxu0 0
    %1244 = vmatmul.mubr.bf16.gmra.mrb[0].mxu0 %v1209
    %v1245 = vpop.f32.mrb[0].mxu0
    %v1246 = vadd.f32 0.0, %v1245
    %v1247 = vpop.f32.mrb[0].mxu0
    %v1248 = vpop.f32.mrb[0].mxu0
    %v1249 = vpop.f32.mrb[0].mxu0
    %1250 = vdwg.mxu0
    %v1251 = vadd.f32 %v1207, %v1246
    %v1252 = vadd.f32 %v1251, %v395
    %v1253 = vmax.f32 %v1252, 0.0
    %v1254 = vpack.c.bf16 %v1253, %v1253
    %1255 = vmatprep.subr.bf16.mxu0 0
    %1256 = vmatpush1.bf16.msra.mxu0 %v117
    %1257 = vmatprep.subr.bf16.mxu0 0
    %1258 = vmatpush1.bf16.msra.mxu0 %v118
    %1259 = vmatprep.subr.bf16.mxu0 0
    %1260 = vmatpush1.bf16.msra.mxu0 %v119
    %1261 = vmatprep.subr.bf16.mxu0 0
    %1262 = vmatpush1.bf16.msra.mxu0 %v120
    %1263 = vmatprep.subr.bf16.mxu0 0
    %1264 = vmatpush1.bf16.msra.mxu0 0
    %1265 = vmatprep.subr.bf16.mxu0 0
    %1266 = vmatpush1.bf16.msra.mxu0 0
    %1267 = vmatprep.subr.bf16.mxu0 0
    %1268 = vmatpush1.bf16.msra.mxu0 0
    %1269 = vmatprep.subr.bf16.mxu0 0
    %1270 = vmatpush1.bf16.msra.mxu0 0
    %1271 = vmatprep.subr.bf16.mxu0 0
    %1272 = vmatpush1.bf16.msra.mxu0 0
    %1273 = vmatprep.subr.bf16.mxu0 0
    %1274 = vmatpush1.bf16.msra.mxu0 0
    %1275 = vmatprep.subr.bf16.mxu0 0
    %1276 = vmatpush1.bf16.msra.mxu0 0
    %1277 = vmatprep.subr.bf16.mxu0 0
    %1278 = vmatpush1.bf16.msra.mxu0 0
    %1279 = vmatprep.subr.bf16.mxu0 0
    %1280 = vmatpush1.bf16.msra.mxu0 0
    %1281 = vmatprep.subr.bf16.mxu0 0
    %1282 = vmatpush1.bf16.msra.mxu0 0
    %1283 = vmatprep.subr.bf16.mxu0 0
    %1284 = vmatpush1.bf16.msra.mxu0 0
    %1285 = vmatprep.subr.bf16.mxu0 0
    %1286 = vmatpush1.bf16.msra.mxu0 0
    %1287 = vmatprep.mubr.bf16.mxu0 0
    %1288 = vmatmul.mubr.bf16.gmra.mrb[0].mxu0 %v1209
    %v1289 = vpop.f32.mrb[0].mxu0
    %v1290 = vadd.f32 0.0, %v1289
    %v1291 = vpop.f32.mrb[0].mxu0
    %v1292 = vpop.f32.mrb[0].mxu0
    %v1293 = vpop.f32.mrb[0].mxu0
    %1294 = vdwg.mxu0
    %1295 = vmatprep.subr.bf16.mxu0 0
    %1296 = vmatpush1.bf16.msra.mxu0 %v185
    %1297 = vmatprep.subr.bf16.mxu0 0
    %1298 = vmatpush1.bf16.msra.mxu0 %v186
    %1299 = vmatprep.subr.bf16.mxu0 0
    %1300 = vmatpush1.bf16.msra.mxu0 %v187
    %1301 = vmatprep.subr.bf16.mxu0 0
    %1302 = vmatpush1.bf16.msra.mxu0 %v188
    %1303 = vmatprep.subr.bf16.mxu0 0
    %1304 = vmatpush1.bf16.msra.mxu0 0
    %1305 = vmatprep.subr.bf16.mxu0 0
    %1306 = vmatpush1.bf16.msra.mxu0 0
    %1307 = vmatprep.subr.bf16.mxu0 0
    %1308 = vmatpush1.bf16.msra.mxu0 0
    %1309 = vmatprep.subr.bf16.mxu0 0
    %1310 = vmatpush1.bf16.msra.mxu0 0
    %1311 = vmatprep.subr.bf16.mxu0 0
    %1312 = vmatpush1.bf16.msra.mxu0 0
    %1313 = vmatprep.subr.bf16.mxu0 0
    %1314 = vmatpush1.bf16.msra.mxu0 0
    %1315 = vmatprep.subr.bf16.mxu0 0
    %1316 = vmatpush1.bf16.msra.mxu0 0
    %1317 = vmatprep.subr.bf16.mxu0 0
    %1318 = vmatpush1.bf16.msra.mxu0 0
    %1319 = vmatprep.subr.bf16.mxu0 0
    %1320 = vmatpush1.bf16.msra.mxu0 0
    %1321 = vmatprep.subr.bf16.mxu0 0
    %1322 = vmatpush1.bf16.msra.mxu0 0
    %1323 = vmatprep.subr.bf16.mxu0 0
    %1324 = vmatpush1.bf16.msra.mxu0 0
    %1325 = vmatprep.subr.bf16.mxu0 0
    %1326 = vmatpush1.bf16.msra.mxu0 0
    %1327 = vmatprep.mubr.bf16.mxu0 0
    %1328 = vmatmul.mubr.bf16.gmra.mrb[0].mxu0 %v1165
    %v1329 = vpop.f32.mrb[0].mxu0
    %v1330 = vadd.f32 %v1290, %v1329
    %v1331 = vpop.f32.mrb[0].mxu0
    %v1332 = vpop.f32.mrb[0].mxu0
    %v1333 = vpop.f32.mrb[0].mxu0
    %1334 = vdwg.mxu0
    %v1336 = vsel %vm125, %v81, 0
    %1338 = vmatprep.subr.bf16.mxu0 0
    %1339 = vmatpush1.bf16.msra.mxu0 %v261
    %1340 = vmatprep.subr.bf16.mxu0 0
    %1341 = vmatpush1.bf16.msra.mxu0 %v262
    %1342 = vmatprep.subr.bf16.mxu0 0
    %1343 = vmatpush1.bf16.msra.mxu0 %v263
    %1344 = vmatprep.subr.bf16.mxu0 0
    %1345 = vmatpush1.bf16.msra.mxu0 %v264
    %1346 = vmatprep.subr.bf16.mxu0 0
    %1347 = vmatpush1.bf16.msra.mxu0 0
    %1348 = vmatprep.subr.bf16.mxu0 0
    %1349 = vmatpush1.bf16.msra.mxu0 0
    %1350 = vmatprep.subr.bf16.mxu0 0
    %1351 = vmatpush1.bf16.msra.mxu0 0
    %1352 = vmatprep.subr.bf16.mxu0 0
    %1353 = vmatpush1.bf16.msra.mxu0 0
    %1354 = vmatprep.subr.bf16.mxu0 0
    %1355 = vmatpush1.bf16.msra.mxu0 0
    %1356 = vmatprep.subr.bf16.mxu0 0
    %1357 = vmatpush1.bf16.msra.mxu0 0
    %1358 = vmatprep.subr.bf16.mxu0 0
    %1359 = vmatpush1.bf16.msra.mxu0 0
    %1360 = vmatprep.subr.bf16.mxu0 0
    %1361 = vmatpush1.bf16.msra.mxu0 0
    %1362 = vmatprep.subr.bf16.mxu0 0
    %1363 = vmatpush1.bf16.msra.mxu0 0
    %1364 = vmatprep.subr.bf16.mxu0 0
    %1365 = vmatpush1.bf16.msra.mxu0 0
    %1366 = vmatprep.subr.bf16.mxu0 0
    %1367 = vmatpush1.bf16.msra.mxu0 0
    %1368 = vmatprep.subr.bf16.mxu0 0
    %1369 = vmatpush1.bf16.msra.mxu0 0
    %1370 = vmatprep.mubr.bf16.mxu0 0
    %1371 = vmatmul.mubr.bf16.gmra.mrb[0].mxu0 %v1336
    %v1372 = vpop.f32.mrb[0].mxu0
    %v1373 = vadd.f32 0.0, %v1372
    %v1374 = vpop.f32.mrb[0].mxu0
    %v1375 = vpop.f32.mrb[0].mxu0
    %v1376 = vpop.f32.mrb[0].mxu0
    %1377 = vdwg.mxu0
    %v1378 = vadd.f32 %v1330, %v1373
    %v1380 = vsel %vm125, %v83, 0
    %1382 = vmatprep.subr.bf16.mxu0 0
    %1383 = vmatpush1.bf16.msra.mxu0 %v338
    %1384 = vmatprep.subr.bf16.mxu0 0
    %1385 = vmatpush1.bf16.msra.mxu0 %v339
    %1386 = vmatprep.subr.bf16.mxu0 0
    %1387 = vmatpush1.bf16.msra.mxu0 %v340
    %1388 = vmatprep.subr.bf16.mxu0 0
    %1389 = vmatpush1.bf16.msra.mxu0 %v341
    %1390 = vmatprep.subr.bf16.mxu0 0
    %1391 = vmatpush1.bf16.msra.mxu0 0
    %1392 = vmatprep.subr.bf16.mxu0 0
    %1393 = vmatpush1.bf16.msra.mxu0 0
    %1394 = vmatprep.subr.bf16.mxu0 0
    %1395 = vmatpush1.bf16.msra.mxu0 0
    %1396 = vmatprep.subr.bf16.mxu0 0
    %1397 = vmatpush1.bf16.msra.mxu0 0
    %1398 = vmatprep.subr.bf16.mxu0 0
    %1399 = vmatpush1.bf16.msra.mxu0 0
    %1400 = vmatprep.subr.bf16.mxu0 0
    %1401 = vmatpush1.bf16.msra.mxu0 0
    %1402 = vmatprep.subr.bf16.mxu0 0
    %1403 = vmatpush1.bf16.msra.mxu0 0
    %1404 = vmatprep.subr.bf16.mxu0 0
    %1405 = vmatpush1.bf16.msra.mxu0 0
    %1406 = vmatprep.subr.bf16.mxu0 0
    %1407 = vmatpush1.bf16.msra.mxu0 0
    %1408 = vmatprep.subr.bf16.mxu0 0
    %1409 = vmatpush1.bf16.msra.mxu0 0
    %1410 = vmatprep.subr.bf16.mxu0 0
    %1411 = vmatpush1.bf16.msra.mxu0 0
    %1412 = vmatprep.subr.bf16.mxu0 0
    %1413 = vmatpush1.bf16.msra.mxu0 0
    %1414 = vmatprep.mubr.bf16.mxu0 0
    %1415 = vmatmul.mubr.bf16.gmra.mrb[0].mxu0 %v1380
    %v1416 = vpop.f32.mrb[0].mxu0
    %v1417 = vadd.f32 0.0, %v1416
    %v1418 = vpop.f32.mrb[0].mxu0
    %v1419 = vpop.f32.mrb[0].mxu0
    %v1420 = vpop.f32.mrb[0].mxu0
    %1421 = vdwg.mxu0
    %v1422 = vadd.f32 %v1378, %v1417
    %v1423 = vadd.f32 %v1422, %v395
    %v1424 = vmax.f32 %v1423, 0.0
    %v1425 = vpack.c.bf16 %v1424, %v1424
    %v1426 = vld [vmem:[%s3] sm:$0xff]
    %v1427 = vld [vmem:[%s3 + $0x8] sm:$0xff]
    %v1428 = vld [vmem:[%s3 + $0x10] sm:$0xff]
    %v1429 = vld [vmem:[%s3 + $0x18] sm:$0xff]
    %v1430 = vld [vmem:[%s3 + $0x20] sm:$0xff]
    %v1431 = vld [vmem:[%s3 + $0x28] sm:$0xff]
    %v1432 = vld [vmem:[%s3 + $0x30] sm:$0xff]
    %v1433 = vld [vmem:[%s3 + $0x38] sm:$0xff]
    %v1434 = vld [vmem:[%s3 + $0x40] sm:$0xff]
    %v1435 = vld [vmem:[%s3 + $0x48] sm:$0xff]
    %v1436 = vld [vmem:[%s3 + $0x50] sm:$0xff]
    %v1437 = vld [vmem:[%s3 + $0x58] sm:$0xff]
    %v1438 = vld [vmem:[%s3 + $0x60] sm:$0xff]
    %v1439 = vld [vmem:[%s3 + $0x68] sm:$0xff]
    %s1440 = scalar_lea.vmem %s3, 112
    %v1441 = vld [vmem:[%s1440] sm:$0xff]
    %v1442 = vld [vmem:[%s1440 + $0x8] sm:$0xff]
    %v1443 = vld [vmem:[%s1440 + $0x10] sm:$0xff]
    %v1444 = vld [vmem:[%s1440 + $0x18] sm:$0xff]
    %v1445 = vld [vmem:[%s1440 + $0x20] sm:$0xff]
    %v1446 = vld [vmem:[%s1440 + $0x28] sm:$0xff]
    %v1447 = vld [vmem:[%s1440 + $0x30] sm:$0xff]
    %v1448 = vld [vmem:[%s1440 + $0x38] sm:$0xff]
    %v1449 = vld [vmem:[%s1440 + $0x40] sm:$0xff]
    %v1450 = vld [vmem:[%s1440 + $0x48] sm:$0xff]
    %v1451 = vld [vmem:[%s1440 + $0x50] sm:$0xff]
    %v1452 = vld [vmem:[%s1440 + $0x58] sm:$0xff]
    %v1453 = vld [vmem:[%s1440 + $0x60] sm:$0xff]
    %v1454 = vld [vmem:[%s1440 + $0x68] sm:$0xff]
    %v1469 = vunpack.c.l.b16 %v1441
    %v1470 = vunpack.c.h.b16 %v1441
    %v1471 = vunpack.c.l.b16 %v1442
    %v1472 = vunpack.c.h.b16 %v1442
    %v1473 = vunpack.c.l.b16 %v1443
    %v1474 = vunpack.c.h.b16 %v1443
    %v1475 = vunpack.c.l.b16 %v1444
    %v1476 = vunpack.c.h.b16 %v1444
    %v1477 = vunpack.c.l.b16 %v1445
    %v1478 = vunpack.c.h.b16 %v1445
    %v1479 = vunpack.c.l.b16 %v1446
    %v1480 = vunpack.c.h.b16 %v1446
    %v1481 = vunpack.c.l.b16 %v1447
    %v1482 = vunpack.c.h.b16 %v1447
    %v1483 = vunpack.c.l.b16 %v1448
    %v1484 = vunpack.c.h.b16 %v1448
    %v1485 = vunpack.c.l.b16 %v1449
    %v1486 = vunpack.c.h.b16 %v1449
    %v1487 = vunpack.c.l.b16 %v1450
    %v1488 = vunpack.c.h.b16 %v1450
    %v1489 = vunpack.c.l.b16 %v1451
    %v1490 = vunpack.c.h.b16 %v1451
    %v1491 = vunpack.c.l.b16 %v1452
    %v1492 = vunpack.c.h.b16 %v1452
    %v1493 = vunpack.c.l.b16 %v1453
    %v1494 = vunpack.c.h.b16 %v1453
    %v1495 = vunpack.c.l.b16 %v1454
    %v1496 = vunpack.c.h.b16 %v1454
    %v1497 = vpack.c.b16 %v1471, %v1469
    %v1498 = vpack.c.b16 %v1472, %v1470
    %v1499 = vpack.c.b16 %v1475, %v1473
    %v1500 = vpack.c.b16 %v1476, %v1474
    %v1501 = vpack.c.b16 %v1479, %v1477
    %v1502 = vpack.c.b16 %v1480, %v1478
    %v1503 = vpack.c.b16 %v1483, %v1481
    %v1504 = vpack.c.b16 %v1484, %v1482
    %v1505 = vpack.c.b16 %v1487, %v1485
    %v1506 = vpack.c.b16 %v1488, %v1486
    %v1507 = vpack.c.b16 %v1491, %v1489
    %v1508 = vpack.c.b16 %v1492, %v1490
    %v1509 = vpack.c.b16 %v1495, %v1493
    %v1510 = vpack.c.b16 %v1496, %v1494
    %vm1525 = vcmask 916480
    %v1527 = vsel %vm1525, %v570, 0
    %1529 = vmatprep.subr.bf16.mxu0 %v1498
    %1530 = vmatpush1.bf16.msra.mxu0 %v1497
    %1531 = vmatprep.subr.bf16.mxu0 %v1500
    %1532 = vmatpush1.bf16.msra.mxu0 %v1499
    %1533 = vmatprep.subr.bf16.mxu0 %v1502
    %1534 = vmatpush1.bf16.msra.mxu0 %v1501
    %1535 = vmatprep.subr.bf16.mxu0 %v1504
    %1536 = vmatpush1.bf16.msra.mxu0 %v1503
    %1537 = vmatprep.subr.bf16.mxu0 %v1506
    %1538 = vmatpush1.bf16.msra.mxu0 %v1505
    %1539 = vmatprep.subr.bf16.mxu0 %v1508
    %1540 = vmatpush1.bf16.msra.mxu0 %v1507
    %1541 = vmatprep.subr.bf16.mxu0 %v1510
    %1542 = vmatpush1.bf16.msra.mxu0 %v1509
    %1543 = vmatprep.subr.bf16.mxu0 0
    %1544 = vmatpush1.bf16.msra.mxu0 0
    %1545 = vmatprep.subr.bf16.mxu0 0
    %1546 = vmatpush1.bf16.msra.mxu0 0
    %1547 = vmatprep.subr.bf16.mxu0 0
    %1548 = vmatpush1.bf16.msra.mxu0 0
    %1549 = vmatprep.subr.bf16.mxu0 0
    %1550 = vmatpush1.bf16.msra.mxu0 0
    %1551 = vmatprep.subr.bf16.mxu0 0
    %1552 = vmatpush1.bf16.msra.mxu0 0
    %1553 = vmatprep.subr.bf16.mxu0 0
    %1554 = vmatpush1.bf16.msra.mxu0 0
    %1555 = vmatprep.subr.bf16.mxu0 0
    %1556 = vmatpush1.bf16.msra.mxu0 0
    %1557 = vmatprep.subr.bf16.mxu0 0
    %1558 = vmatpush1.bf16.msra.mxu0 0
    %1559 = vmatprep.subr.bf16.mxu0 0
    %1560 = vmatpush1.bf16.msra.mxu0 0
    %1561 = vmatprep.mubr.bf16.mxu0 0
    %1562 = vmatmul.mubr.bf16.gmra.mrb[0].mxu0 %v1527
    %v1563 = vpop.f32.mrb[0].mxu0
    %v1564 = vadd.f32 0.0, %v1563
    %v1565 = vpop.f32.mrb[0].mxu0
    %v1566 = vadd.f32 0.0, %v1565
    %v1567 = vpop.f32.mrb[0].mxu0
    %v1568 = vpop.f32.mrb[0].mxu0
    %1569 = vdwg.mxu0
    %v1584 = vunpack.c.l.b16 %v1426
    %v1585 = vunpack.c.h.b16 %v1426
    %v1586 = vunpack.c.l.b16 %v1427
    %v1587 = vunpack.c.h.b16 %v1427
    %v1588 = vunpack.c.l.b16 %v1428
    %v1589 = vunpack.c.h.b16 %v1428
    %v1590 = vunpack.c.l.b16 %v1429
    %v1591 = vunpack.c.h.b16 %v1429
    %v1592 = vunpack.c.l.b16 %v1430
    %v1593 = vunpack.c.h.b16 %v1430
    %v1594 = vunpack.c.l.b16 %v1431
    %v1595 = vunpack.c.h.b16 %v1431
    %v1596 = vunpack.c.l.b16 %v1432
    %v1597 = vunpack.c.h.b16 %v1432
    %v1598 = vunpack.c.l.b16 %v1433
    %v1599 = vunpack.c.h.b16 %v1433
    %v1600 = vunpack.c.l.b16 %v1434
    %v1601 = vunpack.c.h.b16 %v1434
    %v1602 = vunpack.c.l.b16 %v1435
    %v1603 = vunpack.c.h.b16 %v1435
    %v1604 = vunpack.c.l.b16 %v1436
    %v1605 = vunpack.c.h.b16 %v1436
    %v1606 = vunpack.c.l.b16 %v1437
    %v1607 = vunpack.c.h.b16 %v1437
    %v1608 = vunpack.c.l.b16 %v1438
    %v1609 = vunpack.c.h.b16 %v1438
    %v1610 = vunpack.c.l.b16 %v1439
    %v1611 = vunpack.c.h.b16 %v1439
    %v1612 = vpack.c.b16 %v1586, %v1584
    %v1613 = vpack.c.b16 %v1587, %v1585
    %v1614 = vpack.c.b16 %v1590, %v1588
    %v1615 = vpack.c.b16 %v1591, %v1589
    %v1616 = vpack.c.b16 %v1594, %v1592
    %v1617 = vpack.c.b16 %v1595, %v1593
    %v1618 = vpack.c.b16 %v1598, %v1596
    %v1619 = vpack.c.b16 %v1599, %v1597
    %v1620 = vpack.c.b16 %v1602, %v1600
    %v1621 = vpack.c.b16 %v1603, %v1601
    %v1622 = vpack.c.b16 %v1606, %v1604
    %v1623 = vpack.c.b16 %v1607, %v1605
    %v1624 = vpack.c.b16 %v1610, %v1608
    %v1625 = vpack.c.b16 %v1611, %v1609
    %v1641 = vsel %vm1525, %v399, 0
    %1643 = vmatprep.subr.bf16.mxu0 %v1613
    %1644 = vmatpush1.bf16.msra.mxu0 %v1612
    %1645 = vmatprep.subr.bf16.mxu0 %v1615
    %1646 = vmatpush1.bf16.msra.mxu0 %v1614
    %1647 = vmatprep.subr.bf16.mxu0 %v1617
    %1648 = vmatpush1.bf16.msra.mxu0 %v1616
    %1649 = vmatprep.subr.bf16.mxu0 %v1619
    %1650 = vmatpush1.bf16.msra.mxu0 %v1618
    %1651 = vmatprep.subr.bf16.mxu0 %v1621
    %1652 = vmatpush1.bf16.msra.mxu0 %v1620
    %1653 = vmatprep.subr.bf16.mxu0 %v1623
    %1654 = vmatpush1.bf16.msra.mxu0 %v1622
    %1655 = vmatprep.subr.bf16.mxu0 %v1625
    %1656 = vmatpush1.bf16.msra.mxu0 %v1624
    %1657 = vmatprep.subr.bf16.mxu0 0
    %1658 = vmatpush1.bf16.msra.mxu0 0
    %1659 = vmatprep.subr.bf16.mxu0 0
    %1660 = vmatpush1.bf16.msra.mxu0 0
    %1661 = vmatprep.subr.bf16.mxu0 0
    %1662 = vmatpush1.bf16.msra.mxu0 0
    %1663 = vmatprep.subr.bf16.mxu0 0
    %1664 = vmatpush1.bf16.msra.mxu0 0
    %1665 = vmatprep.subr.bf16.mxu0 0
    %1666 = vmatpush1.bf16.msra.mxu0 0
    %1667 = vmatprep.subr.bf16.mxu0 0
    %1668 = vmatpush1.bf16.msra.mxu0 0
    %1669 = vmatprep.subr.bf16.mxu0 0
    %1670 = vmatpush1.bf16.msra.mxu0 0
    %1671 = vmatprep.subr.bf16.mxu0 0
    %1672 = vmatpush1.bf16.msra.mxu0 0
    %1673 = vmatprep.subr.bf16.mxu0 0
    %1674 = vmatpush1.bf16.msra.mxu0 0
    %1675 = vmatprep.mubr.bf16.mxu0 0
    %1676 = vmatmul.mubr.bf16.gmra.mrb[0].mxu0 %v1641
    %v1677 = vpop.f32.mrb[0].mxu0
    %v1678 = vadd.f32 %v1564, %v1677
    %v1679 = vpop.f32.mrb[0].mxu0
    %v1680 = vadd.f32 %v1566, %v1679
    %v1681 = vpop.f32.mrb[0].mxu0
    %v1682 = vpop.f32.mrb[0].mxu0
    %1683 = vdwg.mxu0
    %s1684 = scalar_lea.vmem %s3, 224
    %v1685 = vld [vmem:[%s1684] sm:$0xff]
    %v1686 = vld [vmem:[%s1684 + $0x8] sm:$0xff]
    %v1687 = vld [vmem:[%s1684 + $0x10] sm:$0xff]
    %v1688 = vld [vmem:[%s1684 + $0x18] sm:$0xff]
    %v1689 = vld [vmem:[%s1684 + $0x20] sm:$0xff]
    %v1690 = vld [vmem:[%s1684 + $0x28] sm:$0xff]
    %v1691 = vld [vmem:[%s1684 + $0x30] sm:$0xff]
    %v1692 = vld [vmem:[%s1684 + $0x38] sm:$0xff]
    %v1693 = vld [vmem:[%s1684 + $0x40] sm:$0xff]
    %v1694 = vld [vmem:[%s1684 + $0x48] sm:$0xff]
    %v1695 = vld [vmem:[%s1684 + $0x50] sm:$0xff]
    %v1696 = vld [vmem:[%s1684 + $0x58] sm:$0xff]
    %v1697 = vld [vmem:[%s1684 + $0x60] sm:$0xff]
    %v1698 = vld [vmem:[%s1684 + $0x68] sm:$0xff]
    %v1713 = vunpack.c.l.b16 %v1685
    %v1714 = vunpack.c.h.b16 %v1685
    %v1715 = vunpack.c.l.b16 %v1686
    %v1716 = vunpack.c.h.b16 %v1686
    %v1717 = vunpack.c.l.b16 %v1687
    %v1718 = vunpack.c.h.b16 %v1687
    %v1719 = vunpack.c.l.b16 %v1688
    %v1720 = vunpack.c.h.b16 %v1688
    %v1721 = vunpack.c.l.b16 %v1689
    %v1722 = vunpack.c.h.b16 %v1689
    %v1723 = vunpack.c.l.b16 %v1690
    %v1724 = vunpack.c.h.b16 %v1690
    %v1725 = vunpack.c.l.b16 %v1691
    %v1726 = vunpack.c.h.b16 %v1691
    %v1727 = vunpack.c.l.b16 %v1692
    %v1728 = vunpack.c.h.b16 %v1692
    %v1729 = vunpack.c.l.b16 %v1693
    %v1730 = vunpack.c.h.b16 %v1693
    %v1731 = vunpack.c.l.b16 %v1694
    %v1732 = vunpack.c.h.b16 %v1694
    %v1733 = vunpack.c.l.b16 %v1695
    %v1734 = vunpack.c.h.b16 %v1695
    %v1735 = vunpack.c.l.b16 %v1696
    %v1736 = vunpack.c.h.b16 %v1696
    %v1737 = vunpack.c.l.b16 %v1697
    %v1738 = vunpack.c.h.b16 %v1697
    %v1739 = vunpack.c.l.b16 %v1698
    %v1740 = vunpack.c.h.b16 %v1698
    %v1741 = vpack.c.b16 %v1715, %v1713
    %v1742 = vpack.c.b16 %v1716, %v1714
    %v1743 = vpack.c.b16 %v1719, %v1717
    %v1744 = vpack.c.b16 %v1720, %v1718
    %v1745 = vpack.c.b16 %v1723, %v1721
    %v1746 = vpack.c.b16 %v1724, %v1722
    %v1747 = vpack.c.b16 %v1727, %v1725
    %v1748 = vpack.c.b16 %v1728, %v1726
    %v1749 = vpack.c.b16 %v1731, %v1729
    %v1750 = vpack.c.b16 %v1732, %v1730
    %v1751 = vpack.c.b16 %v1735, %v1733
    %v1752 = vpack.c.b16 %v1736, %v1734
    %v1753 = vpack.c.b16 %v1739, %v1737
    %v1754 = vpack.c.b16 %v1740, %v1738
    %v1770 = vsel %vm1525, %v741, 0
    %1772 = vmatprep.subr.bf16.mxu0 %v1742
    %1773 = vmatpush1.bf16.msra.mxu0 %v1741
    %1774 = vmatprep.subr.bf16.mxu0 %v1744
    %1775 = vmatpush1.bf16.msra.mxu0 %v1743
    %1776 = vmatprep.subr.bf16.mxu0 %v1746
    %1777 = vmatpush1.bf16.msra.mxu0 %v1745
    %1778 = vmatprep.subr.bf16.mxu0 %v1748
    %1779 = vmatpush1.bf16.msra.mxu0 %v1747
    %1780 = vmatprep.subr.bf16.mxu0 %v1750
    %1781 = vmatpush1.bf16.msra.mxu0 %v1749
    %1782 = vmatprep.subr.bf16.mxu0 %v1752
    %1783 = vmatpush1.bf16.msra.mxu0 %v1751
    %1784 = vmatprep.subr.bf16.mxu0 %v1754
    %1785 = vmatpush1.bf16.msra.mxu0 %v1753
    %1786 = vmatprep.subr.bf16.mxu0 0
    %1787 = vmatpush1.bf16.msra.mxu0 0
    %1788 = vmatprep.subr.bf16.mxu0 0
    %1789 = vmatpush1.bf16.msra.mxu0 0
    %1790 = vmatprep.subr.bf16.mxu0 0
    %1791 = vmatpush1.bf16.msra.mxu0 0
    %1792 = vmatprep.subr.bf16.mxu0 0
    %1793 = vmatpush1.bf16.msra.mxu0 0
    %1794 = vmatprep.subr.bf16.mxu0 0
    %1795 = vmatpush1.bf16.msra.mxu0 0
    %1796 = vmatprep.subr.bf16.mxu0 0
    %1797 = vmatpush1.bf16.msra.mxu0 0
    %1798 = vmatprep.subr.bf16.mxu0 0
    %1799 = vmatpush1.bf16.msra.mxu0 0
    %1800 = vmatprep.subr.bf16.mxu0 0
    %1801 = vmatpush1.bf16.msra.mxu0 0
    %1802 = vmatprep.subr.bf16.mxu0 0
    %1803 = vmatpush1.bf16.msra.mxu0 0
    %1804 = vmatprep.mubr.bf16.mxu0 0
    %1805 = vmatmul.mubr.bf16.gmra.mrb[0].mxu0 %v1770
    %v1806 = vpop.f32.mrb[0].mxu0
    %v1807 = vadd.f32 0.0, %v1806
    %v1808 = vpop.f32.mrb[0].mxu0
    %v1809 = vadd.f32 0.0, %v1808
    %v1810 = vpop.f32.mrb[0].mxu0
    %v1811 = vpop.f32.mrb[0].mxu0
    %1812 = vdwg.mxu0
    %v1813 = vadd.f32 %v1678, %v1807
    %v1814 = vadd.f32 %v1680, %v1809
    %v1815 = vld [vmem:[%s4] sm:$0x3]
    %v1817 = vlaneseq
    %v1818 = vshrl.u32 %v1817, 7
    %v1819 = vsub.s32 0, %v1818
    %v1820 = vrot.slane %v1815, %v1819
    %v1821 = vlaneseq
    %v1822 = vshrl.u32 %v1821, 7
    %v1823 = vsub.s32 1, %v1822
    %v1824 = vrot.slane %v1815, %v1823
    %v1827 = vadd.f32 %v1813, %v1820
    %v1828 = vadd.f32 %v1814, %v1824
    %v1829 = vmax.f32 %v1827, 0.0
    %v1830 = vmax.f32 %v1828, 0.0
    %v1831 = vpack.c.bf16 %v1829, %v1829
    %v1832 = vpack.c.bf16 %v1830, %v1830
    %v1834 = vsel %vm1525, %v912, 0
    %1836 = vmatprep.subr.bf16.mxu0 %v1498
    %1837 = vmatpush1.bf16.msra.mxu0 %v1497
    %1838 = vmatprep.subr.bf16.mxu0 %v1500
    %1839 = vmatpush1.bf16.msra.mxu0 %v1499
    %1840 = vmatprep.subr.bf16.mxu0 %v1502
    %1841 = vmatpush1.bf16.msra.mxu0 %v1501
    %1842 = vmatprep.subr.bf16.mxu0 %v1504
    %1843 = vmatpush1.bf16.msra.mxu0 %v1503
    %1844 = vmatprep.subr.bf16.mxu0 %v1506
    %1845 = vmatpush1.bf16.msra.mxu0 %v1505
    %1846 = vmatprep.subr.bf16.mxu0 %v1508
    %1847 = vmatpush1.bf16.msra.mxu0 %v1507
    %1848 = vmatprep.subr.bf16.mxu0 %v1510
    %1849 = vmatpush1.bf16.msra.mxu0 %v1509
    %1850 = vmatprep.subr.bf16.mxu0 0
    %1851 = vmatpush1.bf16.msra.mxu0 0
    %1852 = vmatprep.subr.bf16.mxu0 0
    %1853 = vmatpush1.bf16.msra.mxu0 0
    %1854 = vmatprep.subr.bf16.mxu0 0
    %1855 = vmatpush1.bf16.msra.mxu0 0
    %1856 = vmatprep.subr.bf16.mxu0 0
    %1857 = vmatpush1.bf16.msra.mxu0 0
    %1858 = vmatprep.subr.bf16.mxu0 0
    %1859 = vmatpush1.bf16.msra.mxu0 0
    %1860 = vmatprep.subr.bf16.mxu0 0
    %1861 = vmatpush1.bf16.msra.mxu0 0
    %1862 = vmatprep.subr.bf16.mxu0 0
    %1863 = vmatpush1.bf16.msra.mxu0 0
    %1864 = vmatprep.subr.bf16.mxu0 0
    %1865 = vmatpush1.bf16.msra.mxu0 0
    %1866 = vmatprep.subr.bf16.mxu0 0
    %1867 = vmatpush1.bf16.msra.mxu0 0
    %1868 = vmatprep.mubr.bf16.mxu0 0
    %1869 = vmatmul.mubr.bf16.gmra.mrb[0].mxu0 %v1834
    %v1870 = vpop.f32.mrb[0].mxu0
    %v1871 = vadd.f32 0.0, %v1870
    %v1872 = vpop.f32.mrb[0].mxu0
    %v1873 = vadd.f32 0.0, %v1872
    %v1874 = vpop.f32.mrb[0].mxu0
    %v1875 = vpop.f32.mrb[0].mxu0
    %1876 = vdwg.mxu0
    %1877 = vmatprep.subr.bf16.mxu0 %v1613
    %1878 = vmatpush1.bf16.msra.mxu0 %v1612
    %1879 = vmatprep.subr.bf16.mxu0 %v1615
    %1880 = vmatpush1.bf16.msra.mxu0 %v1614
    %1881 = vmatprep.subr.bf16.mxu0 %v1617
    %1882 = vmatpush1.bf16.msra.mxu0 %v1616
    %1883 = vmatprep.subr.bf16.mxu0 %v1619
    %1884 = vmatpush1.bf16.msra.mxu0 %v1618
    %1885 = vmatprep.subr.bf16.mxu0 %v1621
    %1886 = vmatpush1.bf16.msra.mxu0 %v1620
    %1887 = vmatprep.subr.bf16.mxu0 %v1623
    %1888 = vmatpush1.bf16.msra.mxu0 %v1622
    %1889 = vmatprep.subr.bf16.mxu0 %v1625
    %1890 = vmatpush1.bf16.msra.mxu0 %v1624
    %1891 = vmatprep.subr.bf16.mxu0 0
    %1892 = vmatpush1.bf16.msra.mxu0 0
    %1893 = vmatprep.subr.bf16.mxu0 0
    %1894 = vmatpush1.bf16.msra.mxu0 0
    %1895 = vmatprep.subr.bf16.mxu0 0
    %1896 = vmatpush1.bf16.msra.mxu0 0
    %1897 = vmatprep.subr.bf16.mxu0 0
    %1898 = vmatpush1.bf16.msra.mxu0 0
    %1899 = vmatprep.subr.bf16.mxu0 0
    %1900 = vmatpush1.bf16.msra.mxu0 0
    %1901 = vmatprep.subr.bf16.mxu0 0
    %1902 = vmatpush1.bf16.msra.mxu0 0
    %1903 = vmatprep.subr.bf16.mxu0 0
    %1904 = vmatpush1.bf16.msra.mxu0 0
    %1905 = vmatprep.subr.bf16.mxu0 0
    %1906 = vmatpush1.bf16.msra.mxu0 0
    %1907 = vmatprep.subr.bf16.mxu0 0
    %1908 = vmatpush1.bf16.msra.mxu0 0
    %1909 = vmatprep.mubr.bf16.mxu0 0
    %1910 = vmatmul.mubr.bf16.gmra.mrb[0].mxu0 %v1770
    %v1911 = vpop.f32.mrb[0].mxu0
    %v1912 = vadd.f32 %v1871, %v1911
    %v1913 = vpop.f32.mrb[0].mxu0
    %v1914 = vadd.f32 %v1873, %v1913
    %v1915 = vpop.f32.mrb[0].mxu0
    %v1916 = vpop.f32.mrb[0].mxu0
    %1917 = vdwg.mxu0
    %v1919 = vsel %vm1525, %v1083, 0
    %1921 = vmatprep.subr.bf16.mxu0 %v1742
    %1922 = vmatpush1.bf16.msra.mxu0 %v1741
    %1923 = vmatprep.subr.bf16.mxu0 %v1744
    %1924 = vmatpush1.bf16.msra.mxu0 %v1743
    %1925 = vmatprep.subr.bf16.mxu0 %v1746
    %1926 = vmatpush1.bf16.msra.mxu0 %v1745
    %1927 = vmatprep.subr.bf16.mxu0 %v1748
    %1928 = vmatpush1.bf16.msra.mxu0 %v1747
    %1929 = vmatprep.subr.bf16.mxu0 %v1750
    %1930 = vmatpush1.bf16.msra.mxu0 %v1749
    %1931 = vmatprep.subr.bf16.mxu0 %v1752
    %1932 = vmatpush1.bf16.msra.mxu0 %v1751
    %1933 = vmatprep.subr.bf16.mxu0 %v1754
    %1934 = vmatpush1.bf16.msra.mxu0 %v1753
    %1935 = vmatprep.subr.bf16.mxu0 0
    %1936 = vmatpush1.bf16.msra.mxu0 0
    %1937 = vmatprep.subr.bf16.mxu0 0
    %1938 = vmatpush1.bf16.msra.mxu0 0
    %1939 = vmatprep.subr.bf16.mxu0 0
    %1940 = vmatpush1.bf16.msra.mxu0 0
    %1941 = vmatprep.subr.bf16.mxu0 0
    %1942 = vmatpush1.bf16.msra.mxu0 0
    %1943 = vmatprep.subr.bf16.mxu0 0
    %1944 = vmatpush1.bf16.msra.mxu0 0
    %1945 = vmatprep.subr.bf16.mxu0 0
    %1946 = vmatpush1.bf16.msra.mxu0 0
    %1947 = vmatprep.subr.bf16.mxu0 0
    %1948 = vmatpush1.bf16.msra.mxu0 0
    %1949 = vmatprep.subr.bf16.mxu0 0
    %1950 = vmatpush1.bf16.msra.mxu0 0
    %1951 = vmatprep.subr.bf16.mxu0 0
    %1952 = vmatpush1.bf16.msra.mxu0 0
    %1953 = vmatprep.mubr.bf16.mxu0 0
    %1954 = vmatmul.mubr.bf16.gmra.mrb[0].mxu0 %v1919
    %v1955 = vpop.f32.mrb[0].mxu0
    %v1956 = vadd.f32 0.0, %v1955
    %v1957 = vpop.f32.mrb[0].mxu0
    %v1958 = vadd.f32 0.0, %v1957
    %v1959 = vpop.f32.mrb[0].mxu0
    %v1960 = vpop.f32.mrb[0].mxu0
    %1961 = vdwg.mxu0
    %v1962 = vadd.f32 %v1912, %v1956
    %v1963 = vadd.f32 %v1914, %v1958
    %v1964 = vadd.f32 %v1962, %v1820
    %v1965 = vadd.f32 %v1963, %v1824
    %v1966 = vmax.f32 %v1964, 0.0
    %v1967 = vmax.f32 %v1965, 0.0
    %v1968 = vpack.c.bf16 %v1966, %v1966
    %v1969 = vpack.c.bf16 %v1967, %v1967
    %v1971 = vsel %vm1525, %v1254, 0
    %1973 = vmatprep.subr.bf16.mxu0 %v1498
    %1974 = vmatpush1.bf16.msra.mxu0 %v1497
    %1975 = vmatprep.subr.bf16.mxu0 %v1500
    %1976 = vmatpush1.bf16.msra.mxu0 %v1499
    %1977 = vmatprep.subr.bf16.mxu0 %v1502
    %1978 = vmatpush1.bf16.msra.mxu0 %v1501
    %1979 = vmatprep.subr.bf16.mxu0 %v1504
    %1980 = vmatpush1.bf16.msra.mxu0 %v1503
    %1981 = vmatprep.subr.bf16.mxu0 %v1506
    %1982 = vmatpush1.bf16.msra.mxu0 %v1505
    %1983 = vmatprep.subr.bf16.mxu0 %v1508
    %1984 = vmatpush1.bf16.msra.mxu0 %v1507
    %1985 = vmatprep.subr.bf16.mxu0 %v1510
    %1986 = vmatpush1.bf16.msra.mxu0 %v1509
    %1987 = vmatprep.subr.bf16.mxu0 0
    %1988 = vmatpush1.bf16.msra.mxu0 0
    %1989 = vmatprep.subr.bf16.mxu0 0
    %1990 = vmatpush1.bf16.msra.mxu0 0
    %1991 = vmatprep.subr.bf16.mxu0 0
    %1992 = vmatpush1.bf16.msra.mxu0 0
    %1993 = vmatprep.subr.bf16.mxu0 0
    %1994 = vmatpush1.bf16.msra.mxu0 0
    %1995 = vmatprep.subr.bf16.mxu0 0
    %1996 = vmatpush1.bf16.msra.mxu0 0
    %1997 = vmatprep.subr.bf16.mxu0 0
    %1998 = vmatpush1.bf16.msra.mxu0 0
    %1999 = vmatprep.subr.bf16.mxu0 0
    %2000 = vmatpush1.bf16.msra.mxu0 0
    %2001 = vmatprep.subr.bf16.mxu0 0
    %2002 = vmatpush1.bf16.msra.mxu0 0
    %2003 = vmatprep.subr.bf16.mxu0 0
    %2004 = vmatpush1.bf16.msra.mxu0 0
    %2005 = vmatprep.mubr.bf16.mxu0 0
    %2006 = vmatmul.mubr.bf16.gmra.mrb[0].mxu0 %v1971
    %v2007 = vpop.f32.mrb[0].mxu0
    %v2008 = vadd.f32 0.0, %v2007
    %v2009 = vpop.f32.mrb[0].mxu0
    %v2010 = vadd.f32 0.0, %v2009
    %v2011 = vpop.f32.mrb[0].mxu0
    %v2012 = vpop.f32.mrb[0].mxu0
    %2013 = vdwg.mxu0
    %2014 = vmatprep.subr.bf16.mxu0 %v1613
    %2015 = vmatpush1.bf16.msra.mxu0 %v1612
    %2016 = vmatprep.subr.bf16.mxu0 %v1615
    %2017 = vmatpush1.bf16.msra.mxu0 %v1614
    %2018 = vmatprep.subr.bf16.mxu0 %v1617
    %2019 = vmatpush1.bf16.msra.mxu0 %v1616
    %2020 = vmatprep.subr.bf16.mxu0 %v1619
    %2021 = vmatpush1.bf16.msra.mxu0 %v1618
    %2022 = vmatprep.subr.bf16.mxu0 %v1621
    %2023 = vmatpush1.bf16.msra.mxu0 %v1620
    %2024 = vmatprep.subr.bf16.mxu0 %v1623
    %2025 = vmatpush1.bf16.msra.mxu0 %v1622
    %2026 = vmatprep.subr.bf16.mxu0 %v1625
    %2027 = vmatpush1.bf16.msra.mxu0 %v1624
    %2028 = vmatprep.subr.bf16.mxu0 0
    %2029 = vmatpush1.bf16.msra.mxu0 0
    %2030 = vmatprep.subr.bf16.mxu0 0
    %2031 = vmatpush1.bf16.msra.mxu0 0
    %2032 = vmatprep.subr.bf16.mxu0 0
    %2033 = vmatpush1.bf16.msra.mxu0 0
    %2034 = vmatprep.subr.bf16.mxu0 0
    %2035 = vmatpush1.bf16.msra.mxu0 0
    %2036 = vmatprep.subr.bf16.mxu0 0
    %2037 = vmatpush1.bf16.msra.mxu0 0
    %2038 = vmatprep.subr.bf16.mxu0 0
    %2039 = vmatpush1.bf16.msra.mxu0 0
    %2040 = vmatprep.subr.bf16.mxu0 0
    %2041 = vmatpush1.bf16.msra.mxu0 0
    %2042 = vmatprep.subr.bf16.mxu0 0
    %2043 = vmatpush1.bf16.msra.mxu0 0
    %2044 = vmatprep.subr.bf16.mxu0 0
    %2045 = vmatpush1.bf16.msra.mxu0 0
    %2046 = vmatprep.mubr.bf16.mxu0 0
    %2047 = vmatmul.mubr.bf16.gmra.mrb[0].mxu0 %v1919
    %v2048 = vpop.f32.mrb[0].mxu0
    %v2049 = vadd.f32 %v2008, %v2048
    %v2050 = vpop.f32.mrb[0].mxu0
    %v2051 = vadd.f32 %v2010, %v2050
    %v2052 = vpop.f32.mrb[0].mxu0
    %v2053 = vpop.f32.mrb[0].mxu0
    %2054 = vdwg.mxu0
    %v2056 = vsel %vm1525, %v1425, 0
    %2058 = vmatprep.subr.bf16.mxu0 %v1742
    %2059 = vmatpush1.bf16.msra.mxu0 %v1741
    %2060 = vmatprep.subr.bf16.mxu0 %v1744
    %2061 = vmatpush1.bf16.msra.mxu0 %v1743
    %2062 = vmatprep.subr.bf16.mxu0 %v1746
    %2063 = vmatpush1.bf16.msra.mxu0 %v1745
    %2064 = vmatprep.subr.bf16.mxu0 %v1748
    %2065 = vmatpush1.bf16.msra.mxu0 %v1747
    %2066 = vmatprep.subr.bf16.mxu0 %v1750
    %2067 = vmatpush1.bf16.msra.mxu0 %v1749
    %2068 = vmatprep.subr.bf16.mxu0 %v1752
    %2069 = vmatpush1.bf16.msra.mxu0 %v1751
    %2070 = vmatprep.subr.bf16.mxu0 %v1754
    %2071 = vmatpush1.bf16.msra.mxu0 %v1753
    %2072 = vmatprep.subr.bf16.mxu0 0
    %2073 = vmatpush1.bf16.msra.mxu0 0
    %2074 = vmatprep.subr.bf16.mxu0 0
    %2075 = vmatpush1.bf16.msra.mxu0 0
    %2076 = vmatprep.subr.bf16.mxu0 0
    %2077 = vmatpush1.bf16.msra.mxu0 0
    %2078 = vmatprep.subr.bf16.mxu0 0
    %2079 = vmatpush1.bf16.msra.mxu0 0
    %2080 = vmatprep.subr.bf16.mxu0 0
    %2081 = vmatpush1.bf16.msra.mxu0 0
    %2082 = vmatprep.subr.bf16.mxu0 0
    %2083 = vmatpush1.bf16.msra.mxu0 0
    %2084 = vmatprep.subr.bf16.mxu0 0
    %2085 = vmatpush1.bf16.msra.mxu0 0
    %2086 = vmatprep.subr.bf16.mxu0 0
    %2087 = vmatpush1.bf16.msra.mxu0 0
    %2088 = vmatprep.subr.bf16.mxu0 0
    %2089 = vmatpush1.bf16.msra.mxu0 0
    %2090 = vmatprep.mubr.bf16.mxu0 0
    %2091 = vmatmul.mubr.bf16.gmra.mrb[0].mxu0 %v2056
    %v2092 = vpop.f32.mrb[0].mxu0
    %v2093 = vadd.f32 0.0, %v2092
    %v2094 = vpop.f32.mrb[0].mxu0
    %v2095 = vadd.f32 0.0, %v2094
    %v2096 = vpop.f32.mrb[0].mxu0
    %v2097 = vpop.f32.mrb[0].mxu0
    %2098 = vdwg.mxu0
    %v2099 = vadd.f32 %v2049, %v2093
    %v2100 = vadd.f32 %v2051, %v2095
    %v2101 = vadd.f32 %v2099, %v1820
    %v2102 = vadd.f32 %v2100, %v1824
    %v2103 = vmax.f32 %v2101, 0.0
    %v2104 = vmax.f32 %v2102, 0.0
    %v2105 = vpack.c.bf16 %v2103, %v2103
    %v2106 = vpack.c.bf16 %v2104, %v2104
    %v2107 = vld [vmem:[%s5] sm:$0xff]
    %v2108 = vld [vmem:[%s5 + $0x8] sm:$0xff]
    %v2109 = vld [vmem:[%s5 + $0x10] sm:$0xff]
    %v2110 = vld [vmem:[%s5 + $0x18] sm:$0xff]
    %v2111 = vld [vmem:[%s5 + $0x20] sm:$0xff]
    %v2112 = vld [vmem:[%s5 + $0x28] sm:$0xff]
    %v2113 = vld [vmem:[%s5 + $0x30] sm:$0xff]
    %v2114 = vld [vmem:[%s5 + $0x38] sm:$0xff]
    %v2115 = vld [vmem:[%s5 + $0x40] sm:$0xff]
    %v2116 = vld [vmem:[%s5 + $0x48] sm:$0xff]
    %v2117 = vld [vmem:[%s5 + $0x50] sm:$0xff]
    %v2118 = vld [vmem:[%s5 + $0x58] sm:$0xff]
    %v2119 = vld [vmem:[%s5 + $0x60] sm:$0xff]
    %v2120 = vld [vmem:[%s5 + $0x68] sm:$0xff]
    %v2121 = vld [vmem:[%s5 + $0x70] sm:$0xff]
    %v2122 = vld [vmem:[%s5 + $0x78] sm:$0xff]
    %v2123 = vld [vmem:[%s5 + $0x80] sm:$0xff]
    %v2124 = vld [vmem:[%s5 + $0x88] sm:$0xff]
    %v2125 = vld [vmem:[%s5 + $0x90] sm:$0xff]
    %v2126 = vld [vmem:[%s5 + $0x98] sm:$0xff]
    %v2127 = vld [vmem:[%s5 + $0xa0] sm:$0xff]
    %v2128 = vld [vmem:[%s5 + $0xa8] sm:$0xff]
    %v2129 = vld [vmem:[%s5 + $0xb0] sm:$0xff]
    %v2130 = vld [vmem:[%s5 + $0xb8] sm:$0xff]
    %s2131 = scalar_lea.vmem %s5, 192
    %v2132 = vld [vmem:[%s2131] sm:$0xff]
    %v2133 = vld [vmem:[%s2131 + $0x8] sm:$0xff]
    %v2134 = vld [vmem:[%s2131 + $0x10] sm:$0xff]
    %v2135 = vld [vmem:[%s2131 + $0x18] sm:$0xff]
    %v2136 = vld [vmem:[%s2131 + $0x20] sm:$0xff]
    %v2137 = vld [vmem:[%s2131 + $0x28] sm:$0xff]
    %v2138 = vld [vmem:[%s2131 + $0x30] sm:$0xff]
    %v2139 = vld [vmem:[%s2131 + $0x38] sm:$0xff]
    %v2140 = vld [vmem:[%s2131 + $0x40] sm:$0xff]
    %v2141 = vld [vmem:[%s2131 + $0x48] sm:$0xff]
    %v2142 = vld [vmem:[%s2131 + $0x50] sm:$0xff]
    %v2143 = vld [vmem:[%s2131 + $0x58] sm:$0xff]
    %v2144 = vld [vmem:[%s2131 + $0x60] sm:$0xff]
    %v2145 = vld [vmem:[%s2131 + $0x68] sm:$0xff]
    %v2146 = vld [vmem:[%s2131 + $0x70] sm:$0xff]
    %v2147 = vld [vmem:[%s2131 + $0x78] sm:$0xff]
    %v2148 = vld [vmem:[%s2131 + $0x80] sm:$0xff]
    %v2149 = vld [vmem:[%s2131 + $0x88] sm:$0xff]
    %v2150 = vld [vmem:[%s2131 + $0x90] sm:$0xff]
    %v2151 = vld [vmem:[%s2131 + $0x98] sm:$0xff]
    %v2152 = vld [vmem:[%s2131 + $0xa0] sm:$0xff]
    %v2153 = vld [vmem:[%s2131 + $0xa8] sm:$0xff]
    %v2154 = vld [vmem:[%s2131 + $0xb0] sm:$0xff]
    %v2155 = vld [vmem:[%s2131 + $0xb8] sm:$0xff]
    %v2180 = vunpack.c.l.b16 %v2132
    %v2181 = vunpack.c.h.b16 %v2132
    %v2182 = vunpack.c.l.b16 %v2133
    %v2183 = vunpack.c.h.b16 %v2133
    %v2184 = vunpack.c.l.b16 %v2134
    %v2185 = vunpack.c.h.b16 %v2134
    %v2186 = vunpack.c.l.b16 %v2135
    %v2187 = vunpack.c.h.b16 %v2135
    %v2188 = vunpack.c.l.b16 %v2136
    %v2189 = vunpack.c.h.b16 %v2136
    %v2190 = vunpack.c.l.b16 %v2137
    %v2191 = vunpack.c.h.b16 %v2137
    %v2192 = vunpack.c.l.b16 %v2138
    %v2193 = vunpack.c.h.b16 %v2138
    %v2194 = vunpack.c.l.b16 %v2139
    %v2195 = vunpack.c.h.b16 %v2139
    %v2196 = vunpack.c.l.b16 %v2140
    %v2197 = vunpack.c.h.b16 %v2140
    %v2198 = vunpack.c.l.b16 %v2141
    %v2199 = vunpack.c.h.b16 %v2141
    %v2200 = vunpack.c.l.b16 %v2142
    %v2201 = vunpack.c.h.b16 %v2142
    %v2202 = vunpack.c.l.b16 %v2143
    %v2203 = vunpack.c.h.b16 %v2143
    %v2204 = vunpack.c.l.b16 %v2144
    %v2205 = vunpack.c.h.b16 %v2144
    %v2206 = vunpack.c.l.b16 %v2145
    %v2207 = vunpack.c.h.b16 %v2145
    %v2208 = vunpack.c.l.b16 %v2146
    %v2209 = vunpack.c.h.b16 %v2146
    %v2210 = vunpack.c.l.b16 %v2147
    %v2211 = vunpack.c.h.b16 %v2147
    %v2212 = vunpack.c.l.b16 %v2148
    %v2213 = vunpack.c.h.b16 %v2148
    %v2214 = vunpack.c.l.b16 %v2149
    %v2215 = vunpack.c.h.b16 %v2149
    %v2216 = vunpack.c.l.b16 %v2150
    %v2217 = vunpack.c.h.b16 %v2150
    %v2218 = vunpack.c.l.b16 %v2151
    %v2219 = vunpack.c.h.b16 %v2151
    %v2220 = vunpack.c.l.b16 %v2152
    %v2221 = vunpack.c.h.b16 %v2152
    %v2222 = vunpack.c.l.b16 %v2153
    %v2223 = vunpack.c.h.b16 %v2153
    %v2224 = vunpack.c.l.b16 %v2154
    %v2225 = vunpack.c.h.b16 %v2154
    %v2226 = vunpack.c.l.b16 %v2155
    %v2227 = vunpack.c.h.b16 %v2155
    %v2228 = vpack.c.b16 %v2182, %v2180
    %v2229 = vpack.c.b16 %v2183, %v2181
    %v2230 = vpack.c.b16 %v2186, %v2184
    %v2231 = vpack.c.b16 %v2187, %v2185
    %v2232 = vpack.c.b16 %v2190, %v2188
    %v2233 = vpack.c.b16 %v2191, %v2189
    %v2234 = vpack.c.b16 %v2194, %v2192
    %v2235 = vpack.c.b16 %v2195, %v2193
    %v2236 = vpack.c.b16 %v2198, %v2196
    %v2237 = vpack.c.b16 %v2199, %v2197
    %v2238 = vpack.c.b16 %v2202, %v2200
    %v2239 = vpack.c.b16 %v2203, %v2201
    %v2240 = vpack.c.b16 %v2206, %v2204
    %v2241 = vpack.c.b16 %v2207, %v2205
    %v2242 = vpack.c.b16 %v2210, %v2208
    %v2243 = vpack.c.b16 %v2211, %v2209
    %v2244 = vpack.c.b16 %v2214, %v2212
    %v2245 = vpack.c.b16 %v2215, %v2213
    %v2246 = vpack.c.b16 %v2218, %v2216
    %v2247 = vpack.c.b16 %v2219, %v2217
    %v2248 = vpack.c.b16 %v2222, %v2220
    %v2249 = vpack.c.b16 %v2223, %v2221
    %v2250 = vpack.c.b16 %v2226, %v2224
    %v2251 = vpack.c.b16 %v2227, %v2225
    %v2277 = vsel %vm125, %v1969, 0
    %2279 = vmatprep.subr.bf16.mxu0 %v2229
    %2280 = vmatpush1.bf16.msra.mxu0 %v2228
    %2281 = vmatprep.subr.bf16.mxu0 %v2231
    %2282 = vmatpush1.bf16.msra.mxu0 %v2230
    %2283 = vmatprep.subr.bf16.mxu0 %v2233
    %2284 = vmatpush1.bf16.msra.mxu0 %v2232
    %2285 = vmatprep.subr.bf16.mxu0 %v2235
    %2286 = vmatpush1.bf16.msra.mxu0 %v2234
    %2287 = vmatprep.subr.bf16.mxu0 %v2237
    %2288 = vmatpush1.bf16.msra.mxu0 %v2236
    %2289 = vmatprep.subr.bf16.mxu0 %v2239
    %2290 = vmatpush1.bf16.msra.mxu0 %v2238
    %2291 = vmatprep.subr.bf16.mxu0 %v2241
    %2292 = vmatpush1.bf16.msra.mxu0 %v2240
    %2293 = vmatprep.subr.bf16.mxu0 %v2243
    %2294 = vmatpush1.bf16.msra.mxu0 %v2242
    %2295 = vmatprep.subr.bf16.mxu0 %v2245
    %2296 = vmatpush1.bf16.msra.mxu0 %v2244
    %2297 = vmatprep.subr.bf16.mxu0 %v2247
    %2298 = vmatpush1.bf16.msra.mxu0 %v2246
    %2299 = vmatprep.subr.bf16.mxu0 %v2249
    %2300 = vmatpush1.bf16.msra.mxu0 %v2248
    %2301 = vmatprep.subr.bf16.mxu0 %v2251
    %2302 = vmatpush1.bf16.msra.mxu0 %v2250
    %2303 = vmatprep.subr.bf16.mxu0 0
    %2304 = vmatpush1.bf16.msra.mxu0 0
    %2305 = vmatprep.subr.bf16.mxu0 0
    %2306 = vmatpush1.bf16.msra.mxu0 0
    %2307 = vmatprep.subr.bf16.mxu0 0
    %2308 = vmatpush1.bf16.msra.mxu0 0
    %2309 = vmatprep.subr.bf16.mxu0 0
    %2310 = vmatpush1.bf16.msra.mxu0 0
    %2311 = vmatprep.mubr.bf16.mxu0 %v2277
    %2312 = vmatmul.mubr.bf16.gmra.mrb[0].mxu0 %v1968
    %v2313 = vpop.f32.mrb[0].mxu0
    %v2314 = vadd.f32 0.0, %v2313
    %v2315 = vpop.f32.mrb[0].mxu0
    %v2316 = vadd.f32 0.0, %v2315
    %v2317 = vpop.f32.mrb[0].mxu0
    %v2318 = vpop.f32.mrb[0].mxu0
    %2319 = vdwg.mxu0
    %v2344 = vunpack.c.l.b16 %v2107
    %v2345 = vunpack.c.h.b16 %v2107
    %v2346 = vunpack.c.l.b16 %v2108
    %v2347 = vunpack.c.h.b16 %v2108
    %v2348 = vunpack.c.l.b16 %v2109
    %v2349 = vunpack.c.h.b16 %v2109
    %v2350 = vunpack.c.l.b16 %v2110
    %v2351 = vunpack.c.h.b16 %v2110
    %v2352 = vunpack.c.l.b16 %v2111
    %v2353 = vunpack.c.h.b16 %v2111
    %v2354 = vunpack.c.l.b16 %v2112
    %v2355 = vunpack.c.h.b16 %v2112
    %v2356 = vunpack.c.l.b16 %v2113
    %v2357 = vunpack.c.h.b16 %v2113
    %v2358 = vunpack.c.l.b16 %v2114
    %v2359 = vunpack.c.h.b16 %v2114
    %v2360 = vunpack.c.l.b16 %v2115
    %v2361 = vunpack.c.h.b16 %v2115
    %v2362 = vunpack.c.l.b16 %v2116
    %v2363 = vunpack.c.h.b16 %v2116
    %v2364 = vunpack.c.l.b16 %v2117
    %v2365 = vunpack.c.h.b16 %v2117
    %v2366 = vunpack.c.l.b16 %v2118
    %v2367 = vunpack.c.h.b16 %v2118
    %v2368 = vunpack.c.l.b16 %v2119
    %v2369 = vunpack.c.h.b16 %v2119
    %v2370 = vunpack.c.l.b16 %v2120
    %v2371 = vunpack.c.h.b16 %v2120
    %v2372 = vunpack.c.l.b16 %v2121
    %v2373 = vunpack.c.h.b16 %v2121
    %v2374 = vunpack.c.l.b16 %v2122
    %v2375 = vunpack.c.h.b16 %v2122
    %v2376 = vunpack.c.l.b16 %v2123
    %v2377 = vunpack.c.h.b16 %v2123
    %v2378 = vunpack.c.l.b16 %v2124
    %v2379 = vunpack.c.h.b16 %v2124
    %v2380 = vunpack.c.l.b16 %v2125
    %v2381 = vunpack.c.h.b16 %v2125
    %v2382 = vunpack.c.l.b16 %v2126
    %v2383 = vunpack.c.h.b16 %v2126
    %v2384 = vunpack.c.l.b16 %v2127
    %v2385 = vunpack.c.h.b16 %v2127
    %v2386 = vunpack.c.l.b16 %v2128
    %v2387 = vunpack.c.h.b16 %v2128
    %v2388 = vunpack.c.l.b16 %v2129
    %v2389 = vunpack.c.h.b16 %v2129
    %v2390 = vunpack.c.l.b16 %v2130
    %v2391 = vunpack.c.h.b16 %v2130
    %v2392 = vpack.c.b16 %v2346, %v2344
    %v2393 = vpack.c.b16 %v2347, %v2345
    %v2394 = vpack.c.b16 %v2350, %v2348
    %v2395 = vpack.c.b16 %v2351, %v2349
    %v2396 = vpack.c.b16 %v2354, %v2352
    %v2397 = vpack.c.b16 %v2355, %v2353
    %v2398 = vpack.c.b16 %v2358, %v2356
    %v2399 = vpack.c.b16 %v2359, %v2357
    %v2400 = vpack.c.b16 %v2362, %v2360
    %v2401 = vpack.c.b16 %v2363, %v2361
    %v2402 = vpack.c.b16 %v2366, %v2364
    %v2403 = vpack.c.b16 %v2367, %v2365
    %v2404 = vpack.c.b16 %v2370, %v2368
    %v2405 = vpack.c.b16 %v2371, %v2369
    %v2406 = vpack.c.b16 %v2374, %v2372
    %v2407 = vpack.c.b16 %v2375, %v2373
    %v2408 = vpack.c.b16 %v2378, %v2376
    %v2409 = vpack.c.b16 %v2379, %v2377
    %v2410 = vpack.c.b16 %v2382, %v2380
    %v2411 = vpack.c.b16 %v2383, %v2381
    %v2412 = vpack.c.b16 %v2386, %v2384
    %v2413 = vpack.c.b16 %v2387, %v2385
    %v2414 = vpack.c.b16 %v2390, %v2388
    %v2415 = vpack.c.b16 %v2391, %v2389
    %v2441 = vsel %vm125, %v1832, 0
    %2443 = vmatprep.subr.bf16.mxu0 %v2393
    %2444 = vmatpush1.bf16.msra.mxu0 %v2392
    %2445 = vmatprep.subr.bf16.mxu0 %v2395
    %2446 = vmatpush1.bf16.msra.mxu0 %v2394
    %2447 = vmatprep.subr.bf16.mxu0 %v2397
    %2448 = vmatpush1.bf16.msra.mxu0 %v2396
    %2449 = vmatprep.subr.bf16.mxu0 %v2399
    %2450 = vmatpush1.bf16.msra.mxu0 %v2398
    %2451 = vmatprep.subr.bf16.mxu0 %v2401
    %2452 = vmatpush1.bf16.msra.mxu0 %v2400
    %2453 = vmatprep.subr.bf16.mxu0 %v2403
    %2454 = vmatpush1.bf16.msra.mxu0 %v2402
    %2455 = vmatprep.subr.bf16.mxu0 %v2405
    %2456 = vmatpush1.bf16.msra.mxu0 %v2404
    %2457 = vmatprep.subr.bf16.mxu0 %v2407
    %2458 = vmatpush1.bf16.msra.mxu0 %v2406
    %2459 = vmatprep.subr.bf16.mxu0 %v2409
    %2460 = vmatpush1.bf16.msra.mxu0 %v2408
    %2461 = vmatprep.subr.bf16.mxu0 %v2411
    %2462 = vmatpush1.bf16.msra.mxu0 %v2410
    %2463 = vmatprep.subr.bf16.mxu0 %v2413
    %2464 = vmatpush1.bf16.msra.mxu0 %v2412
    %2465 = vmatprep.subr.bf16.mxu0 %v2415
    %2466 = vmatpush1.bf16.msra.mxu0 %v2414
    %2467 = vmatprep.subr.bf16.mxu0 0
    %2468 = vmatpush1.bf16.msra.mxu0 0
    %2469 = vmatprep.subr.bf16.mxu0 0
    %2470 = vmatpush1.bf16.msra.mxu0 0
    %2471 = vmatprep.subr.bf16.mxu0 0
    %2472 = vmatpush1.bf16.msra.mxu0 0
    %2473 = vmatprep.subr.bf16.mxu0 0
    %2474 = vmatpush1.bf16.msra.mxu0 0
    %2475 = vmatprep.mubr.bf16.mxu0 %v2441
    %2476 = vmatmul.mubr.bf16.gmra.mrb[0].mxu0 %v1831
    %v2477 = vpop.f32.mrb[0].mxu0
    %v2478 = vadd.f32 %v2314, %v2477
    %v2479 = vpop.f32.mrb[0].mxu0
    %v2480 = vadd.f32 %v2316, %v2479
    %v2481 = vpop.f32.mrb[0].mxu0
    %v2482 = vpop.f32.mrb[0].mxu0
    %2483 = vdwg.mxu0
    %s2484 = scalar_lea.vmem %s5, 384
    %v2485 = vld [vmem:[%s2484] sm:$0xff]
    %v2486 = vld [vmem:[%s2484 + $0x8] sm:$0xff]
    %v2487 = vld [vmem:[%s2484 + $0x10] sm:$0xff]
    %v2488 = vld [vmem:[%s2484 + $0x18] sm:$0xff]
    %v2489 = vld [vmem:[%s2484 + $0x20] sm:$0xff]
    %v2490 = vld [vmem:[%s2484 + $0x28] sm:$0xff]
    %v2491 = vld [vmem:[%s2484 + $0x30] sm:$0xff]
    %v2492 = vld [vmem:[%s2484 + $0x38] sm:$0xff]
    %v2493 = vld [vmem:[%s2484 + $0x40] sm:$0xff]
    %v2494 = vld [vmem:[%s2484 + $0x48] sm:$0xff]
    %v2495 = vld [vmem:[%s2484 + $0x50] sm:$0xff]
    %v2496 = vld [vmem:[%s2484 + $0x58] sm:$0xff]
    %v2497 = vld [vmem:[%s2484 + $0x60] sm:$0xff]
    %v2498 = vld [vmem:[%s2484 + $0x68] sm:$0xff]
    %v2499 = vld [vmem:[%s2484 + $0x70] sm:$0xff]
    %v2500 = vld [vmem:[%s2484 + $0x78] sm:$0xff]
    %v2501 = vld [vmem:[%s2484 + $0x80] sm:$0xff]
    %v2502 = vld [vmem:[%s2484 + $0x88] sm:$0xff]
    %v2503 = vld [vmem:[%s2484 + $0x90] sm:$0xff]
    %v2504 = vld [vmem:[%s2484 + $0x98] sm:$0xff]
    %v2505 = vld [vmem:[%s2484 + $0xa0] sm:$0xff]
    %v2506 = vld [vmem:[%s2484 + $0xa8] sm:$0xff]
    %v2507 = vld [vmem:[%s2484 + $0xb0] sm:$0xff]
    %v2508 = vld [vmem:[%s2484 + $0xb8] sm:$0xff]
    %v2533 = vunpack.c.l.b16 %v2485
    %v2534 = vunpack.c.h.b16 %v2485
    %v2535 = vunpack.c.l.b16 %v2486
    %v2536 = vunpack.c.h.b16 %v2486
    %v2537 = vunpack.c.l.b16 %v2487
    %v2538 = vunpack.c.h.b16 %v2487
    %v2539 = vunpack.c.l.b16 %v2488
    %v2540 = vunpack.c.h.b16 %v2488
    %v2541 = vunpack.c.l.b16 %v2489
    %v2542 = vunpack.c.h.b16 %v2489
    %v2543 = vunpack.c.l.b16 %v2490
    %v2544 = vunpack.c.h.b16 %v2490
    %v2545 = vunpack.c.l.b16 %v2491
    %v2546 = vunpack.c.h.b16 %v2491
    %v2547 = vunpack.c.l.b16 %v2492
    %v2548 = vunpack.c.h.b16 %v2492
    %v2549 = vunpack.c.l.b16 %v2493
    %v2550 = vunpack.c.h.b16 %v2493
    %v2551 = vunpack.c.l.b16 %v2494
    %v2552 = vunpack.c.h.b16 %v2494
    %v2553 = vunpack.c.l.b16 %v2495
    %v2554 = vunpack.c.h.b16 %v2495
    %v2555 = vunpack.c.l.b16 %v2496
    %v2556 = vunpack.c.h.b16 %v2496
    %v2557 = vunpack.c.l.b16 %v2497
    %v2558 = vunpack.c.h.b16 %v2497
    %v2559 = vunpack.c.l.b16 %v2498
    %v2560 = vunpack.c.h.b16 %v2498
    %v2561 = vunpack.c.l.b16 %v2499
    %v2562 = vunpack.c.h.b16 %v2499
    %v2563 = vunpack.c.l.b16 %v2500
    %v2564 = vunpack.c.h.b16 %v2500
    %v2565 = vunpack.c.l.b16 %v2501
    %v2566 = vunpack.c.h.b16 %v2501
    %v2567 = vunpack.c.l.b16 %v2502
    %v2568 = vunpack.c.h.b16 %v2502
    %v2569 = vunpack.c.l.b16 %v2503
    %v2570 = vunpack.c.h.b16 %v2503
    %v2571 = vunpack.c.l.b16 %v2504
    %v2572 = vunpack.c.h.b16 %v2504
    %v2573 = vunpack.c.l.b16 %v2505
    %v2574 = vunpack.c.h.b16 %v2505
    %v2575 = vunpack.c.l.b16 %v2506
    %v2576 = vunpack.c.h.b16 %v2506
    %v2577 = vunpack.c.l.b16 %v2507
    %v2578 = vunpack.c.h.b16 %v2507
    %v2579 = vunpack.c.l.b16 %v2508
    %v2580 = vunpack.c.h.b16 %v2508
    %v2581 = vpack.c.b16 %v2535, %v2533
    %v2582 = vpack.c.b16 %v2536, %v2534
    %v2583 = vpack.c.b16 %v2539, %v2537
    %v2584 = vpack.c.b16 %v2540, %v2538
    %v2585 = vpack.c.b16 %v2543, %v2541
    %v2586 = vpack.c.b16 %v2544, %v2542
    %v2587 = vpack.c.b16 %v2547, %v2545
    %v2588 = vpack.c.b16 %v2548, %v2546
    %v2589 = vpack.c.b16 %v2551, %v2549
    %v2590 = vpack.c.b16 %v2552, %v2550
    %v2591 = vpack.c.b16 %v2555, %v2553
    %v2592 = vpack.c.b16 %v2556, %v2554
    %v2593 = vpack.c.b16 %v2559, %v2557
    %v2594 = vpack.c.b16 %v2560, %v2558
    %v2595 = vpack.c.b16 %v2563, %v2561
    %v2596 = vpack.c.b16 %v2564, %v2562
    %v2597 = vpack.c.b16 %v2567, %v2565
    %v2598 = vpack.c.b16 %v2568, %v2566
    %v2599 = vpack.c.b16 %v2571, %v2569
    %v2600 = vpack.c.b16 %v2572, %v2570
    %v2601 = vpack.c.b16 %v2575, %v2573
    %v2602 = vpack.c.b16 %v2576, %v2574
    %v2603 = vpack.c.b16 %v2579, %v2577
    %v2604 = vpack.c.b16 %v2580, %v2578
    %v2630 = vsel %vm125, %v2106, 0
    %2632 = vmatprep.subr.bf16.mxu0 %v2582
    %2633 = vmatpush1.bf16.msra.mxu0 %v2581
    %2634 = vmatprep.subr.bf16.mxu0 %v2584
    %2635 = vmatpush1.bf16.msra.mxu0 %v2583
    %2636 = vmatprep.subr.bf16.mxu0 %v2586
    %2637 = vmatpush1.bf16.msra.mxu0 %v2585
    %2638 = vmatprep.subr.bf16.mxu0 %v2588
    %2639 = vmatpush1.bf16.msra.mxu0 %v2587
    %2640 = vmatprep.subr.bf16.mxu0 %v2590
    %2641 = vmatpush1.bf16.msra.mxu0 %v2589
    %2642 = vmatprep.subr.bf16.mxu0 %v2592
    %2643 = vmatpush1.bf16.msra.mxu0 %v2591
    %2644 = vmatprep.subr.bf16.mxu0 %v2594
    %2645 = vmatpush1.bf16.msra.mxu0 %v2593
    %2646 = vmatprep.subr.bf16.mxu0 %v2596
    %2647 = vmatpush1.bf16.msra.mxu0 %v2595
    %2648 = vmatprep.subr.bf16.mxu0 %v2598
    %2649 = vmatpush1.bf16.msra.mxu0 %v2597
    %2650 = vmatprep.subr.bf16.mxu0 %v2600
    %2651 = vmatpush1.bf16.msra.mxu0 %v2599
    %2652 = vmatprep.subr.bf16.mxu0 %v2602
    %2653 = vmatpush1.bf16.msra.mxu0 %v2601
    %2654 = vmatprep.subr.bf16.mxu0 %v2604
    %2655 = vmatpush1.bf16.msra.mxu0 %v2603
    %2656 = vmatprep.subr.bf16.mxu0 0
    %2657 = vmatpush1.bf16.msra.mxu0 0
    %2658 = vmatprep.subr.bf16.mxu0 0
    %2659 = vmatpush1.bf16.msra.mxu0 0
    %2660 = vmatprep.subr.bf16.mxu0 0
    %2661 = vmatpush1.bf16.msra.mxu0 0
    %2662 = vmatprep.subr.bf16.mxu0 0
    %2663 = vmatpush1.bf16.msra.mxu0 0
    %2664 = vmatprep.mubr.bf16.mxu0 %v2630
    %2665 = vmatmul.mubr.bf16.gmra.mrb[0].mxu0 %v2105
    %v2666 = vpop.f32.mrb[0].mxu0
    %v2667 = vadd.f32 0.0, %v2666
    %v2668 = vpop.f32.mrb[0].mxu0
    %v2669 = vadd.f32 0.0, %v2668
    %v2670 = vpop.f32.mrb[0].mxu0
    %v2671 = vpop.f32.mrb[0].mxu0
    %2672 = vdwg.mxu0
    %v2673 = vadd.f32 %v2478, %v2667
    %v2674 = vadd.f32 %v2480, %v2669
    %v2675 = vld [vmem:[%s6] sm:$0x3]
    %v2677 = vlaneseq
    %v2678 = vshrl.u32 %v2677, 7
    %v2679 = vsub.s32 0, %v2678
    %v2680 = vrot.slane %v2675, %v2679
    %v2681 = vlaneseq
    %v2682 = vshrl.u32 %v2681, 7
    %v2683 = vsub.s32 1, %v2682
    %v2684 = vrot.slane %v2675, %v2683
    %v2687 = vadd.f32 %v2673, %v2680
    %v2688 = vadd.f32 %v2674, %v2684
    %v2689 = vmax.f32 %v2687, 0.0
    %v2690 = vmax.f32 %v2688, 0.0
    %v2691 = vpack.c.bf16 %v2689, %v2689
    %v2692 = vpack.c.bf16 %v2690, %v2690
    %v2693 = vld [vmem:[%s7] sm:$0xff]
    %v2694 = vld [vmem:[%s7 + $0x8] sm:$0xff]
    %v2695 = vld [vmem:[%s7 + $0x10] sm:$0xff]
    %v2696 = vld [vmem:[%s7 + $0x18] sm:$0xff]
    %v2697 = vld [vmem:[%s7 + $0x20] sm:$0xff]
    %v2698 = vld [vmem:[%s7 + $0x28] sm:$0xff]
    %v2699 = vld [vmem:[%s7 + $0x30] sm:$0xff]
    %v2700 = vld [vmem:[%s7 + $0x38] sm:$0xff]
    %v2701 = vld [vmem:[%s7 + $0x40] sm:$0xff]
    %v2702 = vld [vmem:[%s7 + $0x48] sm:$0xff]
    %v2703 = vld [vmem:[%s7 + $0x50] sm:$0xff]
    %v2704 = vld [vmem:[%s7 + $0x58] sm:$0xff]
    %v2705 = vld [vmem:[%s7 + $0x60] sm:$0xff]
    %v2706 = vld [vmem:[%s7 + $0x68] sm:$0xff]
    %v2707 = vld [vmem:[%s7 + $0x70] sm:$0xff]
    %v2708 = vld [vmem:[%s7 + $0x78] sm:$0xff]
    %v2709 = vld [vmem:[%s7 + $0x80] sm:$0xff]
    %v2710 = vld [vmem:[%s7 + $0x88] sm:$0xff]
    %v2711 = vld [vmem:[%s7 + $0x90] sm:$0xff]
    %v2712 = vld [vmem:[%s7 + $0x98] sm:$0xff]
    %v2713 = vld [vmem:[%s7 + $0xa0] sm:$0xff]
    %v2714 = vld [vmem:[%s7 + $0xa8] sm:$0xff]
    %v2715 = vld [vmem:[%s7 + $0xb0] sm:$0xff]
    %v2716 = vld [vmem:[%s7 + $0xb8] sm:$0xff]
    %v2717 = vld [vmem:[%s7 + $0xc0] sm:$0xff]
    %v2718 = vld [vmem:[%s7 + $0xc8] sm:$0xff]
    %v2719 = vld [vmem:[%s7 + $0xd0] sm:$0xff]
    %v2720 = vld [vmem:[%s7 + $0xd8] sm:$0xff]
    %v2721 = vld [vmem:[%s7 + $0xe0] sm:$0xff]
    %v2722 = vld [vmem:[%s7 + $0xe8] sm:$0xff]
    %v2723 = vld [vmem:[%s7 + $0xf0] sm:$0xff]
    %v2724 = vld [vmem:[%s7 + $0xf8] sm:$0xff]
    %v2725 = vld [vmem:[%s8] sm:$0x3]
    %v2727 = vlaneseq
    %v2728 = vshrl.u32 %v2727, 7
    %v2729 = vsub.s32 0, %v2728
    %v2730 = vrot.slane %v2725, %v2729
    %v2731 = vlaneseq
    %v2732 = vshrl.u32 %v2731, 7
    %v2733 = vsub.s32 1, %v2732
    %v2734 = vrot.slane %v2725, %v2733
    %v2769 = vunpack.c.l.b16 %v2693
    %v2770 = vunpack.c.h.b16 %v2693
    %v2771 = vunpack.c.l.b16 %v2694
    %v2772 = vunpack.c.h.b16 %v2694
    %v2773 = vunpack.c.l.b16 %v2695
    %v2774 = vunpack.c.h.b16 %v2695
    %v2775 = vunpack.c.l.b16 %v2696
    %v2776 = vunpack.c.h.b16 %v2696
    %v2777 = vunpack.c.l.b16 %v2697
    %v2778 = vunpack.c.h.b16 %v2697
    %v2779 = vunpack.c.l.b16 %v2698
    %v2780 = vunpack.c.h.b16 %v2698
    %v2781 = vunpack.c.l.b16 %v2699
    %v2782 = vunpack.c.h.b16 %v2699
    %v2783 = vunpack.c.l.b16 %v2700
    %v2784 = vunpack.c.h.b16 %v2700
    %v2785 = vunpack.c.l.b16 %v2701
    %v2786 = vunpack.c.h.b16 %v2701
    %v2787 = vunpack.c.l.b16 %v2702
    %v2788 = vunpack.c.h.b16 %v2702
    %v2789 = vunpack.c.l.b16 %v2703
    %v2790 = vunpack.c.h.b16 %v2703
    %v2791 = vunpack.c.l.b16 %v2704
    %v2792 = vunpack.c.h.b16 %v2704
    %v2793 = vunpack.c.l.b16 %v2705
    %v2794 = vunpack.c.h.b16 %v2705
    %v2795 = vunpack.c.l.b16 %v2706
    %v2796 = vunpack.c.h.b16 %v2706
    %v2797 = vunpack.c.l.b16 %v2707
    %v2798 = vunpack.c.h.b16 %v2707
    %v2799 = vunpack.c.l.b16 %v2708
    %v2800 = vunpack.c.h.b16 %v2708
    %v2801 = vunpack.c.l.b16 %v2709
    %v2802 = vunpack.c.h.b16 %v2709
    %v2803 = vunpack.c.l.b16 %v2710
    %v2804 = vunpack.c.h.b16 %v2710
    %v2805 = vunpack.c.l.b16 %v2711
    %v2806 = vunpack.c.h.b16 %v2711
    %v2807 = vunpack.c.l.b16 %v2712
    %v2808 = vunpack.c.h.b16 %v2712
    %v2809 = vunpack.c.l.b16 %v2713
    %v2810 = vunpack.c.h.b16 %v2713
    %v2811 = vunpack.c.l.b16 %v2714
    %v2812 = vunpack.c.h.b16 %v2714
    %v2813 = vunpack.c.l.b16 %v2715
    %v2814 = vunpack.c.h.b16 %v2715
    %v2815 = vunpack.c.l.b16 %v2716
    %v2816 = vunpack.c.h.b16 %v2716
    %v2817 = vunpack.c.l.b16 %v2717
    %v2818 = vunpack.c.h.b16 %v2717
    %v2819 = vunpack.c.l.b16 %v2718
    %v2820 = vunpack.c.h.b16 %v2718
    %v2821 = vunpack.c.l.b16 %v2719
    %v2822 = vunpack.c.h.b16 %v2719
    %v2823 = vunpack.c.l.b16 %v2720
    %v2824 = vunpack.c.h.b16 %v2720
    %v2825 = vunpack.c.l.b16 %v2721
    %v2826 = vunpack.c.h.b16 %v2721
    %v2827 = vunpack.c.l.b16 %v2722
    %v2828 = vunpack.c.h.b16 %v2722
    %v2829 = vunpack.c.l.b16 %v2723
    %v2830 = vunpack.c.h.b16 %v2723
    %v2831 = vunpack.c.l.b16 %v2724
    %v2832 = vunpack.c.h.b16 %v2724
    %v2833 = vpack.c.b16 %v2771, %v2769
    %v2834 = vpack.c.b16 %v2772, %v2770
    %v2835 = vpack.c.b16 %v2775, %v2773
    %v2836 = vpack.c.b16 %v2776, %v2774
    %v2837 = vpack.c.b16 %v2779, %v2777
    %v2838 = vpack.c.b16 %v2780, %v2778
    %v2839 = vpack.c.b16 %v2783, %v2781
    %v2840 = vpack.c.b16 %v2784, %v2782
    %v2841 = vpack.c.b16 %v2787, %v2785
    %v2842 = vpack.c.b16 %v2788, %v2786
    %v2843 = vpack.c.b16 %v2791, %v2789
    %v2844 = vpack.c.b16 %v2792, %v2790
    %v2845 = vpack.c.b16 %v2795, %v2793
    %v2846 = vpack.c.b16 %v2796, %v2794
    %v2847 = vpack.c.b16 %v2799, %v2797
    %v2848 = vpack.c.b16 %v2800, %v2798
    %v2849 = vpack.c.b16 %v2803, %v2801
    %v2850 = vpack.c.b16 %v2804, %v2802
    %v2851 = vpack.c.b16 %v2807, %v2805
    %v2852 = vpack.c.b16 %v2808, %v2806
    %v2853 = vpack.c.b16 %v2811, %v2809
    %v2854 = vpack.c.b16 %v2812, %v2810
    %v2855 = vpack.c.b16 %v2815, %v2813
    %v2856 = vpack.c.b16 %v2816, %v2814
    %v2857 = vpack.c.b16 %v2819, %v2817
    %v2858 = vpack.c.b16 %v2820, %v2818
    %v2859 = vpack.c.b16 %v2823, %v2821
    %v2860 = vpack.c.b16 %v2824, %v2822
    %v2861 = vpack.c.b16 %v2827, %v2825
    %v2862 = vpack.c.b16 %v2828, %v2826
    %v2863 = vpack.c.b16 %v2831, %v2829
    %v2864 = vpack.c.b16 %v2832, %v2830
    %2897 = vmatprep.subr.bf16.mxu0 %v2834
    %2898 = vmatpush1.bf16.msra.mxu0 %v2833
    %2899 = vmatprep.subr.bf16.mxu0 %v2836
    %2900 = vmatpush1.bf16.msra.mxu0 %v2835
    %2901 = vmatprep.subr.bf16.mxu0 %v2838
    %2902 = vmatpush1.bf16.msra.mxu0 %v2837
    %2903 = vmatprep.subr.bf16.mxu0 %v2840
    %2904 = vmatpush1.bf16.msra.mxu0 %v2839
    %2905 = vmatprep.subr.bf16.mxu0 %v2842
    %2906 = vmatpush1.bf16.msra.mxu0 %v2841
    %2907 = vmatprep.subr.bf16.mxu0 %v2844
    %2908 = vmatpush1.bf16.msra.mxu0 %v2843
    %2909 = vmatprep.subr.bf16.mxu0 %v2846
    %2910 = vmatpush1.bf16.msra.mxu0 %v2845
    %2911 = vmatprep.subr.bf16.mxu0 %v2848
    %2912 = vmatpush1.bf16.msra.mxu0 %v2847
    %2913 = vmatprep.subr.bf16.mxu0 %v2850
    %2914 = vmatpush1.bf16.msra.mxu0 %v2849
    %2915 = vmatprep.subr.bf16.mxu0 %v2852
    %2916 = vmatpush1.bf16.msra.mxu0 %v2851
    %2917 = vmatprep.subr.bf16.mxu0 %v2854
    %2918 = vmatpush1.bf16.msra.mxu0 %v2853
    %2919 = vmatprep.subr.bf16.mxu0 %v2856
    %2920 = vmatpush1.bf16.msra.mxu0 %v2855
    %2921 = vmatprep.subr.bf16.mxu0 %v2858
    %2922 = vmatpush1.bf16.msra.mxu0 %v2857
    %2923 = vmatprep.subr.bf16.mxu0 %v2860
    %2924 = vmatpush1.bf16.msra.mxu0 %v2859
    %2925 = vmatprep.subr.bf16.mxu0 %v2862
    %2926 = vmatpush1.bf16.msra.mxu0 %v2861
    %2927 = vmatprep.subr.bf16.mxu0 %v2864
    %2928 = vmatpush1.bf16.msra.mxu0 %v2863
    %2929 = vmatprep.mubr.bf16.mxu0 %v2692
    %2930 = vmatmul.mubr.bf16.gmra.mrb[0].mxu0 %v2691
    %v2931 = vpop.f32.mrb[0].mxu0
    %v2932 = vadd.f32 %v2730, %v2931
    %v2933 = vpop.f32.mrb[0].mxu0
    %v2934 = vadd.f32 %v2734, %v2933
    %v2935 = vpop.f32.mrb[0].mxu0
    %v2936 = vpop.f32.mrb[0].mxu0
    %2937 = vdwg.mxu0
    %v2938 = vmax.f32 %v2932, 0.0
    %v2939 = vmax.f32 %v2934, 0.0
    %v2940 = vpack.c.bf16 %v2938, %v2938
    %v2941 = vpack.c.bf16 %v2939, %v2939
    %v2942 = vld [vmem:[#allocation2] sm:$0xf]
    %v2943 = vld [vmem:[#allocation2 + $0x4] sm:$0xf]
    %v2944 = vld [vmem:[#allocation2 + $0x8] sm:$0xf]
    %v2945 = vld [vmem:[#allocation2 + $0xc] sm:$0xf]
    %v2946 = vld [vmem:[#allocation2 + $0x10] sm:$0xf]
    %v2947 = vld [vmem:[#allocation2 + $0x14] sm:$0xf]
    %v2948 = vld [vmem:[#allocation2 + $0x18] sm:$0xf]
    %v2949 = vld [vmem:[#allocation2 + $0x1c] sm:$0xf]
    %v2950 = vld [vmem:[#allocation2 + $0x20] sm:$0xf]
    %v2951 = vld [vmem:[#allocation2 + $0x24] sm:$0xf]
    %v2952 = vld [vmem:[#allocation2 + $0x28] sm:$0xf]
    %v2953 = vld [vmem:[#allocation2 + $0x2c] sm:$0xf]
    %v2954 = vld [vmem:[#allocation2 + $0x30] sm:$0xf]
    %v2955 = vld [vmem:[#allocation2 + $0x34] sm:$0xf]
    %v2956 = vld [vmem:[#allocation2 + $0x38] sm:$0xf]
    %v2957 = vld [vmem:[#allocation2 + $0x3c] sm:$0xf]
    %v2958 = vld [vmem:[#allocation2 + $0x40] sm:$0xf]
    %v2959 = vld [vmem:[#allocation2 + $0x44] sm:$0xf]
    %v2960 = vld [vmem:[#allocation2 + $0x48] sm:$0xf]
    %v2961 = vld [vmem:[#allocation2 + $0x4c] sm:$0xf]
    %v2962 = vld [vmem:[#allocation2 + $0x50] sm:$0xf]
    %v2963 = vld [vmem:[#allocation2 + $0x54] sm:$0xf]
    %v2964 = vld [vmem:[#allocation2 + $0x58] sm:$0xf]
    %v2965 = vld [vmem:[#allocation2 + $0x5c] sm:$0xf]
    %v2966 = vld [vmem:[#allocation2 + $0x60] sm:$0xf]
    %v2967 = vld [vmem:[#allocation2 + $0x64] sm:$0xf]
    %v2968 = vld [vmem:[#allocation2 + $0x68] sm:$0xf]
    %v2969 = vld [vmem:[#allocation2 + $0x6c] sm:$0xf]
    %v2970 = vld [vmem:[#allocation2 + $0x70] sm:$0xf]
    %v2971 = vld [vmem:[#allocation2 + $0x74] sm:$0xf]
    %v2972 = vld [vmem:[#allocation2 + $0x78] sm:$0xf]
    %v2973 = vld [vmem:[#allocation2 + $0x7c] sm:$0xf]
    %v2974 = vld [vmem:[%s10] sm:$0x1]
    %v2976 = vlaneseq
    %v2977 = vshrl.u32 %v2976, 7
    %v2978 = vsub.s32 0, %v2977
    %v2979 = vrot.slane %v2974, %v2978
    %v3013 = vunpack.c.l.b16 %v2942
    %v3014 = vunpack.c.l.b16 %v2943
    %v3015 = vunpack.c.l.b16 %v2944
    %v3016 = vunpack.c.l.b16 %v2945
    %v3017 = vunpack.c.l.b16 %v2946
    %v3018 = vunpack.c.l.b16 %v2947
    %v3019 = vunpack.c.l.b16 %v2948
    %v3020 = vunpack.c.l.b16 %v2949
    %v3021 = vunpack.c.l.b16 %v2950
    %v3022 = vunpack.c.l.b16 %v2951
    %v3023 = vunpack.c.l.b16 %v2952
    %v3024 = vunpack.c.l.b16 %v2953
    %v3025 = vunpack.c.l.b16 %v2954
    %v3026 = vunpack.c.l.b16 %v2955
    %v3027 = vunpack.c.l.b16 %v2956
    %v3028 = vunpack.c.l.b16 %v2957
    %v3029 = vunpack.c.l.b16 %v2958
    %v3030 = vunpack.c.l.b16 %v2959
    %v3031 = vunpack.c.l.b16 %v2960
    %v3032 = vunpack.c.l.b16 %v2961
    %v3033 = vunpack.c.l.b16 %v2962
    %v3034 = vunpack.c.l.b16 %v2963
    %v3035 = vunpack.c.l.b16 %v2964
    %v3036 = vunpack.c.l.b16 %v2965
    %v3037 = vunpack.c.l.b16 %v2966
    %v3038 = vunpack.c.l.b16 %v2967
    %v3039 = vunpack.c.l.b16 %v2968
    %v3040 = vunpack.c.l.b16 %v2969
    %v3041 = vunpack.c.l.b16 %v2970
    %v3042 = vunpack.c.l.b16 %v2971
    %v3043 = vunpack.c.l.b16 %v2972
    %v3044 = vunpack.c.l.b16 %v2973
    %v3045 = vpack.c.b16 %v3014, %v3013
    %v3046 = vpack.c.b16 %v3016, %v3015
    %v3047 = vpack.c.b16 %v3018, %v3017
    %v3048 = vpack.c.b16 %v3020, %v3019
    %v3049 = vpack.c.b16 %v3022, %v3021
    %v3050 = vpack.c.b16 %v3024, %v3023
    %v3051 = vpack.c.b16 %v3026, %v3025
    %v3052 = vpack.c.b16 %v3028, %v3027
    %v3053 = vpack.c.b16 %v3030, %v3029
    %v3054 = vpack.c.b16 %v3032, %v3031
    %v3055 = vpack.c.b16 %v3034, %v3033
    %v3056 = vpack.c.b16 %v3036, %v3035
    %v3057 = vpack.c.b16 %v3038, %v3037
    %v3058 = vpack.c.b16 %v3040, %v3039
    %v3059 = vpack.c.b16 %v3042, %v3041
    %v3060 = vpack.c.b16 %v3044, %v3043
    %3077 = vmatprep.subr.bf16.mxu0 0
    %3078 = vmatpush1.bf16.msra.mxu0 %v3045
    %3079 = vmatprep.subr.bf16.mxu0 0
    %3080 = vmatpush1.bf16.msra.mxu0 %v3046
    %3081 = vmatprep.subr.bf16.mxu0 0
    %3082 = vmatpush1.bf16.msra.mxu0 %v3047
    %3083 = vmatprep.subr.bf16.mxu0 0
    %3084 = vmatpush1.bf16.msra.mxu0 %v3048
    %3085 = vmatprep.subr.bf16.mxu0 0
    %3086 = vmatpush1.bf16.msra.mxu0 %v3049
    %3087 = vmatprep.subr.bf16.mxu0 0
    %3088 = vmatpush1.bf16.msra.mxu0 %v3050
    %3089 = vmatprep.subr.bf16.mxu0 0
    %3090 = vmatpush1.bf16.msra.mxu0 %v3051
    %3091 = vmatprep.subr.bf16.mxu0 0
    %3092 = vmatpush1.bf16.msra.mxu0 %v3052
    %3093 = vmatprep.subr.bf16.mxu0 0
    %3094 = vmatpush1.bf16.msra.mxu0 %v3053
    %3095 = vmatprep.subr.bf16.mxu0 0
    %3096 = vmatpush1.bf16.msra.mxu0 %v3054
    %3097 = vmatprep.subr.bf16.mxu0 0
    %3098 = vmatpush1.bf16.msra.mxu0 %v3055
    %3099 = vmatprep.subr.bf16.mxu0 0
    %3100 = vmatpush1.bf16.msra.mxu0 %v3056
    %3101 = vmatprep.subr.bf16.mxu0 0
    %3102 = vmatpush1.bf16.msra.mxu0 %v3057
    %3103 = vmatprep.subr.bf16.mxu0 0
    %3104 = vmatpush1.bf16.msra.mxu0 %v3058
    %3105 = vmatprep.subr.bf16.mxu0 0
    %3106 = vmatpush1.bf16.msra.mxu0 %v3059
    %3107 = vmatprep.subr.bf16.mxu0 0
    %3108 = vmatpush1.bf16.msra.mxu0 %v3060
    %3109 = vmatprep.mubr.bf16.mxu0 %v2941
    %3110 = vmatmul.mubr.bf16.gmra.mrb[0].mxu0 %v2940
    %v3111 = vpop.f32.mrb[0].mxu0
    %v3112 = vadd.f32 %v2979, %v3111
    %v3113 = vpop.f32.mrb[0].mxu0
    %v3114 = vpop.f32.mrb[0].mxu0
    %v3115 = vpop.f32.mrb[0].mxu0
    %3116 = vdwg.mxu0
    %v3117 = vlaneseq
    %v3118 = vand.u32 %v3117, 127
    %v3119 = vmax.f32 %v3112, 0.0
    %v3120 = vand.u32 2147483647, %v3112
    %v3121 = vsub.f32 0.0, %v3120
    %v3122 = vmul.f32 %v3121, 1.442695
    %v3123 = vpow.pop %v3122
    %v3124 = vadd.f32 %v3123, 1.0
    %v3125 = vlog2.pop %v3124
    %v3126 = vmul.f32 %v3125, 0.6931472
    %v3127 = vadd.f32 %v3119, %v3126
    %v3128 = vadd.f32 %v3127, 1.0
    %vm3129 = vcmp.ge.s32.totalorder %v3118, 1
    %vm3130 = vcmp.lt.s32.totalorder %v3118, 7
    %vm3131 = vmand %vm3129, %vm3130
    %v3132 = vsel %vm3131, %v3128, %v3112
    %3133 = vst [vmem:[%s11] sm:$0x3] %v3132
    // Predicated region
    $region50: #{net_forward.1} parent=1 // pred_check
      _
    $region51: #{net_forward.1} parent=1 // pred_check_branch
      %3135 = sbr.rel (0) target = $region53
    $region52: #{net_forward.1} parent=1 // pred_region
      _
    $region53: #{net_forward.1} parent=1 // pred_fallthru
      _
    // Predicated region
    $region54: #{net_forward.1} parent=1 // pred_check
      _
    $region55: #{net_forward.1} parent=1 // pred_check_branch
      %3137 = sbr.rel (0) target = $region57
    $region56: #{net_forward.1} parent=1 // pred_region
      _
    $region57: #{net_forward.1} parent=1 // pred_fallthru
      _
    %3138 = vsyncpa [#allocation3], 1

</llo_original>
